<compile_context>
chip_gen: v7x
topology: tpu7x:2x2x1
jax: 0.10.0
libtpu: 0.0.40
codegen_flags: <defaults>
</compile_context>

<pallas_src>
import jax
import jax.numpy as jnp
import numpy as np
from jax.experimental import pallas as pl
from jax.experimental.pallas import tpu as pltpu


# ---------------------------------------------------------------------------
# Fused kernel: encoder LSTM -> embedding -> decoder LSTM -> Linear -> LogSoftmax
# ---------------------------------------------------------------------------
def fused_seq2seq_kernel(x_ref, ids_ref, emb_ref,
                         ewih_ref, ewhh_ref, eb_ref,
                         dwih_ref, dwhh_ref, db_ref,
                         wl_ref, bl_ref,
                         out_ref,
                         xp_ref, dp_ref, hs_ref):
    B, T_src, _ = x_ref.shape
    H = ewhh_ref.shape[0]
    T_tgt = dp_ref.shape[1]
    V = emb_ref.shape[0]
    H3 = 3 * H

    # ---- hoisted encoder input projection (bias folded in), off the recurrence ----
    ewih = ewih_ref[...]
    eb = eb_ref[...]
    for b in range(B):
        xp_ref[b] = jnp.dot(x_ref[b], ewih,
                            preferred_element_type=jnp.float32) + eb

    # ---- embedding lookup as one-hot matmul (MXU) + relu + hoisted decoder projection ----
    ids = ids_ref[...]                                               # (B*T_tgt, 1) int32
    iota_v = jax.lax.broadcasted_iota(jnp.int32, (B * T_tgt, V), 1)
    onehot = (iota_v == ids).astype(jnp.float32)                     # (B*T_tgt, V)
    emb = jnp.dot(onehot, emb_ref[...], preferred_element_type=jnp.float32)
    emb = jnp.maximum(emb, 0.0)   # F.relu
    # TODO(synk): nn.Dropout(p=0.2) is stochastic; modeled as identity (eval-mode forward).
    dp = jnp.dot(emb, dwih_ref[...], preferred_element_type=jnp.float32) + db_ref[...]
    for b in range(B):
        dp_ref[b] = dp[b * T_tgt:(b + 1) * T_tgt, :]

    # ---- LSTM step: gate order [i, f, o, g]; one wide tanh-form sigmoid ----
    def lstm_step(pre, h, c, whh):
        gates = pre + jnp.dot(h, whh, preferred_element_type=jnp.float32)
        sig = 0.5 * jnp.tanh(0.5 * gates[:, :H3]) + 0.5
        i_g = sig[:, 0:H]
        f_g = sig[:, H:2 * H]
        o_g = sig[:, 2 * H:H3]
        g_g = jnp.tanh(gates[:, H3:])
        c_new = f_g * c + i_g * g_g
        h_new = o_g * jnp.tanh(c_new)
        return h_new, c_new

    ewhh = ewhh_ref[...]
    dwhh = dwhh_ref[...]

    # ---- encoder recurrence (T static & tiny -> unrolled) ----
    h = jnp.zeros((B, H), jnp.float32)
    c = jnp.zeros((B, H), jnp.float32)
    for t in range(T_src):
        h, c = lstm_step(xp_ref[:, t, :], h, c, ewhh)

    # ---- decoder recurrence, collect hidden states in VMEM scratch ----
    for t in range(T_tgt):
        h, c = lstm_step(dp_ref[:, t, :], h, c, dwhh)
        hs_ref[:, t, :] = h

    # ---- batched Linear + LogSoftmax, hoisted out of the time loop ----
    wl = wl_ref[...]
    bl = bl_ref[...]
    for b in range(B):
        logits = jnp.dot(hs_ref[b], wl, preferred_element_type=jnp.float32) + bl
        m = jnp.max(logits, axis=-1, keepdims=True)
        z = logits - m
        lse = jnp.log(jnp.sum(jnp.exp(z), axis=-1, keepdims=True))
        out_ref[b] = (z - lse).astype(out_ref.dtype)


# ---------------------------------------------------------------------------
# Wrapper: single pallas_call, everything resident in VMEM
# ---------------------------------------------------------------------------
def _vmem_spec():
    return pl.BlockSpec(memory_space=pltpu.MemorySpace.VMEM)


@jax.jit
def seq2seq_lstm_forward(x, tar_seq, params):
    B, T_src, _ = x.shape
    T_tgt = tar_seq.shape[1]
    H = params["enc_whh"].shape[0]
    O = params["wl"].shape[1]

    # Free row-major flatten (metadata only) so the kernel sees a 2-D id column.
    ids_flat = tar_seq.reshape(B * T_tgt, 1).astype(jnp.int32)

    return pl.pallas_call(
        fused_seq2seq_kernel,
        out_shape=jax.ShapeDtypeStruct((B, T_tgt, O), jnp.float32),
        in_specs=[_vmem_spec() for _ in range(11)],
        out_specs=_vmem_spec(),
        scratch_shapes=[
            pltpu.VMEM((B, T_src, 4 * H), jnp.float32),   # hoisted encoder x-projection
            pltpu.VMEM((B, T_tgt, 4 * H), jnp.float32),   # hoisted decoder x-projection
            pltpu.VMEM((B, T_tgt, H), jnp.float32),       # decoder hidden states
        ],
    )(x, ids_flat, params["emb"],
      params["enc_wih"], params["enc_whh"], params["enc_b"],
      params["dec_wih"], params["dec_whh"], params["dec_b"],
      params["wl"], params["bl"])


# ---------------------------------------------------------------------------
# Host-side param prep: PyTorch layout -> kernel layout (transpose, combine bias,
# permute gate blocks [i,f,g,o] -> [i,f,o,g])
# ---------------------------------------------------------------------------
def prepare_params(pt):
    perm = np.array([0, 1, 3, 2])                      # i, f, o, g

    def wmat(w):                                        # (4H, in) -> (in, 4H)
        four_h = w.shape[0]
        h = four_h // 4
        return jnp.transpose(w.reshape(4, h, -1)[perm].reshape(four_h, -1))

    def bvec(b_ih, b_hh):                               # (4H,) -> (1, 4H)
        b = b_ih + b_hh
        h = b.shape[0] // 4
        return b.reshape(4, h)[perm].reshape(1, 4 * h)

    return dict(
        enc_wih=wmat(pt["enc_w_ih"]), enc_whh=wmat(pt["enc_w_hh"]),
        enc_b=bvec(pt["enc_b_ih"], pt["enc_b_hh"]),
        emb=pt["emb"],
        dec_wih=wmat(pt["dec_w_ih"]), dec_whh=wmat(pt["dec_w_hh"]),
        dec_b=bvec(pt["dec_b_ih"], pt["dec_b_hh"]),
        wl=jnp.transpose(pt["l1_w"]), bl=pt["l1_b"][None, :],
    )


# ---------------------------------------------------------------------------
# Pure-JAX reference (mirrors the PyTorch module exactly, PyTorch weight layout)
# ---------------------------------------------------------------------------
def ref_forward(x, tar_seq, pt):
    H = pt["enc_w_hh"].shape[1]

    def lstm(seq, w_ih, w_hh, b_ih, b_hh, h0, c0):
        def step(carry, x_t):
            h, c = carry
            gates = x_t @ w_ih.T + b_ih + h @ w_hh.T + b_hh
            i = jax.nn.sigmoid(gates[:, 0:H])
            f = jax.nn.sigmoid(gates[:, H:2 * H])
            g = jnp.tanh(gates[:, 2 * H:3 * H])
            o = jax.nn.sigmoid(gates[:, 3 * H:4 * H])
            c = f * c + i * g
            h = o * jnp.tanh(c)
            return (h, c), h

        (h, c), hs = jax.lax.scan(step, (h0, c0), jnp.swapaxes(seq, 0, 1))
        return jnp.swapaxes(hs, 0, 1), (h, c)

    B = x.shape[0]
    zeros = jnp.zeros((B, H), jnp.float32)
    _, (h, c) = lstm(x, pt["enc_w_ih"], pt["enc_w_hh"],
                     pt["enc_b_ih"], pt["enc_b_hh"], zeros, zeros)
    emb = jnp.maximum(jnp.take(pt["emb"], tar_seq, axis=0), 0.0)
    hs, _ = lstm(emb, pt["dec_w_ih"], pt["dec_w_hh"],
                 pt["dec_b_ih"], pt["dec_b_hh"], h, c)
    logits = hs @ pt["l1_w"].T + pt["l1_b"]
    return jax.nn.log_softmax(logits, axis=2)


# ---------------------------------------------------------------------------
if __name__ == "__main__":
    key = jax.random.PRNGKey(0)
    B, T_src, T_tgt = 2, 6, 7
    input_dim = embed_dim = hidden_dim = 128
    output_dim = 7
    tar_seq_dim = 7            # embedding vocabulary size

    keys = jax.random.split(key, 13)

    def u(k, shape, scale=0.08):
        return jax.random.uniform(k, shape, jnp.float32, -scale, scale)

    pt = dict(
        enc_w_ih=u(keys[0], (4 * hidden_dim, input_dim)),
        enc_w_hh=u(keys[1], (4 * hidden_dim, hidden_dim)),
        enc_b_ih=u(keys[2], (4 * hidden_dim,)),
        enc_b_hh=u(keys[3], (4 * hidden_dim,)),
        emb=u(keys[4], (tar_seq_dim, embed_dim), 1.0),
        dec_w_ih=u(keys[5], (4 * hidden_dim, embed_dim)),
        dec_w_hh=u(keys[6], (4 * hidden_dim, hidden_dim)),
        dec_b_ih=u(keys[7], (4 * hidden_dim,)),
        dec_b_hh=u(keys[8], (4 * hidden_dim,)),
        l1_w=u(keys[9], (output_dim, hidden_dim)),
        l1_b=u(keys[10], (output_dim,)),
    )
    params = prepare_params(pt)

    x = jax.random.normal(keys[11], (B, T_src, input_dim), jnp.float32)
    tar_seq = jax.random.randint(keys[12], (B, T_tgt), 0, tar_seq_dim, jnp.int32)

    out = seq2seq_lstm_forward(x, tar_seq, params)
    out = jax.block_until_ready(out)
    assert out.shape == (B, T_tgt, output_dim)

    ref = ref_forward(x, tar_seq, pt)
    np.testing.assert_allclose(np.asarray(out), np.asarray(ref),
                               atol=2e-5, rtol=2e-5)
    print("KERNEL_OK")
</pallas_src>

<mosaic_0001>
module attributes {stable_mosaic.version = 11 : i64} {
  func.func @fused_seq2seq_kernel(%arg0: memref<2x6x128xf32, #tpu.memory_space<vmem>>, %arg1: memref<14x1xi32, #tpu.memory_space<vmem>>, %arg2: memref<7x128xf32, #tpu.memory_space<vmem>>, %arg3: memref<128x512xf32, #tpu.memory_space<vmem>>, %arg4: memref<128x512xf32, #tpu.memory_space<vmem>>, %arg5: memref<1x512xf32, #tpu.memory_space<vmem>>, %arg6: memref<128x512xf32, #tpu.memory_space<vmem>>, %arg7: memref<128x512xf32, #tpu.memory_space<vmem>>, %arg8: memref<1x512xf32, #tpu.memory_space<vmem>>, %arg9: memref<128x7xf32, #tpu.memory_space<vmem>>, %arg10: memref<1x7xf32, #tpu.memory_space<vmem>>, %arg11: memref<2x7x7xf32, #tpu.memory_space<vmem>>, %arg12: memref<2x6x512xf32, #tpu.memory_space<vmem>>, %arg13: memref<2x7x512xf32, #tpu.memory_space<vmem>>, %arg14: memref<2x7x128xf32, #tpu.memory_space<vmem>>) attributes {dimension_semantics = [], scalar_prefetch = 0 : i64, scratch_operands = 3 : i64, tpu.core_type = #tpu.core_type<tc>} {
    %c0 = arith.constant 0 : index
    %c0_0 = arith.constant 0 : index
    %0 = vector.load %arg3[%c0, %c0_0] : memref<128x512xf32, #tpu.memory_space<vmem>>, vector<128x512xf32>
    %c0_1 = arith.constant 0 : index
    %c0_2 = arith.constant 0 : index
    %1 = vector.load %arg5[%c0_1, %c0_2] : memref<1x512xf32, #tpu.memory_space<vmem>>, vector<1x512xf32>
    %c0_3 = arith.constant 0 : index
    %c0_4 = arith.constant 0 : index
    %c0_5 = arith.constant 0 : index
    %2 = vector.load %arg0[%c0_3, %c0_4, %c0_5] : memref<2x6x128xf32, #tpu.memory_space<vmem>>, vector<1x6x128xf32>
    %3 = vector.shape_cast %2 : vector<1x6x128xf32> to vector<6x128xf32>
    %cst = arith.constant dense<0.000000e+00> : vector<6x512xf32>
    %4 = tpu.matmul %3, %0, %cst {dimension_numbers = #tpu.dot_dimension_numbers<[1], [0], [0], [1], [0, 0, 1, 1], [], []>} : vector<6x128xf32>, vector<128x512xf32>, vector<6x512xf32> -> vector<6x512xf32>
    %5 = vector.broadcast %1 : vector<1x512xf32> to vector<6x512xf32>
    %6 = arith.addf %4, %5 : vector<6x512xf32>
    %c0_6 = arith.constant 0 : index
    %c0_7 = arith.constant 0 : index
    %c0_8 = arith.constant 0 : index
    %7 = vector.load %arg12[%c0_6, %c0_7, %c0_8] : memref<2x6x512xf32, #tpu.memory_space<vmem>>, vector<1x6x512xf32>
    %8 = vector.shape_cast %7 : vector<1x6x512xf32> to vector<6x512xf32>
    %9 = vector.shape_cast %6 : vector<6x512xf32> to vector<1x6x512xf32>
    tpu.vector_store %arg12[%c0_6, %c0_7, %c0_8], %9 {strides = array<i32>} : memref<2x6x512xf32, #tpu.memory_space<vmem>>, vector<1x6x512xf32>,
    %c1 = arith.constant 1 : index
    %c0_9 = arith.constant 0 : index
    %c0_10 = arith.constant 0 : index
    %10 = vector.load %arg0[%c1, %c0_9, %c0_10] : memref<2x6x128xf32, #tpu.memory_space<vmem>>, vector<1x6x128xf32>
    %11 = vector.shape_cast %10 : vector<1x6x128xf32> to vector<6x128xf32>
    %cst_11 = arith.constant dense<0.000000e+00> : vector<6x512xf32>
    %12 = tpu.matmul %11, %0, %cst_11 {dimension_numbers = #tpu.dot_dimension_numbers<[1], [0], [0], [1], [0, 0, 1, 1], [], []>} : vector<6x128xf32>, vector<128x512xf32>, vector<6x512xf32> -> vector<6x512xf32>
    %13 = vector.broadcast %1 : vector<1x512xf32> to vector<6x512xf32>
    %14 = arith.addf %12, %13 : vector<6x512xf32>
    %c1_12 = arith.constant 1 : index
    %c0_13 = arith.constant 0 : index
    %c0_14 = arith.constant 0 : index
    %15 = vector.load %arg12[%c1_12, %c0_13, %c0_14] : memref<2x6x512xf32, #tpu.memory_space<vmem>>, vector<1x6x512xf32>
    %16 = vector.shape_cast %15 : vector<1x6x512xf32> to vector<6x512xf32>
    %17 = vector.shape_cast %14 : vector<6x512xf32> to vector<1x6x512xf32>
    tpu.vector_store %arg12[%c1_12, %c0_13, %c0_14], %17 {strides = array<i32>} : memref<2x6x512xf32, #tpu.memory_space<vmem>>, vector<1x6x512xf32>,
    %c0_15 = arith.constant 0 : index
    %c0_16 = arith.constant 0 : index
    %18 = vector.load %arg1[%c0_15, %c0_16] : memref<14x1xi32, #tpu.memory_space<vmem>>, vector<14x1xi32>
    %19 = tpu.iota {dimensions = array<i32: 1>} : vector<14x7xi32>
    %20 = vector.broadcast %18 : vector<14x1xi32> to vector<14x7xi32>
    %21 = arith.cmpi eq, %19, %20 : vector<14x7xi32>
    %22 = arith.extui %21 : vector<14x7xi1> to vector<14x7xi32>
    %23 = arith.sitofp %22 : vector<14x7xi32> to vector<14x7xf32>
    %c0_17 = arith.constant 0 : index
    %c0_18 = arith.constant 0 : index
    %24 = vector.load %arg2[%c0_17, %c0_18] : memref<7x128xf32, #tpu.memory_space<vmem>>, vector<7x128xf32>
    %cst_19 = arith.constant dense<0.000000e+00> : vector<14x128xf32>
    %25 = tpu.matmul %23, %24, %cst_19 {dimension_numbers = #tpu.dot_dimension_numbers<[1], [0], [0], [1], [0, 0, 1, 1], [], []>} : vector<14x7xf32>, vector<7x128xf32>, vector<14x128xf32> -> vector<14x128xf32>
    %cst_20 = arith.constant 0.000000e+00 : f32
    %26 = vector.broadcast %cst_20 : f32 to vector<14x128xf32>
    %27 = arith.maximumf %25, %26 : vector<14x128xf32>
    %c0_21 = arith.constant 0 : index
    %c0_22 = arith.constant 0 : index
    %28 = vector.load %arg6[%c0_21, %c0_22] : memref<128x512xf32, #tpu.memory_space<vmem>>, vector<128x512xf32>
    %cst_23 = arith.constant dense<0.000000e+00> : vector<14x512xf32>
    %29 = tpu.matmul %27, %28, %cst_23 {dimension_numbers = #tpu.dot_dimension_numbers<[1], [0], [0], [1], [0, 0, 1, 1], [], []>} : vector<14x128xf32>, vector<128x512xf32>, vector<14x512xf32> -> vector<14x512xf32>
    %c0_24 = arith.constant 0 : index
    %c0_25 = arith.constant 0 : index
    %30 = vector.load %arg8[%c0_24, %c0_25] : memref<1x512xf32, #tpu.memory_space<vmem>>, vector<1x512xf32>
    %31 = vector.broadcast %30 : vector<1x512xf32> to vector<14x512xf32>
    %32 = arith.addf %29, %31 : vector<14x512xf32>
    %33 = vector.extract_strided_slice %32 {offsets = [0, 0], sizes = [7, 512], strides = [1, 1]} : vector<14x512xf32> to vector<7x512xf32>
    %c0_26 = arith.constant 0 : index
    %c0_27 = arith.constant 0 : index
    %c0_28 = arith.constant 0 : index
    %34 = vector.load %arg13[%c0_26, %c0_27, %c0_28] : memref<2x7x512xf32, #tpu.memory_space<vmem>>, vector<1x7x512xf32>
    %35 = vector.shape_cast %34 : vector<1x7x512xf32> to vector<7x512xf32>
    %36 = vector.shape_cast %33 : vector<7x512xf32> to vector<1x7x512xf32>
    tpu.vector_store %arg13[%c0_26, %c0_27, %c0_28], %36 {strides = array<i32>} : memref<2x7x512xf32, #tpu.memory_space<vmem>>, vector<1x7x512xf32>,
    %37 = vector.extract_strided_slice %32 {offsets = [7, 0], sizes = [7, 512], strides = [1, 1]} : vector<14x512xf32> to vector<7x512xf32>
    %c1_29 = arith.constant 1 : index
    %c0_30 = arith.constant 0 : index
    %c0_31 = arith.constant 0 : index
    %38 = vector.load %arg13[%c1_29, %c0_30, %c0_31] : memref<2x7x512xf32, #tpu.memory_space<vmem>>, vector<1x7x512xf32>
    %39 = vector.shape_cast %38 : vector<1x7x512xf32> to vector<7x512xf32>
    %40 = vector.shape_cast %37 : vector<7x512xf32> to vector<1x7x512xf32>
    tpu.vector_store %arg13[%c1_29, %c0_30, %c0_31], %40 {strides = array<i32>} : memref<2x7x512xf32, #tpu.memory_space<vmem>>, vector<1x7x512xf32>,
    %c0_32 = arith.constant 0 : index
    %c0_33 = arith.constant 0 : index
    %41 = vector.load %arg4[%c0_32, %c0_33] : memref<128x512xf32, #tpu.memory_space<vmem>>, vector<128x512xf32>
    %c0_34 = arith.constant 0 : index
    %c0_35 = arith.constant 0 : index
    %42 = vector.load %arg7[%c0_34, %c0_35] : memref<128x512xf32, #tpu.memory_space<vmem>>, vector<128x512xf32>
    %cst_36 = arith.constant 0.000000e+00 : f32
    %43 = vector.broadcast %cst_36 : f32 to vector<2x128xf32>
    %cst_37 = arith.constant 0.000000e+00 : f32
    %44 = vector.broadcast %cst_37 : f32 to vector<2x128xf32>
    %c0_38 = arith.constant 0 : index
    %c0_39 = arith.constant 0 : index
    %c0_40 = arith.constant 0 : index
    %45 = vector.load %arg12[%c0_38, %c0_39, %c0_40] : memref<2x6x512xf32, #tpu.memory_space<vmem>>, vector<2x1x512xf32>
    %46 = vector.shape_cast %45 : vector<2x1x512xf32> to vector<2x512xf32>
    %cst_41 = arith.constant dense<0.000000e+00> : vector<2x512xf32>
    %47 = tpu.matmul %43, %41, %cst_41 {dimension_numbers = #tpu.dot_dimension_numbers<[1], [0], [0], [1], [0, 0, 1, 1], [], []>} : vector<2x128xf32>, vector<128x512xf32>, vector<2x512xf32> -> vector<2x512xf32>
    %48 = arith.addf %46, %47 : vector<2x512xf32>
    %49 = vector.extract_strided_slice %48 {offsets = [0, 0], sizes = [2, 384], strides = [1, 1]} : vector<2x512xf32> to vector<2x384xf32>
    %cst_42 = arith.constant 5.000000e-01 : f32
    %50 = vector.broadcast %cst_42 : f32 to vector<2x384xf32>
    %51 = arith.mulf %50, %49 : vector<2x384xf32>
    %52 = math.tanh %51 : vector<2x384xf32>
    %cst_43 = arith.constant 5.000000e-01 : f32
    %53 = vector.broadcast %cst_43 : f32 to vector<2x384xf32>
    %54 = arith.mulf %53, %52 : vector<2x384xf32>
    %cst_44 = arith.constant 5.000000e-01 : f32
    %55 = vector.broadcast %cst_44 : f32 to vector<2x384xf32>
    %56 = arith.addf %54, %55 : vector<2x384xf32>
    %57 = vector.extract_strided_slice %56 {offsets = [0, 0], sizes = [2, 128], strides = [1, 1]} : vector<2x384xf32> to vector<2x128xf32>
    %58 = vector.extract_strided_slice %56 {offsets = [0, 128], sizes = [2, 128], strides = [1, 1]} : vector<2x384xf32> to vector<2x128xf32>
    %59 = vector.extract_strided_slice %56 {offsets = [0, 256], sizes = [2, 128], strides = [1, 1]} : vector<2x384xf32> to vector<2x128xf32>
    %60 = vector.extract_strided_slice %48 {offsets = [0, 384], sizes = [2, 128], strides = [1, 1]} : vector<2x512xf32> to vector<2x128xf32>
    %61 = math.tanh %60 : vector<2x128xf32>
    %62 = arith.mulf %58, %44 : vector<2x128xf32>
    %63 = arith.mulf %57, %61 : vector<2x128xf32>
    %64 = arith.addf %62, %63 : vector<2x128xf32>
    %65 = math.tanh %64 : vector<2x128xf32>
    %66 = arith.mulf %59, %65 : vector<2x128xf32>
    %c0_45 = arith.constant 0 : index
    %c1_46 = arith.constant 1 : index
    %c0_47 = arith.constant 0 : index
    %67 = vector.load %arg12[%c0_45, %c1_46, %c0_47] : memref<2x6x512xf32, #tpu.memory_space<vmem>>, vector<2x1x512xf32>
    %68 = vector.shape_cast %67 : vector<2x1x512xf32> to vector<2x512xf32>
    %cst_48 = arith.constant dense<0.000000e+00> : vector<2x512xf32>
    %69 = tpu.matmul %66, %41, %cst_48 {dimension_numbers = #tpu.dot_dimension_numbers<[1], [0], [0], [1], [0, 0, 1, 1], [], []>} : vector<2x128xf32>, vector<128x512xf32>, vector<2x512xf32> -> vector<2x512xf32>
    %70 = arith.addf %68, %69 : vector<2x512xf32>
    %71 = vector.extract_strided_slice %70 {offsets = [0, 0], sizes = [2, 384], strides = [1, 1]} : vector<2x512xf32> to vector<2x384xf32>
    %cst_49 = arith.constant 5.000000e-01 : f32
    %72 = vector.broadcast %cst_49 : f32 to vector<2x384xf32>
    %73 = arith.mulf %72, %71 : vector<2x384xf32>
    %74 = math.tanh %73 : vector<2x384xf32>
    %cst_50 = arith.constant 5.000000e-01 : f32
    %75 = vector.broadcast %cst_50 : f32 to vector<2x384xf32>
    %76 = arith.mulf %75, %74 : vector<2x384xf32>
    %cst_51 = arith.constant 5.000000e-01 : f32
    %77 = vector.broadcast %cst_51 : f32 to vector<2x384xf32>
    %78 = arith.addf %76, %77 : vector<2x384xf32>
    %79 = vector.extract_strided_slice %78 {offsets = [0, 0], sizes = [2, 128], strides = [1, 1]} : vector<2x384xf32> to vector<2x128xf32>
    %80 = vector.extract_strided_slice %78 {offsets = [0, 128], sizes = [2, 128], strides = [1, 1]} : vector<2x384xf32> to vector<2x128xf32>
    %81 = vector.extract_strided_slice %78 {offsets = [0, 256], sizes = [2, 128], strides = [1, 1]} : vector<2x384xf32> to vector<2x128xf32>
    %82 = vector.extract_strided_slice %70 {offsets = [0, 384], sizes = [2, 128], strides = [1, 1]} : vector<2x512xf32> to vector<2x128xf32>
    %83 = math.tanh %82 : vector<2x128xf32>
    %84 = arith.mulf %80, %64 : vector<2x128xf32>
    %85 = arith.mulf %79, %83 : vector<2x128xf32>
    %86 = arith.addf %84, %85 : vector<2x128xf32>
    %87 = math.tanh %86 : vector<2x128xf32>
    %88 = arith.mulf %81, %87 : vector<2x128xf32>
    %c0_52 = arith.constant 0 : index
    %c2 = arith.constant 2 : index
    %c0_53 = arith.constant 0 : index
    %89 = vector.load %arg12[%c0_52, %c2, %c0_53] : memref<2x6x512xf32, #tpu.memory_space<vmem>>, vector<2x1x512xf32>
    %90 = vector.shape_cast %89 : vector<2x1x512xf32> to vector<2x512xf32>
    %cst_54 = arith.constant dense<0.000000e+00> : vector<2x512xf32>
    %91 = tpu.matmul %88, %41, %cst_54 {dimension_numbers = #tpu.dot_dimension_numbers<[1], [0], [0], [1], [0, 0, 1, 1], [], []>} : vector<2x128xf32>, vector<128x512xf32>, vector<2x512xf32> -> vector<2x512xf32>
    %92 = arith.addf %90, %91 : vector<2x512xf32>
    %93 = vector.extract_strided_slice %92 {offsets = [0, 0], sizes = [2, 384], strides = [1, 1]} : vector<2x512xf32> to vector<2x384xf32>
    %cst_55 = arith.constant 5.000000e-01 : f32
    %94 = vector.broadcast %cst_55 : f32 to vector<2x384xf32>
    %95 = arith.mulf %94, %93 : vector<2x384xf32>
    %96 = math.tanh %95 : vector<2x384xf32>
    %cst_56 = arith.constant 5.000000e-01 : f32
    %97 = vector.broadcast %cst_56 : f32 to vector<2x384xf32>
    %98 = arith.mulf %97, %96 : vector<2x384xf32>
    %cst_57 = arith.constant 5.000000e-01 : f32
    %99 = vector.broadcast %cst_57 : f32 to vector<2x384xf32>
    %100 = arith.addf %98, %99 : vector<2x384xf32>
    %101 = vector.extract_strided_slice %100 {offsets = [0, 0], sizes = [2, 128], strides = [1, 1]} : vector<2x384xf32> to vector<2x128xf32>
    %102 = vector.extract_strided_slice %100 {offsets = [0, 128], sizes = [2, 128], strides = [1, 1]} : vector<2x384xf32> to vector<2x128xf32>
    %103 = vector.extract_strided_slice %100 {offsets = [0, 256], sizes = [2, 128], strides = [1, 1]} : vector<2x384xf32> to vector<2x128xf32>
    %104 = vector.extract_strided_slice %92 {offsets = [0, 384], sizes = [2, 128], strides = [1, 1]} : vector<2x512xf32> to vector<2x128xf32>
    %105 = math.tanh %104 : vector<2x128xf32>
    %106 = arith.mulf %102, %86 : vector<2x128xf32>
    %107 = arith.mulf %101, %105 : vector<2x128xf32>
    %108 = arith.addf %106, %107 : vector<2x128xf32>
    %109 = math.tanh %108 : vector<2x128xf32>
    %110 = arith.mulf %103, %109 : vector<2x128xf32>
    %c0_58 = arith.constant 0 : index
    %c3 = arith.constant 3 : index
    %c0_59 = arith.constant 0 : index
    %111 = vector.load %arg12[%c0_58, %c3, %c0_59] : memref<2x6x512xf32, #tpu.memory_space<vmem>>, vector<2x1x512xf32>
    %112 = vector.shape_cast %111 : vector<2x1x512xf32> to vector<2x512xf32>
    %cst_60 = arith.constant dense<0.000000e+00> : vector<2x512xf32>
    %113 = tpu.matmul %110, %41, %cst_60 {dimension_numbers = #tpu.dot_dimension_numbers<[1], [0], [0], [1], [0, 0, 1, 1], [], []>} : vector<2x128xf32>, vector<128x512xf32>, vector<2x512xf32> -> vector<2x512xf32>
    %114 = arith.addf %112, %113 : vector<2x512xf32>
    %115 = vector.extract_strided_slice %114 {offsets = [0, 0], sizes = [2, 384], strides = [1, 1]} : vector<2x512xf32> to vector<2x384xf32>
    %cst_61 = arith.constant 5.000000e-01 : f32
    %116 = vector.broadcast %cst_61 : f32 to vector<2x384xf32>
    %117 = arith.mulf %116, %115 : vector<2x384xf32>
    %118 = math.tanh %117 : vector<2x384xf32>
    %cst_62 = arith.constant 5.000000e-01 : f32
    %119 = vector.broadcast %cst_62 : f32 to vector<2x384xf32>
    %120 = arith.mulf %119, %118 : vector<2x384xf32>
    %cst_63 = arith.constant 5.000000e-01 : f32
    %121 = vector.broadcast %cst_63 : f32 to vector<2x384xf32>
    %122 = arith.addf %120, %121 : vector<2x384xf32>
    %123 = vector.extract_strided_slice %122 {offsets = [0, 0], sizes = [2, 128], strides = [1, 1]} : vector<2x384xf32> to vector<2x128xf32>
    %124 = vector.extract_strided_slice %122 {offsets = [0, 128], sizes = [2, 128], strides = [1, 1]} : vector<2x384xf32> to vector<2x128xf32>
    %125 = vector.extract_strided_slice %122 {offsets = [0, 256], sizes = [2, 128], strides = [1, 1]} : vector<2x384xf32> to vector<2x128xf32>
    %126 = vector.extract_strided_slice %114 {offsets = [0, 384], sizes = [2, 128], strides = [1, 1]} : vector<2x512xf32> to vector<2x128xf32>
    %127 = math.tanh %126 : vector<2x128xf32>
    %128 = arith.mulf %124, %108 : vector<2x128xf32>
    %129 = arith.mulf %123, %127 : vector<2x128xf32>
    %130 = arith.addf %128, %129 : vector<2x128xf32>
    %131 = math.tanh %130 : vector<2x128xf32>
    %132 = arith.mulf %125, %131 : vector<2x128xf32>
    %c0_64 = arith.constant 0 : index
    %c4 = arith.constant 4 : index
    %c0_65 = arith.constant 0 : index
    %133 = vector.load %arg12[%c0_64, %c4, %c0_65] : memref<2x6x512xf32, #tpu.memory_space<vmem>>, vector<2x1x512xf32>
    %134 = vector.shape_cast %133 : vector<2x1x512xf32> to vector<2x512xf32>
    %cst_66 = arith.constant dense<0.000000e+00> : vector<2x512xf32>
    %135 = tpu.matmul %132, %41, %cst_66 {dimension_numbers = #tpu.dot_dimension_numbers<[1], [0], [0], [1], [0, 0, 1, 1], [], []>} : vector<2x128xf32>, vector<128x512xf32>, vector<2x512xf32> -> vector<2x512xf32>
    %136 = arith.addf %134, %135 : vector<2x512xf32>
    %137 = vector.extract_strided_slice %136 {offsets = [0, 0], sizes = [2, 384], strides = [1, 1]} : vector<2x512xf32> to vector<2x384xf32>
    %cst_67 = arith.constant 5.000000e-01 : f32
    %138 = vector.broadcast %cst_67 : f32 to vector<2x384xf32>
    %139 = arith.mulf %138, %137 : vector<2x384xf32>
    %140 = math.tanh %139 : vector<2x384xf32>
    %cst_68 = arith.constant 5.000000e-01 : f32
    %141 = vector.broadcast %cst_68 : f32 to vector<2x384xf32>
    %142 = arith.mulf %141, %140 : vector<2x384xf32>
    %cst_69 = arith.constant 5.000000e-01 : f32
    %143 = vector.broadcast %cst_69 : f32 to vector<2x384xf32>
    %144 = arith.addf %142, %143 : vector<2x384xf32>
    %145 = vector.extract_strided_slice %144 {offsets = [0, 0], sizes = [2, 128], strides = [1, 1]} : vector<2x384xf32> to vector<2x128xf32>
    %146 = vector.extract_strided_slice %144 {offsets = [0, 128], sizes = [2, 128], strides = [1, 1]} : vector<2x384xf32> to vector<2x128xf32>
    %147 = vector.extract_strided_slice %144 {offsets = [0, 256], sizes = [2, 128], strides = [1, 1]} : vector<2x384xf32> to vector<2x128xf32>
    %148 = vector.extract_strided_slice %136 {offsets = [0, 384], sizes = [2, 128], strides = [1, 1]} : vector<2x512xf32> to vector<2x128xf32>
    %149 = math.tanh %148 : vector<2x128xf32>
    %150 = arith.mulf %146, %130 : vector<2x128xf32>
    %151 = arith.mulf %145, %149 : vector<2x128xf32>
    %152 = arith.addf %150, %151 : vector<2x128xf32>
    %153 = math.tanh %152 : vector<2x128xf32>
    %154 = arith.mulf %147, %153 : vector<2x128xf32>
    %c0_70 = arith.constant 0 : index
    %c5 = arith.constant 5 : index
    %c0_71 = arith.constant 0 : index
    %155 = vector.load %arg12[%c0_70, %c5, %c0_71] : memref<2x6x512xf32, #tpu.memory_space<vmem>>, vector<2x1x512xf32>
    %156 = vector.shape_cast %155 : vector<2x1x512xf32> to vector<2x512xf32>
    %cst_72 = arith.constant dense<0.000000e+00> : vector<2x512xf32>
    %157 = tpu.matmul %154, %41, %cst_72 {dimension_numbers = #tpu.dot_dimension_numbers<[1], [0], [0], [1], [0, 0, 1, 1], [], []>} : vector<2x128xf32>, vector<128x512xf32>, vector<2x512xf32> -> vector<2x512xf32>
    %158 = arith.addf %156, %157 : vector<2x512xf32>
    %159 = vector.extract_strided_slice %158 {offsets = [0, 0], sizes = [2, 384], strides = [1, 1]} : vector<2x512xf32> to vector<2x384xf32>
    %cst_73 = arith.constant 5.000000e-01 : f32
    %160 = vector.broadcast %cst_73 : f32 to vector<2x384xf32>
    %161 = arith.mulf %160, %159 : vector<2x384xf32>
    %162 = math.tanh %161 : vector<2x384xf32>
    %cst_74 = arith.constant 5.000000e-01 : f32
    %163 = vector.broadcast %cst_74 : f32 to vector<2x384xf32>
    %164 = arith.mulf %163, %162 : vector<2x384xf32>
    %cst_75 = arith.constant 5.000000e-01 : f32
    %165 = vector.broadcast %cst_75 : f32 to vector<2x384xf32>
    %166 = arith.addf %164, %165 : vector<2x384xf32>
    %167 = vector.extract_strided_slice %166 {offsets = [0, 0], sizes = [2, 128], strides = [1, 1]} : vector<2x384xf32> to vector<2x128xf32>
    %168 = vector.extract_strided_slice %166 {offsets = [0, 128], sizes = [2, 128], strides = [1, 1]} : vector<2x384xf32> to vector<2x128xf32>
    %169 = vector.extract_strided_slice %166 {offsets = [0, 256], sizes = [2, 128], strides = [1, 1]} : vector<2x384xf32> to vector<2x128xf32>
    %170 = vector.extract_strided_slice %158 {offsets = [0, 384], sizes = [2, 128], strides = [1, 1]} : vector<2x512xf32> to vector<2x128xf32>
    %171 = math.tanh %170 : vector<2x128xf32>
    %172 = arith.mulf %168, %152 : vector<2x128xf32>
    %173 = arith.mulf %167, %171 : vector<2x128xf32>
    %174 = arith.addf %172, %173 : vector<2x128xf32>
    %175 = math.tanh %174 : vector<2x128xf32>
    %176 = arith.mulf %169, %175 : vector<2x128xf32>
    %c0_76 = arith.constant 0 : index
    %c0_77 = arith.constant 0 : index
    %c0_78 = arith.constant 0 : index
    %177 = vector.load %arg13[%c0_76, %c0_77, %c0_78] : memref<2x7x512xf32, #tpu.memory_space<vmem>>, vector<2x1x512xf32>
    %178 = vector.shape_cast %177 : vector<2x1x512xf32> to vector<2x512xf32>
    %cst_79 = arith.constant dense<0.000000e+00> : vector<2x512xf32>
    %179 = tpu.matmul %176, %42, %cst_79 {dimension_numbers = #tpu.dot_dimension_numbers<[1], [0], [0], [1], [0, 0, 1, 1], [], []>} : vector<2x128xf32>, vector<128x512xf32>, vector<2x512xf32> -> vector<2x512xf32>
    %180 = arith.addf %178, %179 : vector<2x512xf32>
    %181 = vector.extract_strided_slice %180 {offsets = [0, 0], sizes = [2, 384], strides = [1, 1]} : vector<2x512xf32> to vector<2x384xf32>
    %cst_80 = arith.constant 5.000000e-01 : f32
    %182 = vector.broadcast %cst_80 : f32 to vector<2x384xf32>
    %183 = arith.mulf %182, %181 : vector<2x384xf32>
    %184 = math.tanh %183 : vector<2x384xf32>
    %cst_81 = arith.constant 5.000000e-01 : f32
    %185 = vector.broadcast %cst_81 : f32 to vector<2x384xf32>
    %186 = arith.mulf %185, %184 : vector<2x384xf32>
    %cst_82 = arith.constant 5.000000e-01 : f32
    %187 = vector.broadcast %cst_82 : f32 to vector<2x384xf32>
    %188 = arith.addf %186, %187 : vector<2x384xf32>
    %189 = vector.extract_strided_slice %188 {offsets = [0, 0], sizes = [2, 128], strides = [1, 1]} : vector<2x384xf32> to vector<2x128xf32>
    %190 = vector.extract_strided_slice %188 {offsets = [0, 128], sizes = [2, 128], strides = [1, 1]} : vector<2x384xf32> to vector<2x128xf32>
    %191 = vector.extract_strided_slice %188 {offsets = [0, 256], sizes = [2, 128], strides = [1, 1]} : vector<2x384xf32> to vector<2x128xf32>
    %192 = vector.extract_strided_slice %180 {offsets = [0, 384], sizes = [2, 128], strides = [1, 1]} : vector<2x512xf32> to vector<2x128xf32>
    %193 = math.tanh %192 : vector<2x128xf32>
    %194 = arith.mulf %190, %174 : vector<2x128xf32>
    %195 = arith.mulf %189, %193 : vector<2x128xf32>
    %196 = arith.addf %194, %195 : vector<2x128xf32>
    %197 = math.tanh %196 : vector<2x128xf32>
    %198 = arith.mulf %191, %197 : vector<2x128xf32>
    %c0_83 = arith.constant 0 : index
    %c0_84 = arith.constant 0 : index
    %c0_85 = arith.constant 0 : index
    %199 = vector.load %arg14[%c0_83, %c0_84, %c0_85] : memref<2x7x128xf32, #tpu.memory_space<vmem>>, vector<2x1x128xf32>
    %200 = vector.shape_cast %199 : vector<2x1x128xf32> to vector<2x128xf32>
    %201 = vector.shape_cast %198 : vector<2x128xf32> to vector<2x1x128xf32>
    tpu.vector_store %arg14[%c0_83, %c0_84, %c0_85], %201 {strides = array<i32>} : memref<2x7x128xf32, #tpu.memory_space<vmem>>, vector<2x1x128xf32>,
    %c0_86 = arith.constant 0 : index
    %c1_87 = arith.constant 1 : index
    %c0_88 = arith.constant 0 : index
    %202 = vector.load %arg13[%c0_86, %c1_87, %c0_88] : memref<2x7x512xf32, #tpu.memory_space<vmem>>, vector<2x1x512xf32>
    %203 = vector.shape_cast %202 : vector<2x1x512xf32> to vector<2x512xf32>
    %cst_89 = arith.constant dense<0.000000e+00> : vector<2x512xf32>
    %204 = tpu.matmul %198, %42, %cst_89 {dimension_numbers = #tpu.dot_dimension_numbers<[1], [0], [0], [1], [0, 0, 1, 1], [], []>} : vector<2x128xf32>, vector<128x512xf32>, vector<2x512xf32> -> vector<2x512xf32>
    %205 = arith.addf %203, %204 : vector<2x512xf32>
    %206 = vector.extract_strided_slice %205 {offsets = [0, 0], sizes = [2, 384], strides = [1, 1]} : vector<2x512xf32> to vector<2x384xf32>
    %cst_90 = arith.constant 5.000000e-01 : f32
    %207 = vector.broadcast %cst_90 : f32 to vector<2x384xf32>
    %208 = arith.mulf %207, %206 : vector<2x384xf32>
    %209 = math.tanh %208 : vector<2x384xf32>
    %cst_91 = arith.constant 5.000000e-01 : f32
    %210 = vector.broadcast %cst_91 : f32 to vector<2x384xf32>
    %211 = arith.mulf %210, %209 : vector<2x384xf32>
    %cst_92 = arith.constant 5.000000e-01 : f32
    %212 = vector.broadcast %cst_92 : f32 to vector<2x384xf32>
    %213 = arith.addf %211, %212 : vector<2x384xf32>
    %214 = vector.extract_strided_slice %213 {offsets = [0, 0], sizes = [2, 128], strides = [1, 1]} : vector<2x384xf32> to vector<2x128xf32>
    %215 = vector.extract_strided_slice %213 {offsets = [0, 128], sizes = [2, 128], strides = [1, 1]} : vector<2x384xf32> to vector<2x128xf32>
    %216 = vector.extract_strided_slice %213 {offsets = [0, 256], sizes = [2, 128], strides = [1, 1]} : vector<2x384xf32> to vector<2x128xf32>
    %217 = vector.extract_strided_slice %205 {offsets = [0, 384], sizes = [2, 128], strides = [1, 1]} : vector<2x512xf32> to vector<2x128xf32>
    %218 = math.tanh %217 : vector<2x128xf32>
    %219 = arith.mulf %215, %196 : vector<2x128xf32>
    %220 = arith.mulf %214, %218 : vector<2x128xf32>
    %221 = arith.addf %219, %220 : vector<2x128xf32>
    %222 = math.tanh %221 : vector<2x128xf32>
    %223 = arith.mulf %216, %222 : vector<2x128xf32>
    %c0_93 = arith.constant 0 : index
    %c1_94 = arith.constant 1 : index
    %c0_95 = arith.constant 0 : index
    %224 = vector.load %arg14[%c0_93, %c1_94, %c0_95] : memref<2x7x128xf32, #tpu.memory_space<vmem>>, vector<2x1x128xf32>
    %225 = vector.shape_cast %224 : vector<2x1x128xf32> to vector<2x128xf32>
    %226 = vector.shape_cast %223 : vector<2x128xf32> to vector<2x1x128xf32>
    tpu.vector_store %arg14[%c0_93, %c1_94, %c0_95], %226 {strides = array<i32>} : memref<2x7x128xf32, #tpu.memory_space<vmem>>, vector<2x1x128xf32>,
    %c0_96 = arith.constant 0 : index
    %c2_97 = arith.constant 2 : index
    %c0_98 = arith.constant 0 : index
    %227 = vector.load %arg13[%c0_96, %c2_97, %c0_98] : memref<2x7x512xf32, #tpu.memory_space<vmem>>, vector<2x1x512xf32>
    %228 = vector.shape_cast %227 : vector<2x1x512xf32> to vector<2x512xf32>
    %cst_99 = arith.constant dense<0.000000e+00> : vector<2x512xf32>
    %229 = tpu.matmul %223, %42, %cst_99 {dimension_numbers = #tpu.dot_dimension_numbers<[1], [0], [0], [1], [0, 0, 1, 1], [], []>} : vector<2x128xf32>, vector<128x512xf32>, vector<2x512xf32> -> vector<2x512xf32>
    %230 = arith.addf %228, %229 : vector<2x512xf32>
    %231 = vector.extract_strided_slice %230 {offsets = [0, 0], sizes = [2, 384], strides = [1, 1]} : vector<2x512xf32> to vector<2x384xf32>
    %cst_100 = arith.constant 5.000000e-01 : f32
    %232 = vector.broadcast %cst_100 : f32 to vector<2x384xf32>
    %233 = arith.mulf %232, %231 : vector<2x384xf32>
    %234 = math.tanh %233 : vector<2x384xf32>
    %cst_101 = arith.constant 5.000000e-01 : f32
    %235 = vector.broadcast %cst_101 : f32 to vector<2x384xf32>
    %236 = arith.mulf %235, %234 : vector<2x384xf32>
    %cst_102 = arith.constant 5.000000e-01 : f32
    %237 = vector.broadcast %cst_102 : f32 to vector<2x384xf32>
    %238 = arith.addf %236, %237 : vector<2x384xf32>
    %239 = vector.extract_strided_slice %238 {offsets = [0, 0], sizes = [2, 128], strides = [1, 1]} : vector<2x384xf32> to vector<2x128xf32>
    %240 = vector.extract_strided_slice %238 {offsets = [0, 128], sizes = [2, 128], strides = [1, 1]} : vector<2x384xf32> to vector<2x128xf32>
    %241 = vector.extract_strided_slice %238 {offsets = [0, 256], sizes = [2, 128], strides = [1, 1]} : vector<2x384xf32> to vector<2x128xf32>
    %242 = vector.extract_strided_slice %230 {offsets = [0, 384], sizes = [2, 128], strides = [1, 1]} : vector<2x512xf32> to vector<2x128xf32>
    %243 = math.tanh %242 : vector<2x128xf32>
    %244 = arith.mulf %240, %221 : vector<2x128xf32>
    %245 = arith.mulf %239, %243 : vector<2x128xf32>
    %246 = arith.addf %244, %245 : vector<2x128xf32>
    %247 = math.tanh %246 : vector<2x128xf32>
    %248 = arith.mulf %241, %247 : vector<2x128xf32>
    %c0_103 = arith.constant 0 : index
    %c2_104 = arith.constant 2 : index
    %c0_105 = arith.constant 0 : index
    %249 = vector.load %arg14[%c0_103, %c2_104, %c0_105] : memref<2x7x128xf32, #tpu.memory_space<vmem>>, vector<2x1x128xf32>
    %250 = vector.shape_cast %249 : vector<2x1x128xf32> to vector<2x128xf32>
    %251 = vector.shape_cast %248 : vector<2x128xf32> to vector<2x1x128xf32>
    tpu.vector_store %arg14[%c0_103, %c2_104, %c0_105], %251 {strides = array<i32>} : memref<2x7x128xf32, #tpu.memory_space<vmem>>, vector<2x1x128xf32>,
    %c0_106 = arith.constant 0 : index
    %c3_107 = arith.constant 3 : index
    %c0_108 = arith.constant 0 : index
    %252 = vector.load %arg13[%c0_106, %c3_107, %c0_108] : memref<2x7x512xf32, #tpu.memory_space<vmem>>, vector<2x1x512xf32>
    %253 = vector.shape_cast %252 : vector<2x1x512xf32> to vector<2x512xf32>
    %cst_109 = arith.constant dense<0.000000e+00> : vector<2x512xf32>
    %254 = tpu.matmul %248, %42, %cst_109 {dimension_numbers = #tpu.dot_dimension_numbers<[1], [0], [0], [1], [0, 0, 1, 1], [], []>} : vector<2x128xf32>, vector<128x512xf32>, vector<2x512xf32> -> vector<2x512xf32>
    %255 = arith.addf %253, %254 : vector<2x512xf32>
    %256 = vector.extract_strided_slice %255 {offsets = [0, 0], sizes = [2, 384], strides = [1, 1]} : vector<2x512xf32> to vector<2x384xf32>
    %cst_110 = arith.constant 5.000000e-01 : f32
    %257 = vector.broadcast %cst_110 : f32 to vector<2x384xf32>
    %258 = arith.mulf %257, %256 : vector<2x384xf32>
    %259 = math.tanh %258 : vector<2x384xf32>
    %cst_111 = arith.constant 5.000000e-01 : f32
    %260 = vector.broadcast %cst_111 : f32 to vector<2x384xf32>
    %261 = arith.mulf %260, %259 : vector<2x384xf32>
    %cst_112 = arith.constant 5.000000e-01 : f32
    %262 = vector.broadcast %cst_112 : f32 to vector<2x384xf32>
    %263 = arith.addf %261, %262 : vector<2x384xf32>
    %264 = vector.extract_strided_slice %263 {offsets = [0, 0], sizes = [2, 128], strides = [1, 1]} : vector<2x384xf32> to vector<2x128xf32>
    %265 = vector.extract_strided_slice %263 {offsets = [0, 128], sizes = [2, 128], strides = [1, 1]} : vector<2x384xf32> to vector<2x128xf32>
    %266 = vector.extract_strided_slice %263 {offsets = [0, 256], sizes = [2, 128], strides = [1, 1]} : vector<2x384xf32> to vector<2x128xf32>
    %267 = vector.extract_strided_slice %255 {offsets = [0, 384], sizes = [2, 128], strides = [1, 1]} : vector<2x512xf32> to vector<2x128xf32>
    %268 = math.tanh %267 : vector<2x128xf32>
    %269 = arith.mulf %265, %246 : vector<2x128xf32>
    %270 = arith.mulf %264, %268 : vector<2x128xf32>
    %271 = arith.addf %269, %270 : vector<2x128xf32>
    %272 = math.tanh %271 : vector<2x128xf32>
    %273 = arith.mulf %266, %272 : vector<2x128xf32>
    %c0_113 = arith.constant 0 : index
    %c3_114 = arith.constant 3 : index
    %c0_115 = arith.constant 0 : index
    %274 = vector.load %arg14[%c0_113, %c3_114, %c0_115] : memref<2x7x128xf32, #tpu.memory_space<vmem>>, vector<2x1x128xf32>
    %275 = vector.shape_cast %274 : vector<2x1x128xf32> to vector<2x128xf32>
    %276 = vector.shape_cast %273 : vector<2x128xf32> to vector<2x1x128xf32>
    tpu.vector_store %arg14[%c0_113, %c3_114, %c0_115], %276 {strides = array<i32>} : memref<2x7x128xf32, #tpu.memory_space<vmem>>, vector<2x1x128xf32>,
    %c0_116 = arith.constant 0 : index
    %c4_117 = arith.constant 4 : index
    %c0_118 = arith.constant 0 : index
    %277 = vector.load %arg13[%c0_116, %c4_117, %c0_118] : memref<2x7x512xf32, #tpu.memory_space<vmem>>, vector<2x1x512xf32>
    %278 = vector.shape_cast %277 : vector<2x1x512xf32> to vector<2x512xf32>
    %cst_119 = arith.constant dense<0.000000e+00> : vector<2x512xf32>
    %279 = tpu.matmul %273, %42, %cst_119 {dimension_numbers = #tpu.dot_dimension_numbers<[1], [0], [0], [1], [0, 0, 1, 1], [], []>} : vector<2x128xf32>, vector<128x512xf32>, vector<2x512xf32> -> vector<2x512xf32>
    %280 = arith.addf %278, %279 : vector<2x512xf32>
    %281 = vector.extract_strided_slice %280 {offsets = [0, 0], sizes = [2, 384], strides = [1, 1]} : vector<2x512xf32> to vector<2x384xf32>
    %cst_120 = arith.constant 5.000000e-01 : f32
    %282 = vector.broadcast %cst_120 : f32 to vector<2x384xf32>
    %283 = arith.mulf %282, %281 : vector<2x384xf32>
    %284 = math.tanh %283 : vector<2x384xf32>
    %cst_121 = arith.constant 5.000000e-01 : f32
    %285 = vector.broadcast %cst_121 : f32 to vector<2x384xf32>
    %286 = arith.mulf %285, %284 : vector<2x384xf32>
    %cst_122 = arith.constant 5.000000e-01 : f32
    %287 = vector.broadcast %cst_122 : f32 to vector<2x384xf32>
    %288 = arith.addf %286, %287 : vector<2x384xf32>
    %289 = vector.extract_strided_slice %288 {offsets = [0, 0], sizes = [2, 128], strides = [1, 1]} : vector<2x384xf32> to vector<2x128xf32>
    %290 = vector.extract_strided_slice %288 {offsets = [0, 128], sizes = [2, 128], strides = [1, 1]} : vector<2x384xf32> to vector<2x128xf32>
    %291 = vector.extract_strided_slice %288 {offsets = [0, 256], sizes = [2, 128], strides = [1, 1]} : vector<2x384xf32> to vector<2x128xf32>
    %292 = vector.extract_strided_slice %280 {offsets = [0, 384], sizes = [2, 128], strides = [1, 1]} : vector<2x512xf32> to vector<2x128xf32>
    %293 = math.tanh %292 : vector<2x128xf32>
    %294 = arith.mulf %290, %271 : vector<2x128xf32>
    %295 = arith.mulf %289, %293 : vector<2x128xf32>
    %296 = arith.addf %294, %295 : vector<2x128xf32>
    %297 = math.tanh %296 : vector<2x128xf32>
    %298 = arith.mulf %291, %297 : vector<2x128xf32>
    %c0_123 = arith.constant 0 : index
    %c4_124 = arith.constant 4 : index
    %c0_125 = arith.constant 0 : index
    %299 = vector.load %arg14[%c0_123, %c4_124, %c0_125] : memref<2x7x128xf32, #tpu.memory_space<vmem>>, vector<2x1x128xf32>
    %300 = vector.shape_cast %299 : vector<2x1x128xf32> to vector<2x128xf32>
    %301 = vector.shape_cast %298 : vector<2x128xf32> to vector<2x1x128xf32>
    tpu.vector_store %arg14[%c0_123, %c4_124, %c0_125], %301 {strides = array<i32>} : memref<2x7x128xf32, #tpu.memory_space<vmem>>, vector<2x1x128xf32>,
    %c0_126 = arith.constant 0 : index
    %c5_127 = arith.constant 5 : index
    %c0_128 = arith.constant 0 : index
    %302 = vector.load %arg13[%c0_126, %c5_127, %c0_128] : memref<2x7x512xf32, #tpu.memory_space<vmem>>, vector<2x1x512xf32>
    %303 = vector.shape_cast %302 : vector<2x1x512xf32> to vector<2x512xf32>
    %cst_129 = arith.constant dense<0.000000e+00> : vector<2x512xf32>
    %304 = tpu.matmul %298, %42, %cst_129 {dimension_numbers = #tpu.dot_dimension_numbers<[1], [0], [0], [1], [0, 0, 1, 1], [], []>} : vector<2x128xf32>, vector<128x512xf32>, vector<2x512xf32> -> vector<2x512xf32>
    %305 = arith.addf %303, %304 : vector<2x512xf32>
    %306 = vector.extract_strided_slice %305 {offsets = [0, 0], sizes = [2, 384], strides = [1, 1]} : vector<2x512xf32> to vector<2x384xf32>
    %cst_130 = arith.constant 5.000000e-01 : f32
    %307 = vector.broadcast %cst_130 : f32 to vector<2x384xf32>
    %308 = arith.mulf %307, %306 : vector<2x384xf32>
    %309 = math.tanh %308 : vector<2x384xf32>
    %cst_131 = arith.constant 5.000000e-01 : f32
    %310 = vector.broadcast %cst_131 : f32 to vector<2x384xf32>
    %311 = arith.mulf %310, %309 : vector<2x384xf32>
    %cst_132 = arith.constant 5.000000e-01 : f32
    %312 = vector.broadcast %cst_132 : f32 to vector<2x384xf32>
    %313 = arith.addf %311, %312 : vector<2x384xf32>
    %314 = vector.extract_strided_slice %313 {offsets = [0, 0], sizes = [2, 128], strides = [1, 1]} : vector<2x384xf32> to vector<2x128xf32>
    %315 = vector.extract_strided_slice %313 {offsets = [0, 128], sizes = [2, 128], strides = [1, 1]} : vector<2x384xf32> to vector<2x128xf32>
    %316 = vector.extract_strided_slice %313 {offsets = [0, 256], sizes = [2, 128], strides = [1, 1]} : vector<2x384xf32> to vector<2x128xf32>
    %317 = vector.extract_strided_slice %305 {offsets = [0, 384], sizes = [2, 128], strides = [1, 1]} : vector<2x512xf32> to vector<2x128xf32>
    %318 = math.tanh %317 : vector<2x128xf32>
    %319 = arith.mulf %315, %296 : vector<2x128xf32>
    %320 = arith.mulf %314, %318 : vector<2x128xf32>
    %321 = arith.addf %319, %320 : vector<2x128xf32>
    %322 = math.tanh %321 : vector<2x128xf32>
    %323 = arith.mulf %316, %322 : vector<2x128xf32>
    %c0_133 = arith.constant 0 : index
    %c5_134 = arith.constant 5 : index
    %c0_135 = arith.constant 0 : index
    %324 = vector.load %arg14[%c0_133, %c5_134, %c0_135] : memref<2x7x128xf32, #tpu.memory_space<vmem>>, vector<2x1x128xf32>
    %325 = vector.shape_cast %324 : vector<2x1x128xf32> to vector<2x128xf32>
    %326 = vector.shape_cast %323 : vector<2x128xf32> to vector<2x1x128xf32>
    tpu.vector_store %arg14[%c0_133, %c5_134, %c0_135], %326 {strides = array<i32>} : memref<2x7x128xf32, #tpu.memory_space<vmem>>, vector<2x1x128xf32>,
    %c0_136 = arith.constant 0 : index
    %c6 = arith.constant 6 : index
    %c0_137 = arith.constant 0 : index
    %327 = vector.load %arg13[%c0_136, %c6, %c0_137] : memref<2x7x512xf32, #tpu.memory_space<vmem>>, vector<2x1x512xf32>
    %328 = vector.shape_cast %327 : vector<2x1x512xf32> to vector<2x512xf32>
    %cst_138 = arith.constant dense<0.000000e+00> : vector<2x512xf32>
    %329 = tpu.matmul %323, %42, %cst_138 {dimension_numbers = #tpu.dot_dimension_numbers<[1], [0], [0], [1], [0, 0, 1, 1], [], []>} : vector<2x128xf32>, vector<128x512xf32>, vector<2x512xf32> -> vector<2x512xf32>
    %330 = arith.addf %328, %329 : vector<2x512xf32>
    %331 = vector.extract_strided_slice %330 {offsets = [0, 0], sizes = [2, 384], strides = [1, 1]} : vector<2x512xf32> to vector<2x384xf32>
    %cst_139 = arith.constant 5.000000e-01 : f32
    %332 = vector.broadcast %cst_139 : f32 to vector<2x384xf32>
    %333 = arith.mulf %332, %331 : vector<2x384xf32>
    %334 = math.tanh %333 : vector<2x384xf32>
    %cst_140 = arith.constant 5.000000e-01 : f32
    %335 = vector.broadcast %cst_140 : f32 to vector<2x384xf32>
    %336 = arith.mulf %335, %334 : vector<2x384xf32>
    %cst_141 = arith.constant 5.000000e-01 : f32
    %337 = vector.broadcast %cst_141 : f32 to vector<2x384xf32>
    %338 = arith.addf %336, %337 : vector<2x384xf32>
    %339 = vector.extract_strided_slice %338 {offsets = [0, 0], sizes = [2, 128], strides = [1, 1]} : vector<2x384xf32> to vector<2x128xf32>
    %340 = vector.extract_strided_slice %338 {offsets = [0, 128], sizes = [2, 128], strides = [1, 1]} : vector<2x384xf32> to vector<2x128xf32>
    %341 = vector.extract_strided_slice %338 {offsets = [0, 256], sizes = [2, 128], strides = [1, 1]} : vector<2x384xf32> to vector<2x128xf32>
    %342 = vector.extract_strided_slice %330 {offsets = [0, 384], sizes = [2, 128], strides = [1, 1]} : vector<2x512xf32> to vector<2x128xf32>
    %343 = math.tanh %342 : vector<2x128xf32>
    %344 = arith.mulf %340, %321 : vector<2x128xf32>
    %345 = arith.mulf %339, %343 : vector<2x128xf32>
    %346 = arith.addf %344, %345 : vector<2x128xf32>
    %347 = math.tanh %346 : vector<2x128xf32>
    %348 = arith.mulf %341, %347 : vector<2x128xf32>
    %c0_142 = arith.constant 0 : index
    %c6_143 = arith.constant 6 : index
    %c0_144 = arith.constant 0 : index
    %349 = vector.load %arg14[%c0_142, %c6_143, %c0_144] : memref<2x7x128xf32, #tpu.memory_space<vmem>>, vector<2x1x128xf32>
    %350 = vector.shape_cast %349 : vector<2x1x128xf32> to vector<2x128xf32>
    %351 = vector.shape_cast %348 : vector<2x128xf32> to vector<2x1x128xf32>
    tpu.vector_store %arg14[%c0_142, %c6_143, %c0_144], %351 {strides = array<i32>} : memref<2x7x128xf32, #tpu.memory_space<vmem>>, vector<2x1x128xf32>,
    %c0_145 = arith.constant 0 : index
    %c0_146 = arith.constant 0 : index
    %352 = vector.load %arg9[%c0_145, %c0_146] : memref<128x7xf32, #tpu.memory_space<vmem>>, vector<128x7xf32>
    %c0_147 = arith.constant 0 : index
    %c0_148 = arith.constant 0 : index
    %353 = vector.load %arg10[%c0_147, %c0_148] : memref<1x7xf32, #tpu.memory_space<vmem>>, vector<1x7xf32>
    %c0_149 = arith.constant 0 : index
    %c0_150 = arith.constant 0 : index
    %c0_151 = arith.constant 0 : index
    %354 = vector.load %arg14[%c0_149, %c0_150, %c0_151] : memref<2x7x128xf32, #tpu.memory_space<vmem>>, vector<1x7x128xf32>
    %355 = vector.shape_cast %354 : vector<1x7x128xf32> to vector<7x128xf32>
    %cst_152 = arith.constant dense<0.000000e+00> : vector<7x7xf32>
    %356 = tpu.matmul %355, %352, %cst_152 {dimension_numbers = #tpu.dot_dimension_numbers<[1], [0], [0], [1], [0, 0, 1, 1], [], []>} : vector<7x128xf32>, vector<128x7xf32>, vector<7x7xf32> -> vector<7x7xf32>
    %357 = vector.broadcast %353 : vector<1x7xf32> to vector<7x7xf32>
    %358 = arith.addf %356, %357 : vector<7x7xf32>
    %cst_153 = arith.constant dense<0xFF800000> : vector<7xf32>
    %359 = vector.multi_reduction <maximumf>, %358, %cst_153 [1] : vector<7x7xf32> to vector<7xf32>
    %360 = vector.shape_cast %359 : vector<7xf32> to vector<7x1xf32>
    %361 = vector.broadcast %360 : vector<7x1xf32> to vector<7x7xf32>
    %362 = arith.subf %358, %361 : vector<7x7xf32>
    %363 = math.exp %362 : vector<7x7xf32>
    %cst_154 = arith.constant dense<0.000000e+00> : vector<7xf32>
    %364 = vector.multi_reduction <add>, %363, %cst_154 [1] : vector<7x7xf32> to vector<7xf32>
    %365 = vector.shape_cast %364 : vector<7xf32> to vector<7x1xf32>
    %366 = math.log %365 : vector<7x1xf32>
    %367 = vector.broadcast %366 : vector<7x1xf32> to vector<7x7xf32>
    %368 = arith.subf %362, %367 : vector<7x7xf32>
    %c0_155 = arith.constant 0 : index
    %c0_156 = arith.constant 0 : index
    %c0_157 = arith.constant 0 : index
    %369 = vector.load %arg11[%c0_155, %c0_156, %c0_157] : memref<2x7x7xf32, #tpu.memory_space<vmem>>, vector<1x7x7xf32>
    %370 = vector.shape_cast %369 : vector<1x7x7xf32> to vector<7x7xf32>
    %371 = vector.shape_cast %368 : vector<7x7xf32> to vector<1x7x7xf32>
    tpu.vector_store %arg11[%c0_155, %c0_156, %c0_157], %371 {strides = array<i32>} : memref<2x7x7xf32, #tpu.memory_space<vmem>>, vector<1x7x7xf32>,
    %c1_158 = arith.constant 1 : index
    %c0_159 = arith.constant 0 : index
    %c0_160 = arith.constant 0 : index
    %372 = vector.load %arg14[%c1_158, %c0_159, %c0_160] : memref<2x7x128xf32, #tpu.memory_space<vmem>>, vector<1x7x128xf32>
    %373 = vector.shape_cast %372 : vector<1x7x128xf32> to vector<7x128xf32>
    %cst_161 = arith.constant dense<0.000000e+00> : vector<7x7xf32>
    %374 = tpu.matmul %373, %352, %cst_161 {dimension_numbers = #tpu.dot_dimension_numbers<[1], [0], [0], [1], [0, 0, 1, 1], [], []>} : vector<7x128xf32>, vector<128x7xf32>, vector<7x7xf32> -> vector<7x7xf32>
    %375 = vector.broadcast %353 : vector<1x7xf32> to vector<7x7xf32>
    %376 = arith.addf %374, %375 : vector<7x7xf32>
    %cst_162 = arith.constant dense<0xFF800000> : vector<7xf32>
    %377 = vector.multi_reduction <maximumf>, %376, %cst_162 [1] : vector<7x7xf32> to vector<7xf32>
    %378 = vector.shape_cast %377 : vector<7xf32> to vector<7x1xf32>
    %379 = vector.broadcast %378 : vector<7x1xf32> to vector<7x7xf32>
    %380 = arith.subf %376, %379 : vector<7x7xf32>
    %381 = math.exp %380 : vector<7x7xf32>
    %cst_163 = arith.constant dense<0.000000e+00> : vector<7xf32>
    %382 = vector.multi_reduction <add>, %381, %cst_163 [1] : vector<7x7xf32> to vector<7xf32>
    %383 = vector.shape_cast %382 : vector<7xf32> to vector<7x1xf32>
    %384 = math.log %383 : vector<7x1xf32>
    %385 = vector.broadcast %384 : vector<7x1xf32> to vector<7x7xf32>
    %386 = arith.subf %380, %385 : vector<7x7xf32>
    %c1_164 = arith.constant 1 : index
    %c0_165 = arith.constant 0 : index
    %c0_166 = arith.constant 0 : index
    %387 = vector.load %arg11[%c1_164, %c0_165, %c0_166] : memref<2x7x7xf32, #tpu.memory_space<vmem>>, vector<1x7x7xf32>
    %388 = vector.shape_cast %387 : vector<1x7x7xf32> to vector<7x7xf32>
    %389 = vector.shape_cast %386 : vector<7x7xf32> to vector<1x7x7xf32>
    tpu.vector_store %arg11[%c1_164, %c0_165, %c0_166], %389 {strides = array<i32>} : memref<2x7x7xf32, #tpu.memory_space<vmem>>, vector<1x7x7xf32>,
    return
  }
}

</mosaic_0001>

<llo_original>
// kernel: seq2seq_lstm_forward.1
$region0: #{seq2seq_lstm_forward.1}
  #allocation0 [shape = 'u32[]', space=smem, size = 0x4, offset = 0x4, fixed_abs, tag = 'smem constant byte address 0x4 - core index']
  #allocation1 [shape = 'u32[144,128]{1,0:T(1,128)}', space=vmem, size = 0x12000, scoped, tag = 'internal scratch']
  #allocation2 [shape = 'f32[2,6,512]{2,1,0:T(8,128)}', space=vmem, size = 0x8000, scoped, tag = 'scratch operand']
  #allocation3 [shape = 'f32[2,7,512]{2,1,0:T(8,128)}', space=vmem, size = 0x8000, scoped, tag = 'scratch operand']
  #allocation4 [shape = 'f32[2,7,128]{2,1,0:T(8,128)}', space=vmem, size = 0x2000, scoped, tag = 'scratch operand']
  %s0 = inlined_call_operand.vmem [shape: f32[2,6,128], index: 0, kind: input, shape index: {}]
  %s1 = inlined_call_operand.vmem [shape: s32[14,1], index: 1, kind: input, shape index: {}]
  %s2 = inlined_call_operand.vmem [shape: f32[7,128], index: 2, kind: input, shape index: {}]
  %s3 = inlined_call_operand.hbm [shape: f32[128,512], index: 3, kind: input, shape index: {}]
  %s4 = inlined_call_operand.hbm [shape: f32[128,512], index: 4, kind: input, shape index: {}]
  %s5 = inlined_call_operand.vmem [shape: f32[1,512], index: 5, kind: input, shape index: {}]
  %s6 = inlined_call_operand.hbm [shape: f32[128,512], index: 6, kind: input, shape index: {}]
  %s7 = inlined_call_operand.hbm [shape: f32[128,512], index: 7, kind: input, shape index: {}]
  %s8 = inlined_call_operand.vmem [shape: f32[1,512], index: 8, kind: input, shape index: {}]
  %s9 = inlined_call_operand.vmem [shape: f32[128,7], index: 9, kind: input, shape index: {}]
  %s10 = inlined_call_operand.vmem [shape: f32[1,7], index: 10, kind: input, shape index: {}]
  %s11 = inlined_call_operand.vmem [shape: f32[2,7,7], index: 11, kind: output, shape index: {}]
  %s12 = sld [smem:[#allocation0]]
  $region70: #{seq2seq_lstm_forward.1} parent=0
    _
  %s14 = ssub.s32 1, %s12
  %s15 = scalar_select 0, %s14, %s12
  $region1: #{seq2seq_lstm_forward.1} parent=0
    #allocation5 [shape = 'u8[262144]{0}', space=vmem, size = 0x40000, scoped, tag = 'input window, operand 3, single buffered']
    #allocation6 [shape = 's32[1]{0}', space=sflag, size = 0x4, scoped, tag = 'scoped memory for seq2seq_lstm_forward.1']
    #allocation7 [shape = 'u8[262144]{0}', space=vmem, size = 0x40000, scoped, tag = 'input window, operand 4, single buffered']
    #allocation8 [shape = 's32[1]{0}', space=sflag, size = 0x4, scoped, tag = 'scoped memory for seq2seq_lstm_forward.1']
    #allocation9 [shape = 'u8[262144]{0}', space=vmem, size = 0x40000, scoped, tag = 'input window, operand 6, single buffered']
    #allocation10 [shape = 'u8[262144]{0}', space=vmem, size = 0x40000, scoped, tag = 'input window, operand 7, single buffered']
    #allocation11 [shape = 's32[1]{0}', space=sflag, size = 0x4, scoped, tag = 'scoped memory for seq2seq_lstm_forward.1']
    %16 = vsyncpa [#allocation6], 0
    %17 = vsyncpa [#allocation8], 0
    %18 = vsyncpa [#allocation11], 0
    // Predicated region
    $region2: #{seq2seq_lstm_forward.1} parent=1 // pred_check
      _
    $region3: #{seq2seq_lstm_forward.1} parent=1 // pred_check_branch
      %20 = sbr.rel (0) target = $region5
    $region4: #{seq2seq_lstm_forward.1} parent=1 // pred_region
      _
    $region5: #{seq2seq_lstm_forward.1} parent=1 // pred_fallthru
      _
    // Predicated region
    $region6: #{seq2seq_lstm_forward.1} parent=1 // pred_check
      _
    $region7: #{seq2seq_lstm_forward.1} parent=1 // pred_check_branch
      %22 = sbr.rel (0) target = $region9
    $region8: #{seq2seq_lstm_forward.1} parent=1 // pred_region
      _
    $region9: #{seq2seq_lstm_forward.1} parent=1 // pred_fallthru
      _
    // Predicated region
    $region10: #{seq2seq_lstm_forward.1} parent=1 // pred_check
      _
    $region11: #{seq2seq_lstm_forward.1} parent=1 // pred_check_branch
      %24 = sbr.rel (0) target = $region13
    $region12: #{seq2seq_lstm_forward.1} parent=1 // pred_region
      _
    $region13: #{seq2seq_lstm_forward.1} parent=1 // pred_fallthru
      _
    // Predicated region
    $region14: #{seq2seq_lstm_forward.1} parent=1 // pred_check
      _
    $region15: #{seq2seq_lstm_forward.1} parent=1 // pred_check_branch
      %26 = sbr.rel (0) target = $region17
    $region16: #{seq2seq_lstm_forward.1} parent=1 // pred_region
      %s28 = ssub.s32 8192, 8192
      %29 = vsyncadd [#allocation6], %s28
      %s30 = sshll.u32 [#allocation5], 4
      %s31 = int_to_ptr.vmem [resolvable:$true] %s30
      %36 = dma.hbm_to_vmem [thread:$0]  %s3, 8192, %s31, [#allocation6], 512, 512, 32
    $region17: #{seq2seq_lstm_forward.1} parent=1 // pred_fallthru
      _
    // Predicated region
    $region18: #{seq2seq_lstm_forward.1} parent=1 // pred_check
      _
    $region19: #{seq2seq_lstm_forward.1} parent=1 // pred_check_branch
      %38 = sbr.rel (0) target = $region21
    $region20: #{seq2seq_lstm_forward.1} parent=1 // pred_region
      %s40 = ssub.s32 8192, 8192
      %41 = vsyncadd [#allocation8], %s40
      %s42 = sshll.u32 [#allocation7], 4
      %s43 = int_to_ptr.vmem [resolvable:$true] %s42
      %48 = dma.hbm_to_vmem [thread:$0]  %s4, 8192, %s43, [#allocation8], 512, 512, 32
    $region21: #{seq2seq_lstm_forward.1} parent=1 // pred_fallthru
      _
    // Predicated region
    $region22: #{seq2seq_lstm_forward.1} parent=1 // pred_check
      _
    $region23: #{seq2seq_lstm_forward.1} parent=1 // pred_check_branch
      %50 = sbr.rel (0) target = $region25
    $region24: #{seq2seq_lstm_forward.1} parent=1 // pred_region
      _
    $region25: #{seq2seq_lstm_forward.1} parent=1 // pred_fallthru
      _
    // Predicated region
    $region26: #{seq2seq_lstm_forward.1} parent=1 // pred_check
      _
    $region27: #{seq2seq_lstm_forward.1} parent=1 // pred_check_branch
      %52 = sbr.rel (0) target = $region29
    $region28: #{seq2seq_lstm_forward.1} parent=1 // pred_region
      %s54 = ssub.s32 8192, 8192
      %55 = vsyncadd [#allocation8], %s54
      %s56 = sshll.u32 [#allocation9], 4
      %s57 = int_to_ptr.vmem [resolvable:$true] %s56
      %62 = dma.hbm_to_vmem [thread:$0]  %s6, 8192, %s57, [#allocation8], 512, 512, 32
    $region29: #{seq2seq_lstm_forward.1} parent=1 // pred_fallthru
      _
    // Predicated region
    $region30: #{seq2seq_lstm_forward.1} parent=1 // pred_check
      _
    $region31: #{seq2seq_lstm_forward.1} parent=1 // pred_check_branch
      %64 = sbr.rel (0) target = $region33
    $region32: #{seq2seq_lstm_forward.1} parent=1 // pred_region
      %s66 = ssub.s32 8192, 8192
      %67 = vsyncadd [#allocation11], %s66
      %s68 = sshll.u32 [#allocation10], 4
      %s69 = int_to_ptr.vmem [resolvable:$true] %s68
      %74 = dma.hbm_to_vmem [thread:$0]  %s7, 8192, %s69, [#allocation11], 512, 512, 32
    $region33: #{seq2seq_lstm_forward.1} parent=1 // pred_fallthru
      _
    // Predicated region
    $region34: #{seq2seq_lstm_forward.1} parent=1 // pred_check
      _
    $region35: #{seq2seq_lstm_forward.1} parent=1 // pred_check_branch
      %76 = sbr.rel (0) target = $region37
    $region36: #{seq2seq_lstm_forward.1} parent=1 // pred_region
      _
    $region37: #{seq2seq_lstm_forward.1} parent=1 // pred_fallthru
      _
    // Predicated region
    $region38: #{seq2seq_lstm_forward.1} parent=1 // pred_check
      _
    $region39: #{seq2seq_lstm_forward.1} parent=1 // pred_check_branch
      %78 = sbr.rel (0) target = $region41
    $region40: #{seq2seq_lstm_forward.1} parent=1 // pred_region
      _
    $region41: #{seq2seq_lstm_forward.1} parent=1 // pred_fallthru
      _
    // Predicated region
    $region42: #{seq2seq_lstm_forward.1} parent=1 // pred_check
      _
    $region43: #{seq2seq_lstm_forward.1} parent=1 // pred_check_branch
      %80 = sbr.rel (0) target = $region45
    $region44: #{seq2seq_lstm_forward.1} parent=1 // pred_region
      _
    $region45: #{seq2seq_lstm_forward.1} parent=1 // pred_fallthru
      _
    // Predicated region
    $region46: #{seq2seq_lstm_forward.1} parent=1 // pred_check
      _
    $region47: #{seq2seq_lstm_forward.1} parent=1 // pred_check_branch
      %82 = sbr.rel (0) target = $region49
    $region48: #{seq2seq_lstm_forward.1} parent=1 // pred_region
      %83 = dma.done [#allocation6], 8192
    $region49: #{seq2seq_lstm_forward.1} parent=1 // pred_fallthru
      _
    // Predicated region
    $region50: #{seq2seq_lstm_forward.1} parent=1 // pred_check
      _
    $region51: #{seq2seq_lstm_forward.1} parent=1 // pred_check_branch
      %85 = sbr.rel (0) target = $region53
    $region52: #{seq2seq_lstm_forward.1} parent=1 // pred_region
      %86 = dma.done [#allocation8], 8192
    $region53: #{seq2seq_lstm_forward.1} parent=1 // pred_fallthru
      _
    // Predicated region
    $region54: #{seq2seq_lstm_forward.1} parent=1 // pred_check
      _
    $region55: #{seq2seq_lstm_forward.1} parent=1 // pred_check_branch
      %88 = sbr.rel (0) target = $region57
    $region56: #{seq2seq_lstm_forward.1} parent=1 // pred_region
      %89 = dma.done [#allocation8], 8192
    $region57: #{seq2seq_lstm_forward.1} parent=1 // pred_fallthru
      _
    // Predicated region
    $region58: #{seq2seq_lstm_forward.1} parent=1 // pred_check
      _
    $region59: #{seq2seq_lstm_forward.1} parent=1 // pred_check_branch
      %91 = sbr.rel (0) target = $region61
    $region60: #{seq2seq_lstm_forward.1} parent=1 // pred_region
      %92 = dma.done [#allocation11], 8192
    $region61: #{seq2seq_lstm_forward.1} parent=1 // pred_fallthru
      _
    %v93 = vld [vmem:[#allocation5] sm:$0xff]
    %v94 = vld [vmem:[#allocation5 + $0x8] sm:$0xff]
    %v95 = vld [vmem:[#allocation5 + $0x10] sm:$0xff]
    %v96 = vld [vmem:[#allocation5 + $0x18] sm:$0xff]
    %v97 = vld [vmem:[#allocation5 + $0x20] sm:$0xff]
    %v98 = vld [vmem:[#allocation5 + $0x28] sm:$0xff]
    %v99 = vld [vmem:[#allocation5 + $0x30] sm:$0xff]
    %v100 = vld [vmem:[#allocation5 + $0x38] sm:$0xff]
    %v101 = vld [vmem:[#allocation5 + $0x40] sm:$0xff]
    %v102 = vld [vmem:[#allocation5 + $0x48] sm:$0xff]
    %v103 = vld [vmem:[#allocation5 + $0x50] sm:$0xff]
    %v104 = vld [vmem:[#allocation5 + $0x58] sm:$0xff]
    %v105 = vld [vmem:[#allocation5 + $0x60] sm:$0xff]
    %v106 = vld [vmem:[#allocation5 + $0x68] sm:$0xff]
    %v107 = vld [vmem:[#allocation5 + $0x70] sm:$0xff]
    %v108 = vld [vmem:[#allocation5 + $0x78] sm:$0xff]
    %v109 = vld [vmem:[#allocation5 + $0x80] sm:$0xff]
    %v110 = vld [vmem:[#allocation5 + $0x88] sm:$0xff]
    %v111 = vld [vmem:[#allocation5 + $0x90] sm:$0xff]
    %v112 = vld [vmem:[#allocation5 + $0x98] sm:$0xff]
    %v113 = vld [vmem:[#allocation5 + $0xa0] sm:$0xff]
    %v114 = vld [vmem:[#allocation5 + $0xa8] sm:$0xff]
    %v115 = vld [vmem:[#allocation5 + $0xb0] sm:$0xff]
    %v116 = vld [vmem:[#allocation5 + $0xb8] sm:$0xff]
    %v117 = vld [vmem:[#allocation5 + $0xc0] sm:$0xff]
    %v118 = vld [vmem:[#allocation5 + $0xc8] sm:$0xff]
    %v119 = vld [vmem:[#allocation5 + $0xd0] sm:$0xff]
    %v120 = vld [vmem:[#allocation5 + $0xd8] sm:$0xff]
    %v121 = vld [vmem:[#allocation5 + $0xe0] sm:$0xff]
    %v122 = vld [vmem:[#allocation5 + $0xe8] sm:$0xff]
    %v123 = vld [vmem:[#allocation5 + $0xf0] sm:$0xff]
    %v124 = vld [vmem:[#allocation5 + $0xf8] sm:$0xff]
    %v125 = vld [vmem:[#allocation5 + $0x100] sm:$0xff]
    %v126 = vld [vmem:[#allocation5 + $0x108] sm:$0xff]
    %v127 = vld [vmem:[#allocation5 + $0x110] sm:$0xff]
    %v128 = vld [vmem:[#allocation5 + $0x118] sm:$0xff]
    %v129 = vld [vmem:[#allocation5 + $0x120] sm:$0xff]
    %v130 = vld [vmem:[#allocation5 + $0x128] sm:$0xff]
    %v131 = vld [vmem:[#allocation5 + $0x130] sm:$0xff]
    %v132 = vld [vmem:[#allocation5 + $0x138] sm:$0xff]
    %v133 = vld [vmem:[#allocation5 + $0x140] sm:$0xff]
    %v134 = vld [vmem:[#allocation5 + $0x148] sm:$0xff]
    %v135 = vld [vmem:[#allocation5 + $0x150] sm:$0xff]
    %v136 = vld [vmem:[#allocation5 + $0x158] sm:$0xff]
    %v137 = vld [vmem:[#allocation5 + $0x160] sm:$0xff]
    %v138 = vld [vmem:[#allocation5 + $0x168] sm:$0xff]
    %v139 = vld [vmem:[#allocation5 + $0x170] sm:$0xff]
    %v140 = vld [vmem:[#allocation5 + $0x178] sm:$0xff]
    %v141 = vld [vmem:[#allocation5 + $0x180] sm:$0xff]
    %v142 = vld [vmem:[#allocation5 + $0x188] sm:$0xff]
    %v143 = vld [vmem:[#allocation5 + $0x190] sm:$0xff]
    %v144 = vld [vmem:[#allocation5 + $0x198] sm:$0xff]
    %v145 = vld [vmem:[#allocation5 + $0x1a0] sm:$0xff]
    %v146 = vld [vmem:[#allocation5 + $0x1a8] sm:$0xff]
    %v147 = vld [vmem:[#allocation5 + $0x1b0] sm:$0xff]
    %v148 = vld [vmem:[#allocation5 + $0x1b8] sm:$0xff]
    %v149 = vld [vmem:[#allocation5 + $0x1c0] sm:$0xff]
    %v150 = vld [vmem:[#allocation5 + $0x1c8] sm:$0xff]
    %v151 = vld [vmem:[#allocation5 + $0x1d0] sm:$0xff]
    %v152 = vld [vmem:[#allocation5 + $0x1d8] sm:$0xff]
    %v153 = vld [vmem:[#allocation5 + $0x1e0] sm:$0xff]
    %v154 = vld [vmem:[#allocation5 + $0x1e8] sm:$0xff]
    %v155 = vld [vmem:[#allocation5 + $0x1f0] sm:$0xff]
    %v156 = vld [vmem:[#allocation5 + $0x1f8] sm:$0xff]
    %v157 = vld [vmem:[%s5] sm:$0xf]
    %v158 = vld [vmem:[%s0] sm:$0x3f]
    %v160 = vlaneseq
    %v161 = vshrl.u32 %v160, 7
    %v162 = vsub.s32 0, %v161
    %v163 = vrot.slane %v157, %v162
    %v164 = vlaneseq
    %v165 = vshrl.u32 %v164, 7
    %v166 = vsub.s32 1, %v165
    %v167 = vrot.slane %v157, %v166
    %v168 = vlaneseq
    %v169 = vshrl.u32 %v168, 7
    %v170 = vsub.s32 2, %v169
    %v171 = vrot.slane %v157, %v170
    %v172 = vlaneseq
    %v173 = vshrl.u32 %v172, 7
    %v174 = vsub.s32 3, %v173
    %v175 = vrot.slane %v157, %v174
    %180 = vmatprep.subr.mxu0 %v94
    %181 = vmatpush1.msra.mxu0 %v93
    %182 = vmatprep.subr.mxu0 %v98
    %183 = vmatpush1.msra.mxu0 %v97
    %184 = vmatprep.subr.mxu0 %v102
    %185 = vmatpush1.msra.mxu0 %v101
    %186 = vmatprep.subr.mxu0 %v106
    %187 = vmatpush1.msra.mxu0 %v105
    %188 = vmatprep.subr.mxu0 %v110
    %189 = vmatpush1.msra.mxu0 %v109
    %190 = vmatprep.subr.mxu0 %v114
    %191 = vmatpush1.msra.mxu0 %v113
    %192 = vmatprep.subr.mxu0 %v118
    %193 = vmatpush1.msra.mxu0 %v117
    %194 = vmatprep.subr.mxu0 %v122
    %195 = vmatpush1.msra.mxu0 %v121
    %196 = vmatprep.subr.mxu0 %v126
    %197 = vmatpush1.msra.mxu0 %v125
    %198 = vmatprep.subr.mxu0 %v130
    %199 = vmatpush1.msra.mxu0 %v129
    %200 = vmatprep.subr.mxu0 %v134
    %201 = vmatpush1.msra.mxu0 %v133
    %202 = vmatprep.subr.mxu0 %v138
    %203 = vmatpush1.msra.mxu0 %v137
    %204 = vmatprep.subr.mxu0 %v142
    %205 = vmatpush1.msra.mxu0 %v141
    %206 = vmatprep.subr.mxu0 %v146
    %207 = vmatpush1.msra.mxu0 %v145
    %208 = vmatprep.subr.mxu0 %v150
    %209 = vmatpush1.msra.mxu0 %v149
    %210 = vmatprep.subr.mxu0 %v154
    %211 = vmatpush1.msra.mxu0 %v153
    %212 = vmatprep.subr.mxu0 0.0
    %213 = vmatpush1.msra.mxu0 0.0
    %214 = vmatprep.subr.mxu0 0.0
    %215 = vmatpush1.msra.mxu0 0.0
    %216 = vmatprep.subr.mxu0 0.0
    %217 = vmatpush1.msra.mxu0 0.0
    %218 = vmatprep.subr.mxu0 0.0
    %219 = vmatpush1.msra.mxu0 0.0
    %220 = vmatprep.subr.mxu0 0.0
    %221 = vmatpush1.msra.mxu0 0.0
    %222 = vmatprep.subr.mxu0 0.0
    %223 = vmatpush1.msra.mxu0 0.0
    %224 = vmatprep.subr.mxu0 0.0
    %225 = vmatpush1.msra.mxu0 0.0
    %226 = vmatprep.subr.mxu0 0.0
    %227 = vmatpush1.msra.mxu0 0.0
    %228 = vmatprep.subr.mxu0 0.0
    %229 = vmatpush1.msra.mxu0 0.0
    %230 = vmatprep.subr.mxu0 0.0
    %231 = vmatpush1.msra.mxu0 0.0
    %232 = vmatprep.subr.mxu0 0.0
    %233 = vmatpush1.msra.mxu0 0.0
    %234 = vmatprep.subr.mxu0 0.0
    %235 = vmatpush1.msra.mxu0 0.0
    %236 = vmatprep.subr.mxu0 0.0
    %237 = vmatpush1.msra.mxu0 0.0
    %238 = vmatprep.subr.mxu0 0.0
    %239 = vmatpush1.msra.mxu0 0.0
    %240 = vmatprep.subr.mxu0 0.0
    %241 = vmatpush1.msra.mxu0 0.0
    %242 = vmatprep.subr.mxu0 0.0
    %243 = vmatpush1.msra.mxu0 0.0
    %244 = vmatprep.mubr.f32.mxu0 0.0
    %245 = vmatmul.mubr.f32.gmra.mrb[0].mxu0 %v158
    %v246 = vpop.f32.mrb[0].mxu0
    %v247 = vadd.f32 %v163, %v246
    %v248 = vpop.f32.mrb[0].mxu0
    %v249 = vadd.f32 %v167, %v248
    %250 = vdwg.mxu0
    %251 = vmatprep.subr.mxu0 %v96
    %252 = vmatpush1.msra.mxu0 %v95
    %253 = vmatprep.subr.mxu0 %v100
    %254 = vmatpush1.msra.mxu0 %v99
    %255 = vmatprep.subr.mxu0 %v104
    %256 = vmatpush1.msra.mxu0 %v103
    %257 = vmatprep.subr.mxu0 %v108
    %258 = vmatpush1.msra.mxu0 %v107
    %259 = vmatprep.subr.mxu0 %v112
    %260 = vmatpush1.msra.mxu0 %v111
    %261 = vmatprep.subr.mxu0 %v116
    %262 = vmatpush1.msra.mxu0 %v115
    %263 = vmatprep.subr.mxu0 %v120
    %264 = vmatpush1.msra.mxu0 %v119
    %265 = vmatprep.subr.mxu0 %v124
    %266 = vmatpush1.msra.mxu0 %v123
    %267 = vmatprep.subr.mxu0 %v128
    %268 = vmatpush1.msra.mxu0 %v127
    %269 = vmatprep.subr.mxu0 %v132
    %270 = vmatpush1.msra.mxu0 %v131
    %271 = vmatprep.subr.mxu0 %v136
    %272 = vmatpush1.msra.mxu0 %v135
    %273 = vmatprep.subr.mxu0 %v140
    %274 = vmatpush1.msra.mxu0 %v139
    %275 = vmatprep.subr.mxu0 %v144
    %276 = vmatpush1.msra.mxu0 %v143
    %277 = vmatprep.subr.mxu0 %v148
    %278 = vmatpush1.msra.mxu0 %v147
    %279 = vmatprep.subr.mxu0 %v152
    %280 = vmatpush1.msra.mxu0 %v151
    %281 = vmatprep.subr.mxu0 %v156
    %282 = vmatpush1.msra.mxu0 %v155
    %283 = vmatprep.subr.mxu0 0.0
    %284 = vmatpush1.msra.mxu0 0.0
    %285 = vmatprep.subr.mxu0 0.0
    %286 = vmatpush1.msra.mxu0 0.0
    %287 = vmatprep.subr.mxu0 0.0
    %288 = vmatpush1.msra.mxu0 0.0
    %289 = vmatprep.subr.mxu0 0.0
    %290 = vmatpush1.msra.mxu0 0.0
    %291 = vmatprep.subr.mxu0 0.0
    %292 = vmatpush1.msra.mxu0 0.0
    %293 = vmatprep.subr.mxu0 0.0
    %294 = vmatpush1.msra.mxu0 0.0
    %295 = vmatprep.subr.mxu0 0.0
    %296 = vmatpush1.msra.mxu0 0.0
    %297 = vmatprep.subr.mxu0 0.0
    %298 = vmatpush1.msra.mxu0 0.0
    %299 = vmatprep.subr.mxu0 0.0
    %300 = vmatpush1.msra.mxu0 0.0
    %301 = vmatprep.subr.mxu0 0.0
    %302 = vmatpush1.msra.mxu0 0.0
    %303 = vmatprep.subr.mxu0 0.0
    %304 = vmatpush1.msra.mxu0 0.0
    %305 = vmatprep.subr.mxu0 0.0
    %306 = vmatpush1.msra.mxu0 0.0
    %307 = vmatprep.subr.mxu0 0.0
    %308 = vmatpush1.msra.mxu0 0.0
    %309 = vmatprep.subr.mxu0 0.0
    %310 = vmatpush1.msra.mxu0 0.0
    %311 = vmatprep.subr.mxu0 0.0
    %312 = vmatpush1.msra.mxu0 0.0
    %313 = vmatprep.subr.mxu0 0.0
    %314 = vmatpush1.msra.mxu0 0.0
    %315 = vmatprep.mubr.f32.mxu0 0.0
    %316 = vmatmul.mubr.f32.gmra.mrb[0].mxu0 %v158
    %v317 = vpop.f32.mrb[0].mxu0
    %v318 = vadd.f32 %v171, %v317
    %v319 = vpop.f32.mrb[0].mxu0
    %v320 = vadd.f32 %v175, %v319
    %321 = vdwg.mxu0
    %322 = vst [vmem:[#allocation2] sm:$0x3f] %v247
    %323 = vst [vmem:[#allocation2 + $0x8] sm:$0x3f] %v249
    %324 = vst [vmem:[#allocation2 + $0x10] sm:$0x3f] %v318
    %325 = vst [vmem:[#allocation2 + $0x18] sm:$0x3f] %v320
    %s326 = scalar_lea.vmem %s0, 8
    %v327 = vld [vmem:[%s326] sm:$0x3f]
    %328 = vmatprep.subr.mxu0 %v94
    %329 = vmatpush1.msra.mxu0 %v93
    %330 = vmatprep.subr.mxu0 %v98
    %331 = vmatpush1.msra.mxu0 %v97
    %332 = vmatprep.subr.mxu0 %v102
    %333 = vmatpush1.msra.mxu0 %v101
    %334 = vmatprep.subr.mxu0 %v106
    %335 = vmatpush1.msra.mxu0 %v105
    %336 = vmatprep.subr.mxu0 %v110
    %337 = vmatpush1.msra.mxu0 %v109
    %338 = vmatprep.subr.mxu0 %v114
    %339 = vmatpush1.msra.mxu0 %v113
    %340 = vmatprep.subr.mxu0 %v118
    %341 = vmatpush1.msra.mxu0 %v117
    %342 = vmatprep.subr.mxu0 %v122
    %343 = vmatpush1.msra.mxu0 %v121
    %344 = vmatprep.subr.mxu0 %v126
    %345 = vmatpush1.msra.mxu0 %v125
    %346 = vmatprep.subr.mxu0 %v130
    %347 = vmatpush1.msra.mxu0 %v129
    %348 = vmatprep.subr.mxu0 %v134
    %349 = vmatpush1.msra.mxu0 %v133
    %350 = vmatprep.subr.mxu0 %v138
    %351 = vmatpush1.msra.mxu0 %v137
    %352 = vmatprep.subr.mxu0 %v142
    %353 = vmatpush1.msra.mxu0 %v141
    %354 = vmatprep.subr.mxu0 %v146
    %355 = vmatpush1.msra.mxu0 %v145
    %356 = vmatprep.subr.mxu0 %v150
    %357 = vmatpush1.msra.mxu0 %v149
    %358 = vmatprep.subr.mxu0 %v154
    %359 = vmatpush1.msra.mxu0 %v153
    %360 = vmatprep.subr.mxu0 0.0
    %361 = vmatpush1.msra.mxu0 0.0
    %362 = vmatprep.subr.mxu0 0.0
    %363 = vmatpush1.msra.mxu0 0.0
    %364 = vmatprep.subr.mxu0 0.0
    %365 = vmatpush1.msra.mxu0 0.0
    %366 = vmatprep.subr.mxu0 0.0
    %367 = vmatpush1.msra.mxu0 0.0
    %368 = vmatprep.subr.mxu0 0.0
    %369 = vmatpush1.msra.mxu0 0.0
    %370 = vmatprep.subr.mxu0 0.0
    %371 = vmatpush1.msra.mxu0 0.0
    %372 = vmatprep.subr.mxu0 0.0
    %373 = vmatpush1.msra.mxu0 0.0
    %374 = vmatprep.subr.mxu0 0.0
    %375 = vmatpush1.msra.mxu0 0.0
    %376 = vmatprep.subr.mxu0 0.0
    %377 = vmatpush1.msra.mxu0 0.0
    %378 = vmatprep.subr.mxu0 0.0
    %379 = vmatpush1.msra.mxu0 0.0
    %380 = vmatprep.subr.mxu0 0.0
    %381 = vmatpush1.msra.mxu0 0.0
    %382 = vmatprep.subr.mxu0 0.0
    %383 = vmatpush1.msra.mxu0 0.0
    %384 = vmatprep.subr.mxu0 0.0
    %385 = vmatpush1.msra.mxu0 0.0
    %386 = vmatprep.subr.mxu0 0.0
    %387 = vmatpush1.msra.mxu0 0.0
    %388 = vmatprep.subr.mxu0 0.0
    %389 = vmatpush1.msra.mxu0 0.0
    %390 = vmatprep.subr.mxu0 0.0
    %391 = vmatpush1.msra.mxu0 0.0
    %392 = vmatprep.mubr.f32.mxu0 0.0
    %393 = vmatmul.mubr.f32.gmra.mrb[0].mxu0 %v327
    %v394 = vpop.f32.mrb[0].mxu0
    %v395 = vadd.f32 %v163, %v394
    %v396 = vpop.f32.mrb[0].mxu0
    %v397 = vadd.f32 %v167, %v396
    %398 = vdwg.mxu0
    %399 = vmatprep.subr.mxu0 %v96
    %400 = vmatpush1.msra.mxu0 %v95
    %401 = vmatprep.subr.mxu0 %v100
    %402 = vmatpush1.msra.mxu0 %v99
    %403 = vmatprep.subr.mxu0 %v104
    %404 = vmatpush1.msra.mxu0 %v103
    %405 = vmatprep.subr.mxu0 %v108
    %406 = vmatpush1.msra.mxu0 %v107
    %407 = vmatprep.subr.mxu0 %v112
    %408 = vmatpush1.msra.mxu0 %v111
    %409 = vmatprep.subr.mxu0 %v116
    %410 = vmatpush1.msra.mxu0 %v115
    %411 = vmatprep.subr.mxu0 %v120
    %412 = vmatpush1.msra.mxu0 %v119
    %413 = vmatprep.subr.mxu0 %v124
    %414 = vmatpush1.msra.mxu0 %v123
    %415 = vmatprep.subr.mxu0 %v128
    %416 = vmatpush1.msra.mxu0 %v127
    %417 = vmatprep.subr.mxu0 %v132
    %418 = vmatpush1.msra.mxu0 %v131
    %419 = vmatprep.subr.mxu0 %v136
    %420 = vmatpush1.msra.mxu0 %v135
    %421 = vmatprep.subr.mxu0 %v140
    %422 = vmatpush1.msra.mxu0 %v139
    %423 = vmatprep.subr.mxu0 %v144
    %424 = vmatpush1.msra.mxu0 %v143
    %425 = vmatprep.subr.mxu0 %v148
    %426 = vmatpush1.msra.mxu0 %v147
    %427 = vmatprep.subr.mxu0 %v152
    %428 = vmatpush1.msra.mxu0 %v151
    %429 = vmatprep.subr.mxu0 %v156
    %430 = vmatpush1.msra.mxu0 %v155
    %431 = vmatprep.subr.mxu0 0.0
    %432 = vmatpush1.msra.mxu0 0.0
    %433 = vmatprep.subr.mxu0 0.0
    %434 = vmatpush1.msra.mxu0 0.0
    %435 = vmatprep.subr.mxu0 0.0
    %436 = vmatpush1.msra.mxu0 0.0
    %437 = vmatprep.subr.mxu0 0.0
    %438 = vmatpush1.msra.mxu0 0.0
    %439 = vmatprep.subr.mxu0 0.0
    %440 = vmatpush1.msra.mxu0 0.0
    %441 = vmatprep.subr.mxu0 0.0
    %442 = vmatpush1.msra.mxu0 0.0
    %443 = vmatprep.subr.mxu0 0.0
    %444 = vmatpush1.msra.mxu0 0.0
    %445 = vmatprep.subr.mxu0 0.0
    %446 = vmatpush1.msra.mxu0 0.0
    %447 = vmatprep.subr.mxu0 0.0
    %448 = vmatpush1.msra.mxu0 0.0
    %449 = vmatprep.subr.mxu0 0.0
    %450 = vmatpush1.msra.mxu0 0.0
    %451 = vmatprep.subr.mxu0 0.0
    %452 = vmatpush1.msra.mxu0 0.0
    %453 = vmatprep.subr.mxu0 0.0
    %454 = vmatpush1.msra.mxu0 0.0
    %455 = vmatprep.subr.mxu0 0.0
    %456 = vmatpush1.msra.mxu0 0.0
    %457 = vmatprep.subr.mxu0 0.0
    %458 = vmatpush1.msra.mxu0 0.0
    %459 = vmatprep.subr.mxu0 0.0
    %460 = vmatpush1.msra.mxu0 0.0
    %461 = vmatprep.subr.mxu0 0.0
    %462 = vmatpush1.msra.mxu0 0.0
    %463 = vmatprep.mubr.f32.mxu0 0.0
    %464 = vmatmul.mubr.f32.gmra.mrb[0].mxu0 %v327
    %v465 = vpop.f32.mrb[0].mxu0
    %v466 = vadd.f32 %v171, %v465
    %v467 = vpop.f32.mrb[0].mxu0
    %v468 = vadd.f32 %v175, %v467
    %469 = vdwg.mxu0
    %s470 = scalar_lea.vmem [#allocation2], 32
    %471 = vst [vmem:[%s470] sm:$0x3f] %v395
    %472 = vst [vmem:[%s470 + $0x8] sm:$0x3f] %v397
    %473 = vst [vmem:[%s470 + $0x10] sm:$0x3f] %v466
    %474 = vst [vmem:[%s470 + $0x18] sm:$0x3f] %v468
    %v475 = vld [vmem:[%s1] sm:$0xff]
    %v476 = vld [vmem:[%s1 + $0x8] sm:$0x3f]
    %v477 = vlaneseq
    %v478 = vand.u32 %v477, 127
    %479 = vset.pattern.permute.xlu0 0
    %480 = vperm.xlu0 %479, %v475
    %v481 = vpop.permute.xlu0 %480
    %482 = vset.pattern.permute.xlu0 0
    %483 = vperm.xlu0 %482, %v476
    %v484 = vpop.permute.xlu0 %483
    %vm485 = vcmp.eq.s32.totalorder %v478, %v481
    %vm486 = vcmp.eq.s32.totalorder %v478, %v484
    %v487 = vsel %vm485, 1, 0
    %v488 = vsel %vm486, 1, 0
    %v489 = vcvt.s32.f32 %v487
    %v490 = vcvt.s32.f32 %v488
    %v491 = vld [vmem:[%s2] sm:$0x7f]
    %vm492 = vcmask 56320
    %v494 = vsel %vm492, %v489, 0
    %v497 = vsel %vm492, %v490, 0
    %vm499 = vcmask 1046528
    %v501 = vsel %vm499, %v491, 0
    %503 = vmatprep.subr.mxu0 0.0
    %504 = vmatpush1.msra.mxu0 %v501
    %505 = vmatprep.subr.mxu0 0.0
    %506 = vmatpush1.msra.mxu0 0.0
    %507 = vmatprep.subr.mxu0 0.0
    %508 = vmatpush1.msra.mxu0 0.0
    %509 = vmatprep.subr.mxu0 0.0
    %510 = vmatpush1.msra.mxu0 0.0
    %511 = vmatprep.subr.mxu0 0.0
    %512 = vmatpush1.msra.mxu0 0.0
    %513 = vmatprep.subr.mxu0 0.0
    %514 = vmatpush1.msra.mxu0 0.0
    %515 = vmatprep.subr.mxu0 0.0
    %516 = vmatpush1.msra.mxu0 0.0
    %517 = vmatprep.subr.mxu0 0.0
    %518 = vmatpush1.msra.mxu0 0.0
    %519 = vmatprep.subr.mxu0 0.0
    %520 = vmatpush1.msra.mxu0 0.0
    %521 = vmatprep.subr.mxu0 0.0
    %522 = vmatpush1.msra.mxu0 0.0
    %523 = vmatprep.subr.mxu0 0.0
    %524 = vmatpush1.msra.mxu0 0.0
    %525 = vmatprep.subr.mxu0 0.0
    %526 = vmatpush1.msra.mxu0 0.0
    %527 = vmatprep.subr.mxu0 0.0
    %528 = vmatpush1.msra.mxu0 0.0
    %529 = vmatprep.subr.mxu0 0.0
    %530 = vmatpush1.msra.mxu0 0.0
    %531 = vmatprep.subr.mxu0 0.0
    %532 = vmatpush1.msra.mxu0 0.0
    %533 = vmatprep.subr.mxu0 0.0
    %534 = vmatpush1.msra.mxu0 0.0
    %535 = vmatprep.subr.mxu0 0.0
    %536 = vmatpush1.msra.mxu0 0.0
    %537 = vmatprep.subr.mxu0 0.0
    %538 = vmatpush1.msra.mxu0 0.0
    %539 = vmatprep.subr.mxu0 0.0
    %540 = vmatpush1.msra.mxu0 0.0
    %541 = vmatprep.subr.mxu0 0.0
    %542 = vmatpush1.msra.mxu0 0.0
    %543 = vmatprep.subr.mxu0 0.0
    %544 = vmatpush1.msra.mxu0 0.0
    %545 = vmatprep.subr.mxu0 0.0
    %546 = vmatpush1.msra.mxu0 0.0
    %547 = vmatprep.subr.mxu0 0.0
    %548 = vmatpush1.msra.mxu0 0.0
    %549 = vmatprep.subr.mxu0 0.0
    %550 = vmatpush1.msra.mxu0 0.0
    %551 = vmatprep.subr.mxu0 0.0
    %552 = vmatpush1.msra.mxu0 0.0
    %553 = vmatprep.subr.mxu0 0.0
    %554 = vmatpush1.msra.mxu0 0.0
    %555 = vmatprep.subr.mxu0 0.0
    %556 = vmatpush1.msra.mxu0 0.0
    %557 = vmatprep.subr.mxu0 0.0
    %558 = vmatpush1.msra.mxu0 0.0
    %559 = vmatprep.subr.mxu0 0.0
    %560 = vmatpush1.msra.mxu0 0.0
    %561 = vmatprep.subr.mxu0 0.0
    %562 = vmatpush1.msra.mxu0 0.0
    %563 = vmatprep.subr.mxu0 0.0
    %564 = vmatpush1.msra.mxu0 0.0
    %565 = vmatprep.subr.mxu0 0.0
    %566 = vmatpush1.msra.mxu0 0.0
    %567 = vmatprep.mubr.f32.mxu0 0.0
    %568 = vmatmul.mubr.f32.gmra.mrb[0].mxu0 %v494
    %v569 = vpop.f32.mrb[0].mxu0
    %v570 = vadd.f32 0.0, %v569
    %v571 = vpop.f32.mrb[0].mxu0
    %572 = vmatprep.mubr.f32.mxu0 0.0
    %573 = vmatmul.mubr.f32.gmra.mrb[0].mxu0 %v497
    %v574 = vpop.f32.mrb[0].mxu0
    %v575 = vadd.f32 0.0, %v574
    %v576 = vpop.f32.mrb[0].mxu0
    %577 = vdwg.mxu0
    %v578 = vmax.f32 %v570, 0.0
    %v579 = vmax.f32 %v575, 0.0
    %v580 = vld [vmem:[#allocation9] sm:$0xff]
    %v581 = vld [vmem:[#allocation9 + $0x8] sm:$0xff]
    %v582 = vld [vmem:[#allocation9 + $0x10] sm:$0xff]
    %v583 = vld [vmem:[#allocation9 + $0x18] sm:$0xff]
    %v584 = vld [vmem:[#allocation9 + $0x20] sm:$0xff]
    %v585 = vld [vmem:[#allocation9 + $0x28] sm:$0xff]
    %v586 = vld [vmem:[#allocation9 + $0x30] sm:$0xff]
    %v587 = vld [vmem:[#allocation9 + $0x38] sm:$0xff]
    %v588 = vld [vmem:[#allocation9 + $0x40] sm:$0xff]
    %v589 = vld [vmem:[#allocation9 + $0x48] sm:$0xff]
    %v590 = vld [vmem:[#allocation9 + $0x50] sm:$0xff]
    %v591 = vld [vmem:[#allocation9 + $0x58] sm:$0xff]
    %v592 = vld [vmem:[#allocation9 + $0x60] sm:$0xff]
    %v593 = vld [vmem:[#allocation9 + $0x68] sm:$0xff]
    %v594 = vld [vmem:[#allocation9 + $0x70] sm:$0xff]
    %v595 = vld [vmem:[#allocation9 + $0x78] sm:$0xff]
    %v596 = vld [vmem:[#allocation9 + $0x80] sm:$0xff]
    %v597 = vld [vmem:[#allocation9 + $0x88] sm:$0xff]
    %v598 = vld [vmem:[#allocation9 + $0x90] sm:$0xff]
    %v599 = vld [vmem:[#allocation9 + $0x98] sm:$0xff]
    %v600 = vld [vmem:[#allocation9 + $0xa0] sm:$0xff]
    %v601 = vld [vmem:[#allocation9 + $0xa8] sm:$0xff]
    %v602 = vld [vmem:[#allocation9 + $0xb0] sm:$0xff]
    %v603 = vld [vmem:[#allocation9 + $0xb8] sm:$0xff]
    %v604 = vld [vmem:[#allocation9 + $0xc0] sm:$0xff]
    %v605 = vld [vmem:[#allocation9 + $0xc8] sm:$0xff]
    %v606 = vld [vmem:[#allocation9 + $0xd0] sm:$0xff]
    %v607 = vld [vmem:[#allocation9 + $0xd8] sm:$0xff]
    %v608 = vld [vmem:[#allocation9 + $0xe0] sm:$0xff]
    %v609 = vld [vmem:[#allocation9 + $0xe8] sm:$0xff]
    %v610 = vld [vmem:[#allocation9 + $0xf0] sm:$0xff]
    %v611 = vld [vmem:[#allocation9 + $0xf8] sm:$0xff]
    %v612 = vld [vmem:[#allocation9 + $0x100] sm:$0xff]
    %v613 = vld [vmem:[#allocation9 + $0x108] sm:$0xff]
    %v614 = vld [vmem:[#allocation9 + $0x110] sm:$0xff]
    %v615 = vld [vmem:[#allocation9 + $0x118] sm:$0xff]
    %v616 = vld [vmem:[#allocation9 + $0x120] sm:$0xff]
    %v617 = vld [vmem:[#allocation9 + $0x128] sm:$0xff]
    %v618 = vld [vmem:[#allocation9 + $0x130] sm:$0xff]
    %v619 = vld [vmem:[#allocation9 + $0x138] sm:$0xff]
    %v620 = vld [vmem:[#allocation9 + $0x140] sm:$0xff]
    %v621 = vld [vmem:[#allocation9 + $0x148] sm:$0xff]
    %v622 = vld [vmem:[#allocation9 + $0x150] sm:$0xff]
    %v623 = vld [vmem:[#allocation9 + $0x158] sm:$0xff]
    %v624 = vld [vmem:[#allocation9 + $0x160] sm:$0xff]
    %v625 = vld [vmem:[#allocation9 + $0x168] sm:$0xff]
    %v626 = vld [vmem:[#allocation9 + $0x170] sm:$0xff]
    %v627 = vld [vmem:[#allocation9 + $0x178] sm:$0xff]
    %v628 = vld [vmem:[#allocation9 + $0x180] sm:$0xff]
    %v629 = vld [vmem:[#allocation9 + $0x188] sm:$0xff]
    %v630 = vld [vmem:[#allocation9 + $0x190] sm:$0xff]
    %v631 = vld [vmem:[#allocation9 + $0x198] sm:$0xff]
    %v632 = vld [vmem:[#allocation9 + $0x1a0] sm:$0xff]
    %v633 = vld [vmem:[#allocation9 + $0x1a8] sm:$0xff]
    %v634 = vld [vmem:[#allocation9 + $0x1b0] sm:$0xff]
    %v635 = vld [vmem:[#allocation9 + $0x1b8] sm:$0xff]
    %v636 = vld [vmem:[#allocation9 + $0x1c0] sm:$0xff]
    %v637 = vld [vmem:[#allocation9 + $0x1c8] sm:$0xff]
    %v638 = vld [vmem:[#allocation9 + $0x1d0] sm:$0xff]
    %v639 = vld [vmem:[#allocation9 + $0x1d8] sm:$0xff]
    %v640 = vld [vmem:[#allocation9 + $0x1e0] sm:$0xff]
    %v641 = vld [vmem:[#allocation9 + $0x1e8] sm:$0xff]
    %v642 = vld [vmem:[#allocation9 + $0x1f0] sm:$0xff]
    %v643 = vld [vmem:[#allocation9 + $0x1f8] sm:$0xff]
    %v644 = vld [vmem:[%s8] sm:$0xf]
    %v646 = vlaneseq
    %v647 = vshrl.u32 %v646, 7
    %v648 = vsub.s32 0, %v647
    %v649 = vrot.slane %v644, %v648
    %v650 = vlaneseq
    %v651 = vshrl.u32 %v650, 7
    %v652 = vsub.s32 1, %v651
    %v653 = vrot.slane %v644, %v652
    %v654 = vlaneseq
    %v655 = vshrl.u32 %v654, 7
    %v656 = vsub.s32 2, %v655
    %v657 = vrot.slane %v644, %v656
    %v658 = vlaneseq
    %v659 = vshrl.u32 %v658, 7
    %v660 = vsub.s32 3, %v659
    %v661 = vrot.slane %v644, %v660
    %666 = vmatprep.subr.mxu0 %v581
    %667 = vmatpush1.msra.mxu0 %v580
    %668 = vmatprep.subr.mxu0 %v585
    %669 = vmatpush1.msra.mxu0 %v584
    %670 = vmatprep.subr.mxu0 %v589
    %671 = vmatpush1.msra.mxu0 %v588
    %672 = vmatprep.subr.mxu0 %v593
    %673 = vmatpush1.msra.mxu0 %v592
    %674 = vmatprep.subr.mxu0 %v597
    %675 = vmatpush1.msra.mxu0 %v596
    %676 = vmatprep.subr.mxu0 %v601
    %677 = vmatpush1.msra.mxu0 %v600
    %678 = vmatprep.subr.mxu0 %v605
    %679 = vmatpush1.msra.mxu0 %v604
    %680 = vmatprep.subr.mxu0 %v609
    %681 = vmatpush1.msra.mxu0 %v608
    %682 = vmatprep.subr.mxu0 %v613
    %683 = vmatpush1.msra.mxu0 %v612
    %684 = vmatprep.subr.mxu0 %v617
    %685 = vmatpush1.msra.mxu0 %v616
    %686 = vmatprep.subr.mxu0 %v621
    %687 = vmatpush1.msra.mxu0 %v620
    %688 = vmatprep.subr.mxu0 %v625
    %689 = vmatpush1.msra.mxu0 %v624
    %690 = vmatprep.subr.mxu0 %v629
    %691 = vmatpush1.msra.mxu0 %v628
    %692 = vmatprep.subr.mxu0 %v633
    %693 = vmatpush1.msra.mxu0 %v632
    %694 = vmatprep.subr.mxu0 %v637
    %695 = vmatpush1.msra.mxu0 %v636
    %696 = vmatprep.subr.mxu0 %v641
    %697 = vmatpush1.msra.mxu0 %v640
    %698 = vmatprep.subr.mxu0 0.0
    %699 = vmatpush1.msra.mxu0 0.0
    %700 = vmatprep.subr.mxu0 0.0
    %701 = vmatpush1.msra.mxu0 0.0
    %702 = vmatprep.subr.mxu0 0.0
    %703 = vmatpush1.msra.mxu0 0.0
    %704 = vmatprep.subr.mxu0 0.0
    %705 = vmatpush1.msra.mxu0 0.0
    %706 = vmatprep.subr.mxu0 0.0
    %707 = vmatpush1.msra.mxu0 0.0
    %708 = vmatprep.subr.mxu0 0.0
    %709 = vmatpush1.msra.mxu0 0.0
    %710 = vmatprep.subr.mxu0 0.0
    %711 = vmatpush1.msra.mxu0 0.0
    %712 = vmatprep.subr.mxu0 0.0
    %713 = vmatpush1.msra.mxu0 0.0
    %714 = vmatprep.subr.mxu0 0.0
    %715 = vmatpush1.msra.mxu0 0.0
    %716 = vmatprep.subr.mxu0 0.0
    %717 = vmatpush1.msra.mxu0 0.0
    %718 = vmatprep.subr.mxu0 0.0
    %719 = vmatpush1.msra.mxu0 0.0
    %720 = vmatprep.subr.mxu0 0.0
    %721 = vmatpush1.msra.mxu0 0.0
    %722 = vmatprep.subr.mxu0 0.0
    %723 = vmatpush1.msra.mxu0 0.0
    %724 = vmatprep.subr.mxu0 0.0
    %725 = vmatpush1.msra.mxu0 0.0
    %726 = vmatprep.subr.mxu0 0.0
    %727 = vmatpush1.msra.mxu0 0.0
    %728 = vmatprep.subr.mxu0 0.0
    %729 = vmatpush1.msra.mxu0 0.0
    %730 = vmatprep.mubr.f32.mxu0 0.0
    %731 = vmatmul.mubr.f32.gmra.mrb[0].mxu0 %v578
    %v732 = vpop.f32.mrb[0].mxu0
    %v733 = vadd.f32 %v649, %v732
    %v734 = vpop.f32.mrb[0].mxu0
    %v735 = vadd.f32 %v653, %v734
    %736 = vmatprep.mubr.f32.mxu0 0.0
    %737 = vmatmul.mubr.f32.gmra.mrb[0].mxu0 %v579
    %v738 = vpop.f32.mrb[0].mxu0
    %v739 = vadd.f32 %v649, %v738
    %v740 = vpop.f32.mrb[0].mxu0
    %v741 = vadd.f32 %v653, %v740
    %742 = vdwg.mxu0
    %743 = vmatprep.subr.mxu0 %v583
    %744 = vmatpush1.msra.mxu0 %v582
    %745 = vmatprep.subr.mxu0 %v587
    %746 = vmatpush1.msra.mxu0 %v586
    %747 = vmatprep.subr.mxu0 %v591
    %748 = vmatpush1.msra.mxu0 %v590
    %749 = vmatprep.subr.mxu0 %v595
    %750 = vmatpush1.msra.mxu0 %v594
    %751 = vmatprep.subr.mxu0 %v599
    %752 = vmatpush1.msra.mxu0 %v598
    %753 = vmatprep.subr.mxu0 %v603
    %754 = vmatpush1.msra.mxu0 %v602
    %755 = vmatprep.subr.mxu0 %v607
    %756 = vmatpush1.msra.mxu0 %v606
    %757 = vmatprep.subr.mxu0 %v611
    %758 = vmatpush1.msra.mxu0 %v610
    %759 = vmatprep.subr.mxu0 %v615
    %760 = vmatpush1.msra.mxu0 %v614
    %761 = vmatprep.subr.mxu0 %v619
    %762 = vmatpush1.msra.mxu0 %v618
    %763 = vmatprep.subr.mxu0 %v623
    %764 = vmatpush1.msra.mxu0 %v622
    %765 = vmatprep.subr.mxu0 %v627
    %766 = vmatpush1.msra.mxu0 %v626
    %767 = vmatprep.subr.mxu0 %v631
    %768 = vmatpush1.msra.mxu0 %v630
    %769 = vmatprep.subr.mxu0 %v635
    %770 = vmatpush1.msra.mxu0 %v634
    %771 = vmatprep.subr.mxu0 %v639
    %772 = vmatpush1.msra.mxu0 %v638
    %773 = vmatprep.subr.mxu0 %v643
    %774 = vmatpush1.msra.mxu0 %v642
    %775 = vmatprep.subr.mxu0 0.0
    %776 = vmatpush1.msra.mxu0 0.0
    %777 = vmatprep.subr.mxu0 0.0
    %778 = vmatpush1.msra.mxu0 0.0
    %779 = vmatprep.subr.mxu0 0.0
    %780 = vmatpush1.msra.mxu0 0.0
    %781 = vmatprep.subr.mxu0 0.0
    %782 = vmatpush1.msra.mxu0 0.0
    %783 = vmatprep.subr.mxu0 0.0
    %784 = vmatpush1.msra.mxu0 0.0
    %785 = vmatprep.subr.mxu0 0.0
    %786 = vmatpush1.msra.mxu0 0.0
    %787 = vmatprep.subr.mxu0 0.0
    %788 = vmatpush1.msra.mxu0 0.0
    %789 = vmatprep.subr.mxu0 0.0
    %790 = vmatpush1.msra.mxu0 0.0
    %791 = vmatprep.subr.mxu0 0.0
    %792 = vmatpush1.msra.mxu0 0.0
    %793 = vmatprep.subr.mxu0 0.0
    %794 = vmatpush1.msra.mxu0 0.0
    %795 = vmatprep.subr.mxu0 0.0
    %796 = vmatpush1.msra.mxu0 0.0
    %797 = vmatprep.subr.mxu0 0.0
    %798 = vmatpush1.msra.mxu0 0.0
    %799 = vmatprep.subr.mxu0 0.0
    %800 = vmatpush1.msra.mxu0 0.0
    %801 = vmatprep.subr.mxu0 0.0
    %802 = vmatpush1.msra.mxu0 0.0
    %803 = vmatprep.subr.mxu0 0.0
    %804 = vmatpush1.msra.mxu0 0.0
    %805 = vmatprep.subr.mxu0 0.0
    %806 = vmatpush1.msra.mxu0 0.0
    %807 = vmatprep.mubr.f32.mxu0 0.0
    %808 = vmatmul.mubr.f32.gmra.mrb[0].mxu0 %v578
    %v809 = vpop.f32.mrb[0].mxu0
    %v810 = vadd.f32 %v657, %v809
    %v811 = vpop.f32.mrb[0].mxu0
    %v812 = vadd.f32 %v661, %v811
    %813 = vmatprep.mubr.f32.mxu0 0.0
    %814 = vmatmul.mubr.f32.gmra.mrb[0].mxu0 %v579
    %v815 = vpop.f32.mrb[0].mxu0
    %v816 = vadd.f32 %v657, %v815
    %v817 = vpop.f32.mrb[0].mxu0
    %v818 = vadd.f32 %v661, %v817
    %819 = vdwg.mxu0
    %820 = vst [vmem:[#allocation3] sm:$0x7f] %v733
    %821 = vst [vmem:[#allocation3 + $0x8] sm:$0x7f] %v735
    %822 = vst [vmem:[#allocation3 + $0x10] sm:$0x7f] %v810
    %823 = vst [vmem:[#allocation3 + $0x18] sm:$0x7f] %v812
    %vm832 = vcmask 1040384
    %v833 = vrot.slane %v733, 7
    %v834 = vrot.slane %v739, 7
    %v835 = vsel %vm832, %v833, %v834
    %v836 = vrot.slane %v735, 7
    %v837 = vrot.slane %v741, 7
    %v838 = vsel %vm832, %v836, %v837
    %v839 = vrot.slane %v810, 7
    %v840 = vrot.slane %v816, 7
    %v841 = vsel %vm832, %v839, %v840
    %v842 = vrot.slane %v812, 7
    %v843 = vrot.slane %v818, 7
    %v844 = vsel %vm832, %v842, %v843
    %s849 = scalar_lea.vmem [#allocation3], 32
    %850 = vst [vmem:[%s849] sm:$0x7f] %v835
    %851 = vst [vmem:[%s849 + $0x8] sm:$0x7f] %v838
    %852 = vst [vmem:[%s849 + $0x10] sm:$0x7f] %v841
    %853 = vst [vmem:[%s849 + $0x18] sm:$0x7f] %v844
    %v854 = vld [vmem:[#allocation7] sm:$0xff]
    %v855 = vld [vmem:[#allocation7 + $0x8] sm:$0xff]
    %v856 = vld [vmem:[#allocation7 + $0x10] sm:$0xff]
    %v857 = vld [vmem:[#allocation7 + $0x18] sm:$0xff]
    %v858 = vld [vmem:[#allocation7 + $0x20] sm:$0xff]
    %v859 = vld [vmem:[#allocation7 + $0x28] sm:$0xff]
    %v860 = vld [vmem:[#allocation7 + $0x30] sm:$0xff]
    %v861 = vld [vmem:[#allocation7 + $0x38] sm:$0xff]
    %v862 = vld [vmem:[#allocation7 + $0x40] sm:$0xff]
    %v863 = vld [vmem:[#allocation7 + $0x48] sm:$0xff]
    %v864 = vld [vmem:[#allocation7 + $0x50] sm:$0xff]
    %v865 = vld [vmem:[#allocation7 + $0x58] sm:$0xff]
    %v866 = vld [vmem:[#allocation7 + $0x60] sm:$0xff]
    %v867 = vld [vmem:[#allocation7 + $0x68] sm:$0xff]
    %v868 = vld [vmem:[#allocation7 + $0x70] sm:$0xff]
    %v869 = vld [vmem:[#allocation7 + $0x78] sm:$0xff]
    %v870 = vld [vmem:[#allocation7 + $0x80] sm:$0xff]
    %v871 = vld [vmem:[#allocation7 + $0x88] sm:$0xff]
    %v872 = vld [vmem:[#allocation7 + $0x90] sm:$0xff]
    %v873 = vld [vmem:[#allocation7 + $0x98] sm:$0xff]
    %v874 = vld [vmem:[#allocation7 + $0xa0] sm:$0xff]
    %v875 = vld [vmem:[#allocation7 + $0xa8] sm:$0xff]
    %v876 = vld [vmem:[#allocation7 + $0xb0] sm:$0xff]
    %v877 = vld [vmem:[#allocation7 + $0xb8] sm:$0xff]
    %v878 = vld [vmem:[#allocation7 + $0xc0] sm:$0xff]
    %v879 = vld [vmem:[#allocation7 + $0xc8] sm:$0xff]
    %v880 = vld [vmem:[#allocation7 + $0xd0] sm:$0xff]
    %v881 = vld [vmem:[#allocation7 + $0xd8] sm:$0xff]
    %v882 = vld [vmem:[#allocation7 + $0xe0] sm:$0xff]
    %v883 = vld [vmem:[#allocation7 + $0xe8] sm:$0xff]
    %v884 = vld [vmem:[#allocation7 + $0xf0] sm:$0xff]
    %v885 = vld [vmem:[#allocation7 + $0xf8] sm:$0xff]
    %v886 = vld [vmem:[#allocation7 + $0x100] sm:$0xff]
    %v887 = vld [vmem:[#allocation7 + $0x108] sm:$0xff]
    %v888 = vld [vmem:[#allocation7 + $0x110] sm:$0xff]
    %v889 = vld [vmem:[#allocation7 + $0x118] sm:$0xff]
    %v890 = vld [vmem:[#allocation7 + $0x120] sm:$0xff]
    %v891 = vld [vmem:[#allocation7 + $0x128] sm:$0xff]
    %v892 = vld [vmem:[#allocation7 + $0x130] sm:$0xff]
    %v893 = vld [vmem:[#allocation7 + $0x138] sm:$0xff]
    %v894 = vld [vmem:[#allocation7 + $0x140] sm:$0xff]
    %v895 = vld [vmem:[#allocation7 + $0x148] sm:$0xff]
    %v896 = vld [vmem:[#allocation7 + $0x150] sm:$0xff]
    %v897 = vld [vmem:[#allocation7 + $0x158] sm:$0xff]
    %v898 = vld [vmem:[#allocation7 + $0x160] sm:$0xff]
    %v899 = vld [vmem:[#allocation7 + $0x168] sm:$0xff]
    %v900 = vld [vmem:[#allocation7 + $0x170] sm:$0xff]
    %v901 = vld [vmem:[#allocation7 + $0x178] sm:$0xff]
    %v902 = vld [vmem:[#allocation7 + $0x180] sm:$0xff]
    %v903 = vld [vmem:[#allocation7 + $0x188] sm:$0xff]
    %v904 = vld [vmem:[#allocation7 + $0x190] sm:$0xff]
    %v905 = vld [vmem:[#allocation7 + $0x198] sm:$0xff]
    %v906 = vld [vmem:[#allocation7 + $0x1a0] sm:$0xff]
    %v907 = vld [vmem:[#allocation7 + $0x1a8] sm:$0xff]
    %v908 = vld [vmem:[#allocation7 + $0x1b0] sm:$0xff]
    %v909 = vld [vmem:[#allocation7 + $0x1b8] sm:$0xff]
    %v910 = vld [vmem:[#allocation7 + $0x1c0] sm:$0xff]
    %v911 = vld [vmem:[#allocation7 + $0x1c8] sm:$0xff]
    %v912 = vld [vmem:[#allocation7 + $0x1d0] sm:$0xff]
    %v913 = vld [vmem:[#allocation7 + $0x1d8] sm:$0xff]
    %v914 = vld [vmem:[#allocation7 + $0x1e0] sm:$0xff]
    %v915 = vld [vmem:[#allocation7 + $0x1e8] sm:$0xff]
    %v916 = vld [vmem:[#allocation7 + $0x1f0] sm:$0xff]
    %v917 = vld [vmem:[#allocation7 + $0x1f8] sm:$0xff]
    %v918 = vld [vmem:[#allocation10] sm:$0xff]
    %v919 = vld [vmem:[#allocation10 + $0x8] sm:$0xff]
    %v920 = vld [vmem:[#allocation10 + $0x10] sm:$0xff]
    %v921 = vld [vmem:[#allocation10 + $0x18] sm:$0xff]
    %v922 = vld [vmem:[#allocation10 + $0x20] sm:$0xff]
    %v923 = vld [vmem:[#allocation10 + $0x28] sm:$0xff]
    %v924 = vld [vmem:[#allocation10 + $0x30] sm:$0xff]
    %v925 = vld [vmem:[#allocation10 + $0x38] sm:$0xff]
    %v926 = vld [vmem:[#allocation10 + $0x40] sm:$0xff]
    %v927 = vld [vmem:[#allocation10 + $0x48] sm:$0xff]
    %v928 = vld [vmem:[#allocation10 + $0x50] sm:$0xff]
    %v929 = vld [vmem:[#allocation10 + $0x58] sm:$0xff]
    %v930 = vld [vmem:[#allocation10 + $0x60] sm:$0xff]
    %v931 = vld [vmem:[#allocation10 + $0x68] sm:$0xff]
    %v932 = vld [vmem:[#allocation10 + $0x70] sm:$0xff]
    %v933 = vld [vmem:[#allocation10 + $0x78] sm:$0xff]
    %v934 = vld [vmem:[#allocation10 + $0x80] sm:$0xff]
    %v935 = vld [vmem:[#allocation10 + $0x88] sm:$0xff]
    %v936 = vld [vmem:[#allocation10 + $0x90] sm:$0xff]
    %v937 = vld [vmem:[#allocation10 + $0x98] sm:$0xff]
    %v938 = vld [vmem:[#allocation10 + $0xa0] sm:$0xff]
    %v939 = vld [vmem:[#allocation10 + $0xa8] sm:$0xff]
    %v940 = vld [vmem:[#allocation10 + $0xb0] sm:$0xff]
    %v941 = vld [vmem:[#allocation10 + $0xb8] sm:$0xff]
    %v942 = vld [vmem:[#allocation10 + $0xc0] sm:$0xff]
    %v943 = vld [vmem:[#allocation10 + $0xc8] sm:$0xff]
    %v944 = vld [vmem:[#allocation10 + $0xd0] sm:$0xff]
    %v945 = vld [vmem:[#allocation10 + $0xd8] sm:$0xff]
    %v946 = vld [vmem:[#allocation10 + $0xe0] sm:$0xff]
    %v947 = vld [vmem:[#allocation10 + $0xe8] sm:$0xff]
    %v948 = vld [vmem:[#allocation10 + $0xf0] sm:$0xff]
    %v949 = vld [vmem:[#allocation10 + $0xf8] sm:$0xff]
    %v950 = vld [vmem:[#allocation10 + $0x100] sm:$0xff]
    %v951 = vld [vmem:[#allocation10 + $0x108] sm:$0xff]
    %v952 = vld [vmem:[#allocation10 + $0x110] sm:$0xff]
    %v953 = vld [vmem:[#allocation10 + $0x118] sm:$0xff]
    %v954 = vld [vmem:[#allocation10 + $0x120] sm:$0xff]
    %v955 = vld [vmem:[#allocation10 + $0x128] sm:$0xff]
    %v956 = vld [vmem:[#allocation10 + $0x130] sm:$0xff]
    %v957 = vld [vmem:[#allocation10 + $0x138] sm:$0xff]
    %v958 = vld [vmem:[#allocation10 + $0x140] sm:$0xff]
    %v959 = vld [vmem:[#allocation10 + $0x148] sm:$0xff]
    %v960 = vld [vmem:[#allocation10 + $0x150] sm:$0xff]
    %v961 = vld [vmem:[#allocation10 + $0x158] sm:$0xff]
    %v962 = vld [vmem:[#allocation10 + $0x160] sm:$0xff]
    %v963 = vld [vmem:[#allocation10 + $0x168] sm:$0xff]
    %v964 = vld [vmem:[#allocation10 + $0x170] sm:$0xff]
    %v965 = vld [vmem:[#allocation10 + $0x178] sm:$0xff]
    %v966 = vld [vmem:[#allocation10 + $0x180] sm:$0xff]
    %v967 = vld [vmem:[#allocation10 + $0x188] sm:$0xff]
    %v968 = vld [vmem:[#allocation10 + $0x190] sm:$0xff]
    %v969 = vld [vmem:[#allocation10 + $0x198] sm:$0xff]
    %v970 = vld [vmem:[#allocation10 + $0x1a0] sm:$0xff]
    %v971 = vld [vmem:[#allocation10 + $0x1a8] sm:$0xff]
    %v972 = vld [vmem:[#allocation10 + $0x1b0] sm:$0xff]
    %v973 = vld [vmem:[#allocation10 + $0x1b8] sm:$0xff]
    %v974 = vld [vmem:[#allocation10 + $0x1c0] sm:$0xff]
    %v975 = vld [vmem:[#allocation10 + $0x1c8] sm:$0xff]
    %v976 = vld [vmem:[#allocation10 + $0x1d0] sm:$0xff]
    %v977 = vld [vmem:[#allocation10 + $0x1d8] sm:$0xff]
    %v978 = vld [vmem:[#allocation10 + $0x1e0] sm:$0xff]
    %v979 = vld [vmem:[#allocation10 + $0x1e8] sm:$0xff]
    %v980 = vld [vmem:[#allocation10 + $0x1f0] sm:$0xff]
    %v981 = vld [vmem:[#allocation10 + $0x1f8] sm:$0xff]
    %v982 = vld [vmem:[#allocation2] ss:$8 sm:$0xf]
    %s983 = scalar_lea.vmem [#allocation2], 32
    %v984 = vld [vmem:[%s983] ss:$8 sm:$0xf]
    %985 = vmatprep.subr.mxu0 %v855
    %986 = vmatpush1.msra.mxu0 %v854
    %987 = vmatprep.subr.mxu0 %v859
    %988 = vmatpush1.msra.mxu0 %v858
    %989 = vmatprep.subr.mxu0 %v863
    %990 = vmatpush1.msra.mxu0 %v862
    %991 = vmatprep.subr.mxu0 %v867
    %992 = vmatpush1.msra.mxu0 %v866
    %993 = vmatprep.subr.mxu0 %v871
    %994 = vmatpush1.msra.mxu0 %v870
    %995 = vmatprep.subr.mxu0 %v875
    %996 = vmatpush1.msra.mxu0 %v874
    %997 = vmatprep.subr.mxu0 %v879
    %998 = vmatpush1.msra.mxu0 %v878
    %999 = vmatprep.subr.mxu0 %v883
    %1000 = vmatpush1.msra.mxu0 %v882
    %1001 = vmatprep.subr.mxu0 %v887
    %1002 = vmatpush1.msra.mxu0 %v886
    %1003 = vmatprep.subr.mxu0 %v891
    %1004 = vmatpush1.msra.mxu0 %v890
    %1005 = vmatprep.subr.mxu0 %v895
    %1006 = vmatpush1.msra.mxu0 %v894
    %1007 = vmatprep.subr.mxu0 %v899
    %1008 = vmatpush1.msra.mxu0 %v898
    %1009 = vmatprep.subr.mxu0 %v903
    %1010 = vmatpush1.msra.mxu0 %v902
    %1011 = vmatprep.subr.mxu0 %v907
    %1012 = vmatpush1.msra.mxu0 %v906
    %1013 = vmatprep.subr.mxu0 %v911
    %1014 = vmatpush1.msra.mxu0 %v910
    %1015 = vmatprep.subr.mxu0 %v915
    %1016 = vmatpush1.msra.mxu0 %v914
    %1017 = vmatprep.subr.mxu0 0.0
    %1018 = vmatpush1.msra.mxu0 0.0
    %1019 = vmatprep.subr.mxu0 0.0
    %1020 = vmatpush1.msra.mxu0 0.0
    %1021 = vmatprep.subr.mxu0 0.0
    %1022 = vmatpush1.msra.mxu0 0.0
    %1023 = vmatprep.subr.mxu0 0.0
    %1024 = vmatpush1.msra.mxu0 0.0
    %1025 = vmatprep.subr.mxu0 0.0
    %1026 = vmatpush1.msra.mxu0 0.0
    %1027 = vmatprep.subr.mxu0 0.0
    %1028 = vmatpush1.msra.mxu0 0.0
    %1029 = vmatprep.subr.mxu0 0.0
    %1030 = vmatpush1.msra.mxu0 0.0
    %1031 = vmatprep.subr.mxu0 0.0
    %1032 = vmatpush1.msra.mxu0 0.0
    %1033 = vmatprep.subr.mxu0 0.0
    %1034 = vmatpush1.msra.mxu0 0.0
    %1035 = vmatprep.subr.mxu0 0.0
    %1036 = vmatpush1.msra.mxu0 0.0
    %1037 = vmatprep.subr.mxu0 0.0
    %1038 = vmatpush1.msra.mxu0 0.0
    %1039 = vmatprep.subr.mxu0 0.0
    %1040 = vmatpush1.msra.mxu0 0.0
    %1041 = vmatprep.subr.mxu0 0.0
    %1042 = vmatpush1.msra.mxu0 0.0
    %1043 = vmatprep.subr.mxu0 0.0
    %1044 = vmatpush1.msra.mxu0 0.0
    %1045 = vmatprep.subr.mxu0 0.0
    %1046 = vmatpush1.msra.mxu0 0.0
    %1047 = vmatprep.subr.mxu0 0.0
    %1048 = vmatpush1.msra.mxu0 0.0
    %1049 = vmatprep.mubr.f32.mxu0 0.0
    %1050 = vmatmul.mubr.f32.gmra.mrb[0].mxu0 0.0
    %v1051 = vpop.f32.mrb[0].mxu0
    %v1052 = vadd.f32 0.0, %v1051
    %v1053 = vpop.f32.mrb[0].mxu0
    %v1054 = vadd.f32 0.0, %v1053
    %1055 = vdwg.mxu0
    %1056 = vmatprep.subr.mxu0 %v857
    %1057 = vmatpush1.msra.mxu0 %v856
    %1058 = vmatprep.subr.mxu0 %v861
    %1059 = vmatpush1.msra.mxu0 %v860
    %1060 = vmatprep.subr.mxu0 %v865
    %1061 = vmatpush1.msra.mxu0 %v864
    %1062 = vmatprep.subr.mxu0 %v869
    %1063 = vmatpush1.msra.mxu0 %v868
    %1064 = vmatprep.subr.mxu0 %v873
    %1065 = vmatpush1.msra.mxu0 %v872
    %1066 = vmatprep.subr.mxu0 %v877
    %1067 = vmatpush1.msra.mxu0 %v876
    %1068 = vmatprep.subr.mxu0 %v881
    %1069 = vmatpush1.msra.mxu0 %v880
    %1070 = vmatprep.subr.mxu0 %v885
    %1071 = vmatpush1.msra.mxu0 %v884
    %1072 = vmatprep.subr.mxu0 %v889
    %1073 = vmatpush1.msra.mxu0 %v888
    %1074 = vmatprep.subr.mxu0 %v893
    %1075 = vmatpush1.msra.mxu0 %v892
    %1076 = vmatprep.subr.mxu0 %v897
    %1077 = vmatpush1.msra.mxu0 %v896
    %1078 = vmatprep.subr.mxu0 %v901
    %1079 = vmatpush1.msra.mxu0 %v900
    %1080 = vmatprep.subr.mxu0 %v905
    %1081 = vmatpush1.msra.mxu0 %v904
    %1082 = vmatprep.subr.mxu0 %v909
    %1083 = vmatpush1.msra.mxu0 %v908
    %1084 = vmatprep.subr.mxu0 %v913
    %1085 = vmatpush1.msra.mxu0 %v912
    %1086 = vmatprep.subr.mxu0 %v917
    %1087 = vmatpush1.msra.mxu0 %v916
    %1088 = vmatprep.subr.mxu0 0.0
    %1089 = vmatpush1.msra.mxu0 0.0
    %1090 = vmatprep.subr.mxu0 0.0
    %1091 = vmatpush1.msra.mxu0 0.0
    %1092 = vmatprep.subr.mxu0 0.0
    %1093 = vmatpush1.msra.mxu0 0.0
    %1094 = vmatprep.subr.mxu0 0.0
    %1095 = vmatpush1.msra.mxu0 0.0
    %1096 = vmatprep.subr.mxu0 0.0
    %1097 = vmatpush1.msra.mxu0 0.0
    %1098 = vmatprep.subr.mxu0 0.0
    %1099 = vmatpush1.msra.mxu0 0.0
    %1100 = vmatprep.subr.mxu0 0.0
    %1101 = vmatpush1.msra.mxu0 0.0
    %1102 = vmatprep.subr.mxu0 0.0
    %1103 = vmatpush1.msra.mxu0 0.0
    %1104 = vmatprep.subr.mxu0 0.0
    %1105 = vmatpush1.msra.mxu0 0.0
    %1106 = vmatprep.subr.mxu0 0.0
    %1107 = vmatpush1.msra.mxu0 0.0
    %1108 = vmatprep.subr.mxu0 0.0
    %1109 = vmatpush1.msra.mxu0 0.0
    %1110 = vmatprep.subr.mxu0 0.0
    %1111 = vmatpush1.msra.mxu0 0.0
    %1112 = vmatprep.subr.mxu0 0.0
    %1113 = vmatpush1.msra.mxu0 0.0
    %1114 = vmatprep.subr.mxu0 0.0
    %1115 = vmatpush1.msra.mxu0 0.0
    %1116 = vmatprep.subr.mxu0 0.0
    %1117 = vmatpush1.msra.mxu0 0.0
    %1118 = vmatprep.subr.mxu0 0.0
    %1119 = vmatpush1.msra.mxu0 0.0
    %1120 = vmatprep.mubr.f32.mxu0 0.0
    %1121 = vmatmul.mubr.f32.gmra.mrb[0].mxu0 0.0
    %v1122 = vpop.f32.mrb[0].mxu0
    %v1123 = vadd.f32 0.0, %v1122
    %v1124 = vpop.f32.mrb[0].mxu0
    %v1125 = vadd.f32 0.0, %v1124
    %1126 = vdwg.mxu0
    %v1131 = vcombine.low %v1052, %v1054
    %v1132 = vcombine.low %v1123, %v1125
    %v1134 = vunpack.c.l.s4 1966171168
    %v1135 = vunpack.c.0.s8 %v1134
    %v1136 = vlaneseq
    %v1137 = vshrl.u32 %v1136, 7
    %v1138 = vsub.s32 %v1135, %v1137
    %v1139 = vrot.slane %v1131, %v1138
    %v1141 = vunpack.c.l.s4 1966171168
    %v1142 = vunpack.c.0.s8 %v1141
    %v1143 = vlaneseq
    %v1144 = vshrl.u32 %v1143, 7
    %v1145 = vsub.s32 %v1142, %v1144
    %v1146 = vrot.slane %v1132, %v1145
    %v1147 = vcombine.low %v1139, %v1146
    %v1148 = vcombine.high %v1139, %v1146
    %v1150 = vunpack.c.l.s4 1966171168
    %v1151 = vunpack.c.0.s8 %v1150
    %v1152 = vlaneseq
    %v1153 = vshrl.u32 %v1152, 7
    %v1154 = vsub.s32 %v1151, %v1153
    %v1155 = vrot.slane %v1147, %v1154
    %v1157 = vunpack.c.l.s4 1966171168
    %v1158 = vunpack.c.0.s8 %v1157
    %v1159 = vlaneseq
    %v1160 = vshrl.u32 %v1159, 7
    %v1161 = vsub.s32 %v1158, %v1160
    %v1162 = vrot.slane %v1148, %v1161
    %v1165 = vadd.f32 %v982, %v1155
    %v1166 = vadd.f32 %v984, %v1162
    %v1167 = vmul.f32 %v1165, 0.5
    %v1168 = vmul.f32 %v1166, 0.5
    %v1169 = vtanh.pop %v1167
    %v1170 = vtanh.pop %v1168
    %v1171 = vmul.f32 %v1169, 0.5
    %v1172 = vmul.f32 %v1170, 0.5
    %v1173 = vadd.f32 %v1171, 0.5
    %v1174 = vadd.f32 %v1172, 0.5
    %v1177 = vrot.slane %v1165, 3
    %v1178 = vrot.slane %v1166, 3
    %v1181 = vtanh.pop %v1177
    %v1182 = vtanh.pop %v1178
    %v1185 = vrot.slane %v1173, 1
    %v1186 = vrot.slane %v1174, 1
    %v1189 = vmul.f32 %v1185, 0.0
    %v1190 = vmul.f32 %v1186, 0.0
    %v1191 = vmul.f32 %v1173, %v1181
    %v1192 = vmul.f32 %v1174, %v1182
    %v1193 = vadd.f32 %v1189, %v1191
    %v1194 = vadd.f32 %v1190, %v1192
    %v1195 = vtanh.pop %v1193
    %v1196 = vtanh.pop %v1194
    %v1197 = vrot.slane %v1173, 2
    %v1198 = vrot.slane %v1174, 2
    %v1201 = vmul.f32 %v1197, %v1195
    %v1202 = vmul.f32 %v1198, %v1196
    %s1203 = scalar_lea.vmem [#allocation2], 1
    %v1204 = vld [vmem:[%s1203] ss:$8 sm:$0xf]
    %s1205 = scalar_lea.vmem [#allocation2], 33
    %v1206 = vld [vmem:[%s1205] ss:$8 sm:$0xf]
    %v1209 = vcombine.low %v1201, %v1202
    %v1211 = vunpack.c.l.s4 1966171168
    %v1212 = vunpack.c.0.s8 %v1211
    %v1213 = vlaneseq
    %v1214 = vshrl.u32 %v1213, 7
    %v1215 = vsub.s32 %v1212, %v1214
    %v1216 = vrot.slane %v1209, %v1215
    %v1218 = vunpack.c.l.s4 1966171168
    %v1219 = vunpack.c.0.s8 %v1218
    %v1220 = vlaneseq
    %v1221 = vshrl.u32 %v1220, 7
    %v1222 = vsub.s32 %v1219, %v1221
    %v1223 = vrot.slane %v1216, %v1222
    %1225 = vmatprep.subr.mxu0 %v855
    %1226 = vmatpush1.msra.mxu0 %v854
    %1227 = vmatprep.subr.mxu0 %v859
    %1228 = vmatpush1.msra.mxu0 %v858
    %1229 = vmatprep.subr.mxu0 %v863
    %1230 = vmatpush1.msra.mxu0 %v862
    %1231 = vmatprep.subr.mxu0 %v867
    %1232 = vmatpush1.msra.mxu0 %v866
    %1233 = vmatprep.subr.mxu0 %v871
    %1234 = vmatpush1.msra.mxu0 %v870
    %1235 = vmatprep.subr.mxu0 %v875
    %1236 = vmatpush1.msra.mxu0 %v874
    %1237 = vmatprep.subr.mxu0 %v879
    %1238 = vmatpush1.msra.mxu0 %v878
    %1239 = vmatprep.subr.mxu0 %v883
    %1240 = vmatpush1.msra.mxu0 %v882
    %1241 = vmatprep.subr.mxu0 %v887
    %1242 = vmatpush1.msra.mxu0 %v886
    %1243 = vmatprep.subr.mxu0 %v891
    %1244 = vmatpush1.msra.mxu0 %v890
    %1245 = vmatprep.subr.mxu0 %v895
    %1246 = vmatpush1.msra.mxu0 %v894
    %1247 = vmatprep.subr.mxu0 %v899
    %1248 = vmatpush1.msra.mxu0 %v898
    %1249 = vmatprep.subr.mxu0 %v903
    %1250 = vmatpush1.msra.mxu0 %v902
    %1251 = vmatprep.subr.mxu0 %v907
    %1252 = vmatpush1.msra.mxu0 %v906
    %1253 = vmatprep.subr.mxu0 %v911
    %1254 = vmatpush1.msra.mxu0 %v910
    %1255 = vmatprep.subr.mxu0 %v915
    %1256 = vmatpush1.msra.mxu0 %v914
    %1257 = vmatprep.subr.mxu0 0.0
    %1258 = vmatpush1.msra.mxu0 0.0
    %1259 = vmatprep.subr.mxu0 0.0
    %1260 = vmatpush1.msra.mxu0 0.0
    %1261 = vmatprep.subr.mxu0 0.0
    %1262 = vmatpush1.msra.mxu0 0.0
    %1263 = vmatprep.subr.mxu0 0.0
    %1264 = vmatpush1.msra.mxu0 0.0
    %1265 = vmatprep.subr.mxu0 0.0
    %1266 = vmatpush1.msra.mxu0 0.0
    %1267 = vmatprep.subr.mxu0 0.0
    %1268 = vmatpush1.msra.mxu0 0.0
    %1269 = vmatprep.subr.mxu0 0.0
    %1270 = vmatpush1.msra.mxu0 0.0
    %1271 = vmatprep.subr.mxu0 0.0
    %1272 = vmatpush1.msra.mxu0 0.0
    %1273 = vmatprep.subr.mxu0 0.0
    %1274 = vmatpush1.msra.mxu0 0.0
    %1275 = vmatprep.subr.mxu0 0.0
    %1276 = vmatpush1.msra.mxu0 0.0
    %1277 = vmatprep.subr.mxu0 0.0
    %1278 = vmatpush1.msra.mxu0 0.0
    %1279 = vmatprep.subr.mxu0 0.0
    %1280 = vmatpush1.msra.mxu0 0.0
    %1281 = vmatprep.subr.mxu0 0.0
    %1282 = vmatpush1.msra.mxu0 0.0
    %1283 = vmatprep.subr.mxu0 0.0
    %1284 = vmatpush1.msra.mxu0 0.0
    %1285 = vmatprep.subr.mxu0 0.0
    %1286 = vmatpush1.msra.mxu0 0.0
    %1287 = vmatprep.subr.mxu0 0.0
    %1288 = vmatpush1.msra.mxu0 0.0
    %1289 = vmatprep.mubr.f32.mxu0 0.0
    %1290 = vmatmul.mubr.f32.gmra.mrb[0].mxu0 %v1223
    %v1291 = vpop.f32.mrb[0].mxu0
    %v1292 = vadd.f32 0.0, %v1291
    %v1293 = vpop.f32.mrb[0].mxu0
    %v1294 = vadd.f32 0.0, %v1293
    %1295 = vdwg.mxu0
    %1296 = vmatprep.subr.mxu0 %v857
    %1297 = vmatpush1.msra.mxu0 %v856
    %1298 = vmatprep.subr.mxu0 %v861
    %1299 = vmatpush1.msra.mxu0 %v860
    %1300 = vmatprep.subr.mxu0 %v865
    %1301 = vmatpush1.msra.mxu0 %v864
    %1302 = vmatprep.subr.mxu0 %v869
    %1303 = vmatpush1.msra.mxu0 %v868
    %1304 = vmatprep.subr.mxu0 %v873
    %1305 = vmatpush1.msra.mxu0 %v872
    %1306 = vmatprep.subr.mxu0 %v877
    %1307 = vmatpush1.msra.mxu0 %v876
    %1308 = vmatprep.subr.mxu0 %v881
    %1309 = vmatpush1.msra.mxu0 %v880
    %1310 = vmatprep.subr.mxu0 %v885
    %1311 = vmatpush1.msra.mxu0 %v884
    %1312 = vmatprep.subr.mxu0 %v889
    %1313 = vmatpush1.msra.mxu0 %v888
    %1314 = vmatprep.subr.mxu0 %v893
    %1315 = vmatpush1.msra.mxu0 %v892
    %1316 = vmatprep.subr.mxu0 %v897
    %1317 = vmatpush1.msra.mxu0 %v896
    %1318 = vmatprep.subr.mxu0 %v901
    %1319 = vmatpush1.msra.mxu0 %v900
    %1320 = vmatprep.subr.mxu0 %v905
    %1321 = vmatpush1.msra.mxu0 %v904
    %1322 = vmatprep.subr.mxu0 %v909
    %1323 = vmatpush1.msra.mxu0 %v908
    %1324 = vmatprep.subr.mxu0 %v913
    %1325 = vmatpush1.msra.mxu0 %v912
    %1326 = vmatprep.subr.mxu0 %v917
    %1327 = vmatpush1.msra.mxu0 %v916
    %1328 = vmatprep.subr.mxu0 0.0
    %1329 = vmatpush1.msra.mxu0 0.0
    %1330 = vmatprep.subr.mxu0 0.0
    %1331 = vmatpush1.msra.mxu0 0.0
    %1332 = vmatprep.subr.mxu0 0.0
    %1333 = vmatpush1.msra.mxu0 0.0
    %1334 = vmatprep.subr.mxu0 0.0
    %1335 = vmatpush1.msra.mxu0 0.0
    %1336 = vmatprep.subr.mxu0 0.0
    %1337 = vmatpush1.msra.mxu0 0.0
    %1338 = vmatprep.subr.mxu0 0.0
    %1339 = vmatpush1.msra.mxu0 0.0
    %1340 = vmatprep.subr.mxu0 0.0
    %1341 = vmatpush1.msra.mxu0 0.0
    %1342 = vmatprep.subr.mxu0 0.0
    %1343 = vmatpush1.msra.mxu0 0.0
    %1344 = vmatprep.subr.mxu0 0.0
    %1345 = vmatpush1.msra.mxu0 0.0
    %1346 = vmatprep.subr.mxu0 0.0
    %1347 = vmatpush1.msra.mxu0 0.0
    %1348 = vmatprep.subr.mxu0 0.0
    %1349 = vmatpush1.msra.mxu0 0.0
    %1350 = vmatprep.subr.mxu0 0.0
    %1351 = vmatpush1.msra.mxu0 0.0
    %1352 = vmatprep.subr.mxu0 0.0
    %1353 = vmatpush1.msra.mxu0 0.0
    %1354 = vmatprep.subr.mxu0 0.0
    %1355 = vmatpush1.msra.mxu0 0.0
    %1356 = vmatprep.subr.mxu0 0.0
    %1357 = vmatpush1.msra.mxu0 0.0
    %1358 = vmatprep.subr.mxu0 0.0
    %1359 = vmatpush1.msra.mxu0 0.0
    %1360 = vmatprep.mubr.f32.mxu0 0.0
    %1361 = vmatmul.mubr.f32.gmra.mrb[0].mxu0 %v1223
    %v1362 = vpop.f32.mrb[0].mxu0
    %v1363 = vadd.f32 0.0, %v1362
    %v1364 = vpop.f32.mrb[0].mxu0
    %v1365 = vadd.f32 0.0, %v1364
    %1366 = vdwg.mxu0
    %v1371 = vcombine.low %v1292, %v1294
    %v1372 = vcombine.low %v1363, %v1365
    %v1374 = vunpack.c.l.s4 1966171168
    %v1375 = vunpack.c.0.s8 %v1374
    %v1376 = vlaneseq
    %v1377 = vshrl.u32 %v1376, 7
    %v1378 = vsub.s32 %v1375, %v1377
    %v1379 = vrot.slane %v1371, %v1378
    %v1381 = vunpack.c.l.s4 1966171168
    %v1382 = vunpack.c.0.s8 %v1381
    %v1383 = vlaneseq
    %v1384 = vshrl.u32 %v1383, 7
    %v1385 = vsub.s32 %v1382, %v1384
    %v1386 = vrot.slane %v1372, %v1385
    %v1387 = vcombine.low %v1379, %v1386
    %v1388 = vcombine.high %v1379, %v1386
    %v1390 = vunpack.c.l.s4 1966171168
    %v1391 = vunpack.c.0.s8 %v1390
    %v1392 = vlaneseq
    %v1393 = vshrl.u32 %v1392, 7
    %v1394 = vsub.s32 %v1391, %v1393
    %v1395 = vrot.slane %v1387, %v1394
    %v1397 = vunpack.c.l.s4 1966171168
    %v1398 = vunpack.c.0.s8 %v1397
    %v1399 = vlaneseq
    %v1400 = vshrl.u32 %v1399, 7
    %v1401 = vsub.s32 %v1398, %v1400
    %v1402 = vrot.slane %v1388, %v1401
    %v1405 = vadd.f32 %v1204, %v1395
    %v1406 = vadd.f32 %v1206, %v1402
    %v1407 = vmul.f32 %v1405, 0.5
    %v1408 = vmul.f32 %v1406, 0.5
    %v1409 = vtanh.pop %v1407
    %v1410 = vtanh.pop %v1408
    %v1411 = vmul.f32 %v1409, 0.5
    %v1412 = vmul.f32 %v1410, 0.5
    %v1413 = vadd.f32 %v1411, 0.5
    %v1414 = vadd.f32 %v1412, 0.5
    %v1417 = vrot.slane %v1405, 3
    %v1418 = vrot.slane %v1406, 3
    %v1421 = vtanh.pop %v1417
    %v1422 = vtanh.pop %v1418
    %v1425 = vrot.slane %v1413, 1
    %v1426 = vrot.slane %v1414, 1
    %v1429 = vmul.f32 %v1425, %v1193
    %v1430 = vmul.f32 %v1426, %v1194
    %v1431 = vmul.f32 %v1413, %v1421
    %v1432 = vmul.f32 %v1414, %v1422
    %v1433 = vadd.f32 %v1429, %v1431
    %v1434 = vadd.f32 %v1430, %v1432
    %v1435 = vtanh.pop %v1433
    %v1436 = vtanh.pop %v1434
    %v1437 = vrot.slane %v1413, 2
    %v1438 = vrot.slane %v1414, 2
    %v1441 = vmul.f32 %v1437, %v1435
    %v1442 = vmul.f32 %v1438, %v1436
    %s1443 = scalar_lea.vmem [#allocation2], 2
    %v1444 = vld [vmem:[%s1443] ss:$8 sm:$0xf]
    %s1445 = scalar_lea.vmem [#allocation2], 34
    %v1446 = vld [vmem:[%s1445] ss:$8 sm:$0xf]
    %v1449 = vcombine.low %v1441, %v1442
    %v1451 = vunpack.c.l.s4 1966171168
    %v1452 = vunpack.c.0.s8 %v1451
    %v1453 = vlaneseq
    %v1454 = vshrl.u32 %v1453, 7
    %v1455 = vsub.s32 %v1452, %v1454
    %v1456 = vrot.slane %v1449, %v1455
    %v1458 = vunpack.c.l.s4 1966171168
    %v1459 = vunpack.c.0.s8 %v1458
    %v1460 = vlaneseq
    %v1461 = vshrl.u32 %v1460, 7
    %v1462 = vsub.s32 %v1459, %v1461
    %v1463 = vrot.slane %v1456, %v1462
    %1465 = vmatprep.subr.mxu0 %v855
    %1466 = vmatpush1.msra.mxu0 %v854
    %1467 = vmatprep.subr.mxu0 %v859
    %1468 = vmatpush1.msra.mxu0 %v858
    %1469 = vmatprep.subr.mxu0 %v863
    %1470 = vmatpush1.msra.mxu0 %v862
    %1471 = vmatprep.subr.mxu0 %v867
    %1472 = vmatpush1.msra.mxu0 %v866
    %1473 = vmatprep.subr.mxu0 %v871
    %1474 = vmatpush1.msra.mxu0 %v870
    %1475 = vmatprep.subr.mxu0 %v875
    %1476 = vmatpush1.msra.mxu0 %v874
    %1477 = vmatprep.subr.mxu0 %v879
    %1478 = vmatpush1.msra.mxu0 %v878
    %1479 = vmatprep.subr.mxu0 %v883
    %1480 = vmatpush1.msra.mxu0 %v882
    %1481 = vmatprep.subr.mxu0 %v887
    %1482 = vmatpush1.msra.mxu0 %v886
    %1483 = vmatprep.subr.mxu0 %v891
    %1484 = vmatpush1.msra.mxu0 %v890
    %1485 = vmatprep.subr.mxu0 %v895
    %1486 = vmatpush1.msra.mxu0 %v894
    %1487 = vmatprep.subr.mxu0 %v899
    %1488 = vmatpush1.msra.mxu0 %v898
    %1489 = vmatprep.subr.mxu0 %v903
    %1490 = vmatpush1.msra.mxu0 %v902
    %1491 = vmatprep.subr.mxu0 %v907
    %1492 = vmatpush1.msra.mxu0 %v906
    %1493 = vmatprep.subr.mxu0 %v911
    %1494 = vmatpush1.msra.mxu0 %v910
    %1495 = vmatprep.subr.mxu0 %v915
    %1496 = vmatpush1.msra.mxu0 %v914
    %1497 = vmatprep.subr.mxu0 0.0
    %1498 = vmatpush1.msra.mxu0 0.0
    %1499 = vmatprep.subr.mxu0 0.0
    %1500 = vmatpush1.msra.mxu0 0.0
    %1501 = vmatprep.subr.mxu0 0.0
    %1502 = vmatpush1.msra.mxu0 0.0
    %1503 = vmatprep.subr.mxu0 0.0
    %1504 = vmatpush1.msra.mxu0 0.0
    %1505 = vmatprep.subr.mxu0 0.0
    %1506 = vmatpush1.msra.mxu0 0.0
    %1507 = vmatprep.subr.mxu0 0.0
    %1508 = vmatpush1.msra.mxu0 0.0
    %1509 = vmatprep.subr.mxu0 0.0
    %1510 = vmatpush1.msra.mxu0 0.0
    %1511 = vmatprep.subr.mxu0 0.0
    %1512 = vmatpush1.msra.mxu0 0.0
    %1513 = vmatprep.subr.mxu0 0.0
    %1514 = vmatpush1.msra.mxu0 0.0
    %1515 = vmatprep.subr.mxu0 0.0
    %1516 = vmatpush1.msra.mxu0 0.0
    %1517 = vmatprep.subr.mxu0 0.0
    %1518 = vmatpush1.msra.mxu0 0.0
    %1519 = vmatprep.subr.mxu0 0.0
    %1520 = vmatpush1.msra.mxu0 0.0
    %1521 = vmatprep.subr.mxu0 0.0
    %1522 = vmatpush1.msra.mxu0 0.0
    %1523 = vmatprep.subr.mxu0 0.0
    %1524 = vmatpush1.msra.mxu0 0.0
    %1525 = vmatprep.subr.mxu0 0.0
    %1526 = vmatpush1.msra.mxu0 0.0
    %1527 = vmatprep.subr.mxu0 0.0
    %1528 = vmatpush1.msra.mxu0 0.0
    %1529 = vmatprep.mubr.f32.mxu0 0.0
    %1530 = vmatmul.mubr.f32.gmra.mrb[0].mxu0 %v1463
    %v1531 = vpop.f32.mrb[0].mxu0
    %v1532 = vadd.f32 0.0, %v1531
    %v1533 = vpop.f32.mrb[0].mxu0
    %v1534 = vadd.f32 0.0, %v1533
    %1535 = vdwg.mxu0
    %1536 = vmatprep.subr.mxu0 %v857
    %1537 = vmatpush1.msra.mxu0 %v856
    %1538 = vmatprep.subr.mxu0 %v861
    %1539 = vmatpush1.msra.mxu0 %v860
    %1540 = vmatprep.subr.mxu0 %v865
    %1541 = vmatpush1.msra.mxu0 %v864
    %1542 = vmatprep.subr.mxu0 %v869
    %1543 = vmatpush1.msra.mxu0 %v868
    %1544 = vmatprep.subr.mxu0 %v873
    %1545 = vmatpush1.msra.mxu0 %v872
    %1546 = vmatprep.subr.mxu0 %v877
    %1547 = vmatpush1.msra.mxu0 %v876
    %1548 = vmatprep.subr.mxu0 %v881
    %1549 = vmatpush1.msra.mxu0 %v880
    %1550 = vmatprep.subr.mxu0 %v885
    %1551 = vmatpush1.msra.mxu0 %v884
    %1552 = vmatprep.subr.mxu0 %v889
    %1553 = vmatpush1.msra.mxu0 %v888
    %1554 = vmatprep.subr.mxu0 %v893
    %1555 = vmatpush1.msra.mxu0 %v892
    %1556 = vmatprep.subr.mxu0 %v897
    %1557 = vmatpush1.msra.mxu0 %v896
    %1558 = vmatprep.subr.mxu0 %v901
    %1559 = vmatpush1.msra.mxu0 %v900
    %1560 = vmatprep.subr.mxu0 %v905
    %1561 = vmatpush1.msra.mxu0 %v904
    %1562 = vmatprep.subr.mxu0 %v909
    %1563 = vmatpush1.msra.mxu0 %v908
    %1564 = vmatprep.subr.mxu0 %v913
    %1565 = vmatpush1.msra.mxu0 %v912
    %1566 = vmatprep.subr.mxu0 %v917
    %1567 = vmatpush1.msra.mxu0 %v916
    %1568 = vmatprep.subr.mxu0 0.0
    %1569 = vmatpush1.msra.mxu0 0.0
    %1570 = vmatprep.subr.mxu0 0.0
    %1571 = vmatpush1.msra.mxu0 0.0
    %1572 = vmatprep.subr.mxu0 0.0
    %1573 = vmatpush1.msra.mxu0 0.0
    %1574 = vmatprep.subr.mxu0 0.0
    %1575 = vmatpush1.msra.mxu0 0.0
    %1576 = vmatprep.subr.mxu0 0.0
    %1577 = vmatpush1.msra.mxu0 0.0
    %1578 = vmatprep.subr.mxu0 0.0
    %1579 = vmatpush1.msra.mxu0 0.0
    %1580 = vmatprep.subr.mxu0 0.0
    %1581 = vmatpush1.msra.mxu0 0.0
    %1582 = vmatprep.subr.mxu0 0.0
    %1583 = vmatpush1.msra.mxu0 0.0
    %1584 = vmatprep.subr.mxu0 0.0
    %1585 = vmatpush1.msra.mxu0 0.0
    %1586 = vmatprep.subr.mxu0 0.0
    %1587 = vmatpush1.msra.mxu0 0.0
    %1588 = vmatprep.subr.mxu0 0.0
    %1589 = vmatpush1.msra.mxu0 0.0
    %1590 = vmatprep.subr.mxu0 0.0
    %1591 = vmatpush1.msra.mxu0 0.0
    %1592 = vmatprep.subr.mxu0 0.0
    %1593 = vmatpush1.msra.mxu0 0.0
    %1594 = vmatprep.subr.mxu0 0.0
    %1595 = vmatpush1.msra.mxu0 0.0
    %1596 = vmatprep.subr.mxu0 0.0
    %1597 = vmatpush1.msra.mxu0 0.0
    %1598 = vmatprep.subr.mxu0 0.0
    %1599 = vmatpush1.msra.mxu0 0.0
    %1600 = vmatprep.mubr.f32.mxu0 0.0
    %1601 = vmatmul.mubr.f32.gmra.mrb[0].mxu0 %v1463
    %v1602 = vpop.f32.mrb[0].mxu0
    %v1603 = vadd.f32 0.0, %v1602
    %v1604 = vpop.f32.mrb[0].mxu0
    %v1605 = vadd.f32 0.0, %v1604
    %1606 = vdwg.mxu0
    %v1611 = vcombine.low %v1532, %v1534
    %v1612 = vcombine.low %v1603, %v1605
    %v1614 = vunpack.c.l.s4 1966171168
    %v1615 = vunpack.c.0.s8 %v1614
    %v1616 = vlaneseq
    %v1617 = vshrl.u32 %v1616, 7
    %v1618 = vsub.s32 %v1615, %v1617
    %v1619 = vrot.slane %v1611, %v1618
    %v1621 = vunpack.c.l.s4 1966171168
    %v1622 = vunpack.c.0.s8 %v1621
    %v1623 = vlaneseq
    %v1624 = vshrl.u32 %v1623, 7
    %v1625 = vsub.s32 %v1622, %v1624
    %v1626 = vrot.slane %v1612, %v1625
    %v1627 = vcombine.low %v1619, %v1626
    %v1628 = vcombine.high %v1619, %v1626
    %v1630 = vunpack.c.l.s4 1966171168
    %v1631 = vunpack.c.0.s8 %v1630
    %v1632 = vlaneseq
    %v1633 = vshrl.u32 %v1632, 7
    %v1634 = vsub.s32 %v1631, %v1633
    %v1635 = vrot.slane %v1627, %v1634
    %v1637 = vunpack.c.l.s4 1966171168
    %v1638 = vunpack.c.0.s8 %v1637
    %v1639 = vlaneseq
    %v1640 = vshrl.u32 %v1639, 7
    %v1641 = vsub.s32 %v1638, %v1640
    %v1642 = vrot.slane %v1628, %v1641
    %v1645 = vadd.f32 %v1444, %v1635
    %v1646 = vadd.f32 %v1446, %v1642
    %v1647 = vmul.f32 %v1645, 0.5
    %v1648 = vmul.f32 %v1646, 0.5
    %v1649 = vtanh.pop %v1647
    %v1650 = vtanh.pop %v1648
    %v1651 = vmul.f32 %v1649, 0.5
    %v1652 = vmul.f32 %v1650, 0.5
    %v1653 = vadd.f32 %v1651, 0.5
    %v1654 = vadd.f32 %v1652, 0.5
    %v1657 = vrot.slane %v1645, 3
    %v1658 = vrot.slane %v1646, 3
    %v1661 = vtanh.pop %v1657
    %v1662 = vtanh.pop %v1658
    %v1665 = vrot.slane %v1653, 1
    %v1666 = vrot.slane %v1654, 1
    %v1669 = vmul.f32 %v1665, %v1433
    %v1670 = vmul.f32 %v1666, %v1434
    %v1671 = vmul.f32 %v1653, %v1661
    %v1672 = vmul.f32 %v1654, %v1662
    %v1673 = vadd.f32 %v1669, %v1671
    %v1674 = vadd.f32 %v1670, %v1672
    %v1675 = vtanh.pop %v1673
    %v1676 = vtanh.pop %v1674
    %v1677 = vrot.slane %v1653, 2
    %v1678 = vrot.slane %v1654, 2
    %v1681 = vmul.f32 %v1677, %v1675
    %v1682 = vmul.f32 %v1678, %v1676
    %s1683 = scalar_lea.vmem [#allocation2], 3
    %v1684 = vld [vmem:[%s1683] ss:$8 sm:$0xf]
    %s1685 = scalar_lea.vmem [#allocation2], 35
    %v1686 = vld [vmem:[%s1685] ss:$8 sm:$0xf]
    %v1689 = vcombine.low %v1681, %v1682
    %v1691 = vunpack.c.l.s4 1966171168
    %v1692 = vunpack.c.0.s8 %v1691
    %v1693 = vlaneseq
    %v1694 = vshrl.u32 %v1693, 7
    %v1695 = vsub.s32 %v1692, %v1694
    %v1696 = vrot.slane %v1689, %v1695
    %v1698 = vunpack.c.l.s4 1966171168
    %v1699 = vunpack.c.0.s8 %v1698
    %v1700 = vlaneseq
    %v1701 = vshrl.u32 %v1700, 7
    %v1702 = vsub.s32 %v1699, %v1701
    %v1703 = vrot.slane %v1696, %v1702
    %1705 = vmatprep.subr.mxu0 %v855
    %1706 = vmatpush1.msra.mxu0 %v854
    %1707 = vmatprep.subr.mxu0 %v859
    %1708 = vmatpush1.msra.mxu0 %v858
    %1709 = vmatprep.subr.mxu0 %v863
    %1710 = vmatpush1.msra.mxu0 %v862
    %1711 = vmatprep.subr.mxu0 %v867
    %1712 = vmatpush1.msra.mxu0 %v866
    %1713 = vmatprep.subr.mxu0 %v871
    %1714 = vmatpush1.msra.mxu0 %v870
    %1715 = vmatprep.subr.mxu0 %v875
    %1716 = vmatpush1.msra.mxu0 %v874
    %1717 = vmatprep.subr.mxu0 %v879
    %1718 = vmatpush1.msra.mxu0 %v878
    %1719 = vmatprep.subr.mxu0 %v883
    %1720 = vmatpush1.msra.mxu0 %v882
    %1721 = vmatprep.subr.mxu0 %v887
    %1722 = vmatpush1.msra.mxu0 %v886
    %1723 = vmatprep.subr.mxu0 %v891
    %1724 = vmatpush1.msra.mxu0 %v890
    %1725 = vmatprep.subr.mxu0 %v895
    %1726 = vmatpush1.msra.mxu0 %v894
    %1727 = vmatprep.subr.mxu0 %v899
    %1728 = vmatpush1.msra.mxu0 %v898
    %1729 = vmatprep.subr.mxu0 %v903
    %1730 = vmatpush1.msra.mxu0 %v902
    %1731 = vmatprep.subr.mxu0 %v907
    %1732 = vmatpush1.msra.mxu0 %v906
    %1733 = vmatprep.subr.mxu0 %v911
    %1734 = vmatpush1.msra.mxu0 %v910
    %1735 = vmatprep.subr.mxu0 %v915
    %1736 = vmatpush1.msra.mxu0 %v914
    %1737 = vmatprep.subr.mxu0 0.0
    %1738 = vmatpush1.msra.mxu0 0.0
    %1739 = vmatprep.subr.mxu0 0.0
    %1740 = vmatpush1.msra.mxu0 0.0
    %1741 = vmatprep.subr.mxu0 0.0
    %1742 = vmatpush1.msra.mxu0 0.0
    %1743 = vmatprep.subr.mxu0 0.0
    %1744 = vmatpush1.msra.mxu0 0.0
    %1745 = vmatprep.subr.mxu0 0.0
    %1746 = vmatpush1.msra.mxu0 0.0
    %1747 = vmatprep.subr.mxu0 0.0
    %1748 = vmatpush1.msra.mxu0 0.0
    %1749 = vmatprep.subr.mxu0 0.0
    %1750 = vmatpush1.msra.mxu0 0.0
    %1751 = vmatprep.subr.mxu0 0.0
    %1752 = vmatpush1.msra.mxu0 0.0
    %1753 = vmatprep.subr.mxu0 0.0
    %1754 = vmatpush1.msra.mxu0 0.0
    %1755 = vmatprep.subr.mxu0 0.0
    %1756 = vmatpush1.msra.mxu0 0.0
    %1757 = vmatprep.subr.mxu0 0.0
    %1758 = vmatpush1.msra.mxu0 0.0
    %1759 = vmatprep.subr.mxu0 0.0
    %1760 = vmatpush1.msra.mxu0 0.0
    %1761 = vmatprep.subr.mxu0 0.0
    %1762 = vmatpush1.msra.mxu0 0.0
    %1763 = vmatprep.subr.mxu0 0.0
    %1764 = vmatpush1.msra.mxu0 0.0
    %1765 = vmatprep.subr.mxu0 0.0
    %1766 = vmatpush1.msra.mxu0 0.0
    %1767 = vmatprep.subr.mxu0 0.0
    %1768 = vmatpush1.msra.mxu0 0.0
    %1769 = vmatprep.mubr.f32.mxu0 0.0
    %1770 = vmatmul.mubr.f32.gmra.mrb[0].mxu0 %v1703
    %v1771 = vpop.f32.mrb[0].mxu0
    %v1772 = vadd.f32 0.0, %v1771
    %v1773 = vpop.f32.mrb[0].mxu0
    %v1774 = vadd.f32 0.0, %v1773
    %1775 = vdwg.mxu0
    %1776 = vmatprep.subr.mxu0 %v857
    %1777 = vmatpush1.msra.mxu0 %v856
    %1778 = vmatprep.subr.mxu0 %v861
    %1779 = vmatpush1.msra.mxu0 %v860
    %1780 = vmatprep.subr.mxu0 %v865
    %1781 = vmatpush1.msra.mxu0 %v864
    %1782 = vmatprep.subr.mxu0 %v869
    %1783 = vmatpush1.msra.mxu0 %v868
    %1784 = vmatprep.subr.mxu0 %v873
    %1785 = vmatpush1.msra.mxu0 %v872
    %1786 = vmatprep.subr.mxu0 %v877
    %1787 = vmatpush1.msra.mxu0 %v876
    %1788 = vmatprep.subr.mxu0 %v881
    %1789 = vmatpush1.msra.mxu0 %v880
    %1790 = vmatprep.subr.mxu0 %v885
    %1791 = vmatpush1.msra.mxu0 %v884
    %1792 = vmatprep.subr.mxu0 %v889
    %1793 = vmatpush1.msra.mxu0 %v888
    %1794 = vmatprep.subr.mxu0 %v893
    %1795 = vmatpush1.msra.mxu0 %v892
    %1796 = vmatprep.subr.mxu0 %v897
    %1797 = vmatpush1.msra.mxu0 %v896
    %1798 = vmatprep.subr.mxu0 %v901
    %1799 = vmatpush1.msra.mxu0 %v900
    %1800 = vmatprep.subr.mxu0 %v905
    %1801 = vmatpush1.msra.mxu0 %v904
    %1802 = vmatprep.subr.mxu0 %v909
    %1803 = vmatpush1.msra.mxu0 %v908
    %1804 = vmatprep.subr.mxu0 %v913
    %1805 = vmatpush1.msra.mxu0 %v912
    %1806 = vmatprep.subr.mxu0 %v917
    %1807 = vmatpush1.msra.mxu0 %v916
    %1808 = vmatprep.subr.mxu0 0.0
    %1809 = vmatpush1.msra.mxu0 0.0
    %1810 = vmatprep.subr.mxu0 0.0
    %1811 = vmatpush1.msra.mxu0 0.0
    %1812 = vmatprep.subr.mxu0 0.0
    %1813 = vmatpush1.msra.mxu0 0.0
    %1814 = vmatprep.subr.mxu0 0.0
    %1815 = vmatpush1.msra.mxu0 0.0
    %1816 = vmatprep.subr.mxu0 0.0
    %1817 = vmatpush1.msra.mxu0 0.0
    %1818 = vmatprep.subr.mxu0 0.0
    %1819 = vmatpush1.msra.mxu0 0.0
    %1820 = vmatprep.subr.mxu0 0.0
    %1821 = vmatpush1.msra.mxu0 0.0
    %1822 = vmatprep.subr.mxu0 0.0
    %1823 = vmatpush1.msra.mxu0 0.0
    %1824 = vmatprep.subr.mxu0 0.0
    %1825 = vmatpush1.msra.mxu0 0.0
    %1826 = vmatprep.subr.mxu0 0.0
    %1827 = vmatpush1.msra.mxu0 0.0
    %1828 = vmatprep.subr.mxu0 0.0
    %1829 = vmatpush1.msra.mxu0 0.0
    %1830 = vmatprep.subr.mxu0 0.0
    %1831 = vmatpush1.msra.mxu0 0.0
    %1832 = vmatprep.subr.mxu0 0.0
    %1833 = vmatpush1.msra.mxu0 0.0
    %1834 = vmatprep.subr.mxu0 0.0
    %1835 = vmatpush1.msra.mxu0 0.0
    %1836 = vmatprep.subr.mxu0 0.0
    %1837 = vmatpush1.msra.mxu0 0.0
    %1838 = vmatprep.subr.mxu0 0.0
    %1839 = vmatpush1.msra.mxu0 0.0
    %1840 = vmatprep.mubr.f32.mxu0 0.0
    %1841 = vmatmul.mubr.f32.gmra.mrb[0].mxu0 %v1703
    %v1842 = vpop.f32.mrb[0].mxu0
    %v1843 = vadd.f32 0.0, %v1842
    %v1844 = vpop.f32.mrb[0].mxu0
    %v1845 = vadd.f32 0.0, %v1844
    %1846 = vdwg.mxu0
    %v1851 = vcombine.low %v1772, %v1774
    %v1852 = vcombine.low %v1843, %v1845
    %v1854 = vunpack.c.l.s4 1966171168
    %v1855 = vunpack.c.0.s8 %v1854
    %v1856 = vlaneseq
    %v1857 = vshrl.u32 %v1856, 7
    %v1858 = vsub.s32 %v1855, %v1857
    %v1859 = vrot.slane %v1851, %v1858
    %v1861 = vunpack.c.l.s4 1966171168
    %v1862 = vunpack.c.0.s8 %v1861
    %v1863 = vlaneseq
    %v1864 = vshrl.u32 %v1863, 7
    %v1865 = vsub.s32 %v1862, %v1864
    %v1866 = vrot.slane %v1852, %v1865
    %v1867 = vcombine.low %v1859, %v1866
    %v1868 = vcombine.high %v1859, %v1866
    %v1870 = vunpack.c.l.s4 1966171168
    %v1871 = vunpack.c.0.s8 %v1870
    %v1872 = vlaneseq
    %v1873 = vshrl.u32 %v1872, 7
    %v1874 = vsub.s32 %v1871, %v1873
    %v1875 = vrot.slane %v1867, %v1874
    %v1877 = vunpack.c.l.s4 1966171168
    %v1878 = vunpack.c.0.s8 %v1877
    %v1879 = vlaneseq
    %v1880 = vshrl.u32 %v1879, 7
    %v1881 = vsub.s32 %v1878, %v1880
    %v1882 = vrot.slane %v1868, %v1881
    %v1885 = vadd.f32 %v1684, %v1875
    %v1886 = vadd.f32 %v1686, %v1882
    %v1887 = vmul.f32 %v1885, 0.5
    %v1888 = vmul.f32 %v1886, 0.5
    %v1889 = vtanh.pop %v1887
    %v1890 = vtanh.pop %v1888
    %v1891 = vmul.f32 %v1889, 0.5
    %v1892 = vmul.f32 %v1890, 0.5
    %v1893 = vadd.f32 %v1891, 0.5
    %v1894 = vadd.f32 %v1892, 0.5
    %v1897 = vrot.slane %v1885, 3
    %v1898 = vrot.slane %v1886, 3
    %v1901 = vtanh.pop %v1897
    %v1902 = vtanh.pop %v1898
    %v1905 = vrot.slane %v1893, 1
    %v1906 = vrot.slane %v1894, 1
    %v1909 = vmul.f32 %v1905, %v1673
    %v1910 = vmul.f32 %v1906, %v1674
    %v1911 = vmul.f32 %v1893, %v1901
    %v1912 = vmul.f32 %v1894, %v1902
    %v1913 = vadd.f32 %v1909, %v1911
    %v1914 = vadd.f32 %v1910, %v1912
    %v1915 = vtanh.pop %v1913
    %v1916 = vtanh.pop %v1914
    %v1917 = vrot.slane %v1893, 2
    %v1918 = vrot.slane %v1894, 2
    %v1921 = vmul.f32 %v1917, %v1915
    %v1922 = vmul.f32 %v1918, %v1916
    %s1923 = scalar_lea.vmem [#allocation2], 4
    %v1924 = vld [vmem:[%s1923] ss:$8 sm:$0xf]
    %s1925 = scalar_lea.vmem [#allocation2], 36
    %v1926 = vld [vmem:[%s1925] ss:$8 sm:$0xf]
    %v1929 = vcombine.low %v1921, %v1922
    %v1931 = vunpack.c.l.s4 1966171168
    %v1932 = vunpack.c.0.s8 %v1931
    %v1933 = vlaneseq
    %v1934 = vshrl.u32 %v1933, 7
    %v1935 = vsub.s32 %v1932, %v1934
    %v1936 = vrot.slane %v1929, %v1935
    %v1938 = vunpack.c.l.s4 1966171168
    %v1939 = vunpack.c.0.s8 %v1938
    %v1940 = vlaneseq
    %v1941 = vshrl.u32 %v1940, 7
    %v1942 = vsub.s32 %v1939, %v1941
    %v1943 = vrot.slane %v1936, %v1942
    %1945 = vmatprep.subr.mxu0 %v855
    %1946 = vmatpush1.msra.mxu0 %v854
    %1947 = vmatprep.subr.mxu0 %v859
    %1948 = vmatpush1.msra.mxu0 %v858
    %1949 = vmatprep.subr.mxu0 %v863
    %1950 = vmatpush1.msra.mxu0 %v862
    %1951 = vmatprep.subr.mxu0 %v867
    %1952 = vmatpush1.msra.mxu0 %v866
    %1953 = vmatprep.subr.mxu0 %v871
    %1954 = vmatpush1.msra.mxu0 %v870
    %1955 = vmatprep.subr.mxu0 %v875
    %1956 = vmatpush1.msra.mxu0 %v874
    %1957 = vmatprep.subr.mxu0 %v879
    %1958 = vmatpush1.msra.mxu0 %v878
    %1959 = vmatprep.subr.mxu0 %v883
    %1960 = vmatpush1.msra.mxu0 %v882
    %1961 = vmatprep.subr.mxu0 %v887
    %1962 = vmatpush1.msra.mxu0 %v886
    %1963 = vmatprep.subr.mxu0 %v891
    %1964 = vmatpush1.msra.mxu0 %v890
    %1965 = vmatprep.subr.mxu0 %v895
    %1966 = vmatpush1.msra.mxu0 %v894
    %1967 = vmatprep.subr.mxu0 %v899
    %1968 = vmatpush1.msra.mxu0 %v898
    %1969 = vmatprep.subr.mxu0 %v903
    %1970 = vmatpush1.msra.mxu0 %v902
    %1971 = vmatprep.subr.mxu0 %v907
    %1972 = vmatpush1.msra.mxu0 %v906
    %1973 = vmatprep.subr.mxu0 %v911
    %1974 = vmatpush1.msra.mxu0 %v910
    %1975 = vmatprep.subr.mxu0 %v915
    %1976 = vmatpush1.msra.mxu0 %v914
    %1977 = vmatprep.subr.mxu0 0.0
    %1978 = vmatpush1.msra.mxu0 0.0
    %1979 = vmatprep.subr.mxu0 0.0
    %1980 = vmatpush1.msra.mxu0 0.0
    %1981 = vmatprep.subr.mxu0 0.0
    %1982 = vmatpush1.msra.mxu0 0.0
    %1983 = vmatprep.subr.mxu0 0.0
    %1984 = vmatpush1.msra.mxu0 0.0
    %1985 = vmatprep.subr.mxu0 0.0
    %1986 = vmatpush1.msra.mxu0 0.0
    %1987 = vmatprep.subr.mxu0 0.0
    %1988 = vmatpush1.msra.mxu0 0.0
    %1989 = vmatprep.subr.mxu0 0.0
    %1990 = vmatpush1.msra.mxu0 0.0
    %1991 = vmatprep.subr.mxu0 0.0
    %1992 = vmatpush1.msra.mxu0 0.0
    %1993 = vmatprep.subr.mxu0 0.0
    %1994 = vmatpush1.msra.mxu0 0.0
    %1995 = vmatprep.subr.mxu0 0.0
    %1996 = vmatpush1.msra.mxu0 0.0
    %1997 = vmatprep.subr.mxu0 0.0
    %1998 = vmatpush1.msra.mxu0 0.0
    %1999 = vmatprep.subr.mxu0 0.0
    %2000 = vmatpush1.msra.mxu0 0.0
    %2001 = vmatprep.subr.mxu0 0.0
    %2002 = vmatpush1.msra.mxu0 0.0
    %2003 = vmatprep.subr.mxu0 0.0
    %2004 = vmatpush1.msra.mxu0 0.0
    %2005 = vmatprep.subr.mxu0 0.0
    %2006 = vmatpush1.msra.mxu0 0.0
    %2007 = vmatprep.subr.mxu0 0.0
    %2008 = vmatpush1.msra.mxu0 0.0
    %2009 = vmatprep.mubr.f32.mxu0 0.0
    %2010 = vmatmul.mubr.f32.gmra.mrb[0].mxu0 %v1943
    %v2011 = vpop.f32.mrb[0].mxu0
    %v2012 = vadd.f32 0.0, %v2011
    %v2013 = vpop.f32.mrb[0].mxu0
    %v2014 = vadd.f32 0.0, %v2013
    %2015 = vdwg.mxu0
    %2016 = vmatprep.subr.mxu0 %v857
    %2017 = vmatpush1.msra.mxu0 %v856
    %2018 = vmatprep.subr.mxu0 %v861
    %2019 = vmatpush1.msra.mxu0 %v860
    %2020 = vmatprep.subr.mxu0 %v865
    %2021 = vmatpush1.msra.mxu0 %v864
    %2022 = vmatprep.subr.mxu0 %v869
    %2023 = vmatpush1.msra.mxu0 %v868
    %2024 = vmatprep.subr.mxu0 %v873
    %2025 = vmatpush1.msra.mxu0 %v872
    %2026 = vmatprep.subr.mxu0 %v877
    %2027 = vmatpush1.msra.mxu0 %v876
    %2028 = vmatprep.subr.mxu0 %v881
    %2029 = vmatpush1.msra.mxu0 %v880
    %2030 = vmatprep.subr.mxu0 %v885
    %2031 = vmatpush1.msra.mxu0 %v884
    %2032 = vmatprep.subr.mxu0 %v889
    %2033 = vmatpush1.msra.mxu0 %v888
    %2034 = vmatprep.subr.mxu0 %v893
    %2035 = vmatpush1.msra.mxu0 %v892
    %2036 = vmatprep.subr.mxu0 %v897
    %2037 = vmatpush1.msra.mxu0 %v896
    %2038 = vmatprep.subr.mxu0 %v901
    %2039 = vmatpush1.msra.mxu0 %v900
    %2040 = vmatprep.subr.mxu0 %v905
    %2041 = vmatpush1.msra.mxu0 %v904
    %2042 = vmatprep.subr.mxu0 %v909
    %2043 = vmatpush1.msra.mxu0 %v908
    %2044 = vmatprep.subr.mxu0 %v913
    %2045 = vmatpush1.msra.mxu0 %v912
    %2046 = vmatprep.subr.mxu0 %v917
    %2047 = vmatpush1.msra.mxu0 %v916
    %2048 = vmatprep.subr.mxu0 0.0
    %2049 = vmatpush1.msra.mxu0 0.0
    %2050 = vmatprep.subr.mxu0 0.0
    %2051 = vmatpush1.msra.mxu0 0.0
    %2052 = vmatprep.subr.mxu0 0.0
    %2053 = vmatpush1.msra.mxu0 0.0
    %2054 = vmatprep.subr.mxu0 0.0
    %2055 = vmatpush1.msra.mxu0 0.0
    %2056 = vmatprep.subr.mxu0 0.0
    %2057 = vmatpush1.msra.mxu0 0.0
    %2058 = vmatprep.subr.mxu0 0.0
    %2059 = vmatpush1.msra.mxu0 0.0
    %2060 = vmatprep.subr.mxu0 0.0
    %2061 = vmatpush1.msra.mxu0 0.0
    %2062 = vmatprep.subr.mxu0 0.0
    %2063 = vmatpush1.msra.mxu0 0.0
    %2064 = vmatprep.subr.mxu0 0.0
    %2065 = vmatpush1.msra.mxu0 0.0
    %2066 = vmatprep.subr.mxu0 0.0
    %2067 = vmatpush1.msra.mxu0 0.0
    %2068 = vmatprep.subr.mxu0 0.0
    %2069 = vmatpush1.msra.mxu0 0.0
    %2070 = vmatprep.subr.mxu0 0.0
    %2071 = vmatpush1.msra.mxu0 0.0
    %2072 = vmatprep.subr.mxu0 0.0
    %2073 = vmatpush1.msra.mxu0 0.0
    %2074 = vmatprep.subr.mxu0 0.0
    %2075 = vmatpush1.msra.mxu0 0.0
    %2076 = vmatprep.subr.mxu0 0.0
    %2077 = vmatpush1.msra.mxu0 0.0
    %2078 = vmatprep.subr.mxu0 0.0
    %2079 = vmatpush1.msra.mxu0 0.0
    %2080 = vmatprep.mubr.f32.mxu0 0.0
    %2081 = vmatmul.mubr.f32.gmra.mrb[0].mxu0 %v1943
    %v2082 = vpop.f32.mrb[0].mxu0
    %v2083 = vadd.f32 0.0, %v2082
    %v2084 = vpop.f32.mrb[0].mxu0
    %v2085 = vadd.f32 0.0, %v2084
    %2086 = vdwg.mxu0
    %v2091 = vcombine.low %v2012, %v2014
    %v2092 = vcombine.low %v2083, %v2085
    %v2094 = vunpack.c.l.s4 1966171168
    %v2095 = vunpack.c.0.s8 %v2094
    %v2096 = vlaneseq
    %v2097 = vshrl.u32 %v2096, 7
    %v2098 = vsub.s32 %v2095, %v2097
    %v2099 = vrot.slane %v2091, %v2098
    %v2101 = vunpack.c.l.s4 1966171168
    %v2102 = vunpack.c.0.s8 %v2101
    %v2103 = vlaneseq
    %v2104 = vshrl.u32 %v2103, 7
    %v2105 = vsub.s32 %v2102, %v2104
    %v2106 = vrot.slane %v2092, %v2105
    %v2107 = vcombine.low %v2099, %v2106
    %v2108 = vcombine.high %v2099, %v2106
    %v2110 = vunpack.c.l.s4 1966171168
    %v2111 = vunpack.c.0.s8 %v2110
    %v2112 = vlaneseq
    %v2113 = vshrl.u32 %v2112, 7
    %v2114 = vsub.s32 %v2111, %v2113
    %v2115 = vrot.slane %v2107, %v2114
    %v2117 = vunpack.c.l.s4 1966171168
    %v2118 = vunpack.c.0.s8 %v2117
    %v2119 = vlaneseq
    %v2120 = vshrl.u32 %v2119, 7
    %v2121 = vsub.s32 %v2118, %v2120
    %v2122 = vrot.slane %v2108, %v2121
    %v2125 = vadd.f32 %v1924, %v2115
    %v2126 = vadd.f32 %v1926, %v2122
    %v2127 = vmul.f32 %v2125, 0.5
    %v2128 = vmul.f32 %v2126, 0.5
    %v2129 = vtanh.pop %v2127
    %v2130 = vtanh.pop %v2128
    %v2131 = vmul.f32 %v2129, 0.5
    %v2132 = vmul.f32 %v2130, 0.5
    %v2133 = vadd.f32 %v2131, 0.5
    %v2134 = vadd.f32 %v2132, 0.5
    %v2137 = vrot.slane %v2125, 3
    %v2138 = vrot.slane %v2126, 3
    %v2141 = vtanh.pop %v2137
    %v2142 = vtanh.pop %v2138
    %v2145 = vrot.slane %v2133, 1
    %v2146 = vrot.slane %v2134, 1
    %v2149 = vmul.f32 %v2145, %v1913
    %v2150 = vmul.f32 %v2146, %v1914
    %v2151 = vmul.f32 %v2133, %v2141
    %v2152 = vmul.f32 %v2134, %v2142
    %v2153 = vadd.f32 %v2149, %v2151
    %v2154 = vadd.f32 %v2150, %v2152
    %v2155 = vtanh.pop %v2153
    %v2156 = vtanh.pop %v2154
    %v2157 = vrot.slane %v2133, 2
    %v2158 = vrot.slane %v2134, 2
    %v2161 = vmul.f32 %v2157, %v2155
    %v2162 = vmul.f32 %v2158, %v2156
    %s2163 = scalar_lea.vmem [#allocation2], 5
    %v2164 = vld [vmem:[%s2163] ss:$8 sm:$0xf]
    %s2165 = scalar_lea.vmem [#allocation2], 37
    %v2166 = vld [vmem:[%s2165] ss:$8 sm:$0xf]
    %v2169 = vcombine.low %v2161, %v2162
    %v2171 = vunpack.c.l.s4 1966171168
    %v2172 = vunpack.c.0.s8 %v2171
    %v2173 = vlaneseq
    %v2174 = vshrl.u32 %v2173, 7
    %v2175 = vsub.s32 %v2172, %v2174
    %v2176 = vrot.slane %v2169, %v2175
    %v2178 = vunpack.c.l.s4 1966171168
    %v2179 = vunpack.c.0.s8 %v2178
    %v2180 = vlaneseq
    %v2181 = vshrl.u32 %v2180, 7
    %v2182 = vsub.s32 %v2179, %v2181
    %v2183 = vrot.slane %v2176, %v2182
    %2185 = vmatprep.subr.mxu0 %v855
    %2186 = vmatpush1.msra.mxu0 %v854
    %2187 = vmatprep.subr.mxu0 %v859
    %2188 = vmatpush1.msra.mxu0 %v858
    %2189 = vmatprep.subr.mxu0 %v863
    %2190 = vmatpush1.msra.mxu0 %v862
    %2191 = vmatprep.subr.mxu0 %v867
    %2192 = vmatpush1.msra.mxu0 %v866
    %2193 = vmatprep.subr.mxu0 %v871
    %2194 = vmatpush1.msra.mxu0 %v870
    %2195 = vmatprep.subr.mxu0 %v875
    %2196 = vmatpush1.msra.mxu0 %v874
    %2197 = vmatprep.subr.mxu0 %v879
    %2198 = vmatpush1.msra.mxu0 %v878
    %2199 = vmatprep.subr.mxu0 %v883
    %2200 = vmatpush1.msra.mxu0 %v882
    %2201 = vmatprep.subr.mxu0 %v887
    %2202 = vmatpush1.msra.mxu0 %v886
    %2203 = vmatprep.subr.mxu0 %v891
    %2204 = vmatpush1.msra.mxu0 %v890
    %2205 = vmatprep.subr.mxu0 %v895
    %2206 = vmatpush1.msra.mxu0 %v894
    %2207 = vmatprep.subr.mxu0 %v899
    %2208 = vmatpush1.msra.mxu0 %v898
    %2209 = vmatprep.subr.mxu0 %v903
    %2210 = vmatpush1.msra.mxu0 %v902
    %2211 = vmatprep.subr.mxu0 %v907
    %2212 = vmatpush1.msra.mxu0 %v906
    %2213 = vmatprep.subr.mxu0 %v911
    %2214 = vmatpush1.msra.mxu0 %v910
    %2215 = vmatprep.subr.mxu0 %v915
    %2216 = vmatpush1.msra.mxu0 %v914
    %2217 = vmatprep.subr.mxu0 0.0
    %2218 = vmatpush1.msra.mxu0 0.0
    %2219 = vmatprep.subr.mxu0 0.0
    %2220 = vmatpush1.msra.mxu0 0.0
    %2221 = vmatprep.subr.mxu0 0.0
    %2222 = vmatpush1.msra.mxu0 0.0
    %2223 = vmatprep.subr.mxu0 0.0
    %2224 = vmatpush1.msra.mxu0 0.0
    %2225 = vmatprep.subr.mxu0 0.0
    %2226 = vmatpush1.msra.mxu0 0.0
    %2227 = vmatprep.subr.mxu0 0.0
    %2228 = vmatpush1.msra.mxu0 0.0
    %2229 = vmatprep.subr.mxu0 0.0
    %2230 = vmatpush1.msra.mxu0 0.0
    %2231 = vmatprep.subr.mxu0 0.0
    %2232 = vmatpush1.msra.mxu0 0.0
    %2233 = vmatprep.subr.mxu0 0.0
    %2234 = vmatpush1.msra.mxu0 0.0
    %2235 = vmatprep.subr.mxu0 0.0
    %2236 = vmatpush1.msra.mxu0 0.0
    %2237 = vmatprep.subr.mxu0 0.0
    %2238 = vmatpush1.msra.mxu0 0.0
    %2239 = vmatprep.subr.mxu0 0.0
    %2240 = vmatpush1.msra.mxu0 0.0
    %2241 = vmatprep.subr.mxu0 0.0
    %2242 = vmatpush1.msra.mxu0 0.0
    %2243 = vmatprep.subr.mxu0 0.0
    %2244 = vmatpush1.msra.mxu0 0.0
    %2245 = vmatprep.subr.mxu0 0.0
    %2246 = vmatpush1.msra.mxu0 0.0
    %2247 = vmatprep.subr.mxu0 0.0
    %2248 = vmatpush1.msra.mxu0 0.0
    %2249 = vmatprep.mubr.f32.mxu0 0.0
    %2250 = vmatmul.mubr.f32.gmra.mrb[0].mxu0 %v2183
    %v2251 = vpop.f32.mrb[0].mxu0
    %v2252 = vadd.f32 0.0, %v2251
    %v2253 = vpop.f32.mrb[0].mxu0
    %v2254 = vadd.f32 0.0, %v2253
    %2255 = vdwg.mxu0
    %2256 = vmatprep.subr.mxu0 %v857
    %2257 = vmatpush1.msra.mxu0 %v856
    %2258 = vmatprep.subr.mxu0 %v861
    %2259 = vmatpush1.msra.mxu0 %v860
    %2260 = vmatprep.subr.mxu0 %v865
    %2261 = vmatpush1.msra.mxu0 %v864
    %2262 = vmatprep.subr.mxu0 %v869
    %2263 = vmatpush1.msra.mxu0 %v868
    %2264 = vmatprep.subr.mxu0 %v873
    %2265 = vmatpush1.msra.mxu0 %v872
    %2266 = vmatprep.subr.mxu0 %v877
    %2267 = vmatpush1.msra.mxu0 %v876
    %2268 = vmatprep.subr.mxu0 %v881
    %2269 = vmatpush1.msra.mxu0 %v880
    %2270 = vmatprep.subr.mxu0 %v885
    %2271 = vmatpush1.msra.mxu0 %v884
    %2272 = vmatprep.subr.mxu0 %v889
    %2273 = vmatpush1.msra.mxu0 %v888
    %2274 = vmatprep.subr.mxu0 %v893
    %2275 = vmatpush1.msra.mxu0 %v892
    %2276 = vmatprep.subr.mxu0 %v897
    %2277 = vmatpush1.msra.mxu0 %v896
    %2278 = vmatprep.subr.mxu0 %v901
    %2279 = vmatpush1.msra.mxu0 %v900
    %2280 = vmatprep.subr.mxu0 %v905
    %2281 = vmatpush1.msra.mxu0 %v904
    %2282 = vmatprep.subr.mxu0 %v909
    %2283 = vmatpush1.msra.mxu0 %v908
    %2284 = vmatprep.subr.mxu0 %v913
    %2285 = vmatpush1.msra.mxu0 %v912
    %2286 = vmatprep.subr.mxu0 %v917
    %2287 = vmatpush1.msra.mxu0 %v916
    %2288 = vmatprep.subr.mxu0 0.0
    %2289 = vmatpush1.msra.mxu0 0.0
    %2290 = vmatprep.subr.mxu0 0.0
    %2291 = vmatpush1.msra.mxu0 0.0
    %2292 = vmatprep.subr.mxu0 0.0
    %2293 = vmatpush1.msra.mxu0 0.0
    %2294 = vmatprep.subr.mxu0 0.0
    %2295 = vmatpush1.msra.mxu0 0.0
    %2296 = vmatprep.subr.mxu0 0.0
    %2297 = vmatpush1.msra.mxu0 0.0
    %2298 = vmatprep.subr.mxu0 0.0
    %2299 = vmatpush1.msra.mxu0 0.0
    %2300 = vmatprep.subr.mxu0 0.0
    %2301 = vmatpush1.msra.mxu0 0.0
    %2302 = vmatprep.subr.mxu0 0.0
    %2303 = vmatpush1.msra.mxu0 0.0
    %2304 = vmatprep.subr.mxu0 0.0
    %2305 = vmatpush1.msra.mxu0 0.0
    %2306 = vmatprep.subr.mxu0 0.0
    %2307 = vmatpush1.msra.mxu0 0.0
    %2308 = vmatprep.subr.mxu0 0.0
    %2309 = vmatpush1.msra.mxu0 0.0
    %2310 = vmatprep.subr.mxu0 0.0
    %2311 = vmatpush1.msra.mxu0 0.0
    %2312 = vmatprep.subr.mxu0 0.0
    %2313 = vmatpush1.msra.mxu0 0.0
    %2314 = vmatprep.subr.mxu0 0.0
    %2315 = vmatpush1.msra.mxu0 0.0
    %2316 = vmatprep.subr.mxu0 0.0
    %2317 = vmatpush1.msra.mxu0 0.0
    %2318 = vmatprep.subr.mxu0 0.0
    %2319 = vmatpush1.msra.mxu0 0.0
    %2320 = vmatprep.mubr.f32.mxu0 0.0
    %2321 = vmatmul.mubr.f32.gmra.mrb[0].mxu0 %v2183
    %v2322 = vpop.f32.mrb[0].mxu0
    %v2323 = vadd.f32 0.0, %v2322
    %v2324 = vpop.f32.mrb[0].mxu0
    %v2325 = vadd.f32 0.0, %v2324
    %2326 = vdwg.mxu0
    %v2331 = vcombine.low %v2252, %v2254
    %v2332 = vcombine.low %v2323, %v2325
    %v2334 = vunpack.c.l.s4 1966171168
    %v2335 = vunpack.c.0.s8 %v2334
    %v2336 = vlaneseq
    %v2337 = vshrl.u32 %v2336, 7
    %v2338 = vsub.s32 %v2335, %v2337
    %v2339 = vrot.slane %v2331, %v2338
    %v2341 = vunpack.c.l.s4 1966171168
    %v2342 = vunpack.c.0.s8 %v2341
    %v2343 = vlaneseq
    %v2344 = vshrl.u32 %v2343, 7
    %v2345 = vsub.s32 %v2342, %v2344
    %v2346 = vrot.slane %v2332, %v2345
    %v2347 = vcombine.low %v2339, %v2346
    %v2348 = vcombine.high %v2339, %v2346
    %v2350 = vunpack.c.l.s4 1966171168
    %v2351 = vunpack.c.0.s8 %v2350
    %v2352 = vlaneseq
    %v2353 = vshrl.u32 %v2352, 7
    %v2354 = vsub.s32 %v2351, %v2353
    %v2355 = vrot.slane %v2347, %v2354
    %v2357 = vunpack.c.l.s4 1966171168
    %v2358 = vunpack.c.0.s8 %v2357
    %v2359 = vlaneseq
    %v2360 = vshrl.u32 %v2359, 7
    %v2361 = vsub.s32 %v2358, %v2360
    %v2362 = vrot.slane %v2348, %v2361
    %v2365 = vadd.f32 %v2164, %v2355
    %v2366 = vadd.f32 %v2166, %v2362
    %v2367 = vmul.f32 %v2365, 0.5
    %v2368 = vmul.f32 %v2366, 0.5
    %v2369 = vtanh.pop %v2367
    %v2370 = vtanh.pop %v2368
    %v2371 = vmul.f32 %v2369, 0.5
    %v2372 = vmul.f32 %v2370, 0.5
    %v2373 = vadd.f32 %v2371, 0.5
    %v2374 = vadd.f32 %v2372, 0.5
    %v2377 = vrot.slane %v2365, 3
    %v2378 = vrot.slane %v2366, 3
    %v2381 = vtanh.pop %v2377
    %v2382 = vtanh.pop %v2378
    %v2385 = vrot.slane %v2373, 1
    %v2386 = vrot.slane %v2374, 1
    %v2389 = vmul.f32 %v2385, %v2153
    %v2390 = vmul.f32 %v2386, %v2154
    %v2391 = vmul.f32 %v2373, %v2381
    %v2392 = vmul.f32 %v2374, %v2382
    %v2393 = vadd.f32 %v2389, %v2391
    %v2394 = vadd.f32 %v2390, %v2392
    %v2395 = vtanh.pop %v2393
    %v2396 = vtanh.pop %v2394
    %v2397 = vrot.slane %v2373, 2
    %v2398 = vrot.slane %v2374, 2
    %v2401 = vmul.f32 %v2397, %v2395
    %v2402 = vmul.f32 %v2398, %v2396
    %v2403 = vld [vmem:[#allocation3] ss:$8 sm:$0xf]
    %s2404 = scalar_lea.vmem [#allocation3], 32
    %v2405 = vld [vmem:[%s2404] ss:$8 sm:$0xf]
    %v2408 = vcombine.low %v2401, %v2402
    %v2410 = vunpack.c.l.s4 1966171168
    %v2411 = vunpack.c.0.s8 %v2410
    %v2412 = vlaneseq
    %v2413 = vshrl.u32 %v2412, 7
    %v2414 = vsub.s32 %v2411, %v2413
    %v2415 = vrot.slane %v2408, %v2414
    %v2417 = vunpack.c.l.s4 1966171168
    %v2418 = vunpack.c.0.s8 %v2417
    %v2419 = vlaneseq
    %v2420 = vshrl.u32 %v2419, 7
    %v2421 = vsub.s32 %v2418, %v2420
    %v2422 = vrot.slane %v2415, %v2421
    %2424 = vmatprep.subr.mxu0 %v919
    %2425 = vmatpush1.msra.mxu0 %v918
    %2426 = vmatprep.subr.mxu0 %v923
    %2427 = vmatpush1.msra.mxu0 %v922
    %2428 = vmatprep.subr.mxu0 %v927
    %2429 = vmatpush1.msra.mxu0 %v926
    %2430 = vmatprep.subr.mxu0 %v931
    %2431 = vmatpush1.msra.mxu0 %v930
    %2432 = vmatprep.subr.mxu0 %v935
    %2433 = vmatpush1.msra.mxu0 %v934
    %2434 = vmatprep.subr.mxu0 %v939
    %2435 = vmatpush1.msra.mxu0 %v938
    %2436 = vmatprep.subr.mxu0 %v943
    %2437 = vmatpush1.msra.mxu0 %v942
    %2438 = vmatprep.subr.mxu0 %v947
    %2439 = vmatpush1.msra.mxu0 %v946
    %2440 = vmatprep.subr.mxu0 %v951
    %2441 = vmatpush1.msra.mxu0 %v950
    %2442 = vmatprep.subr.mxu0 %v955
    %2443 = vmatpush1.msra.mxu0 %v954
    %2444 = vmatprep.subr.mxu0 %v959
    %2445 = vmatpush1.msra.mxu0 %v958
    %2446 = vmatprep.subr.mxu0 %v963
    %2447 = vmatpush1.msra.mxu0 %v962
    %2448 = vmatprep.subr.mxu0 %v967
    %2449 = vmatpush1.msra.mxu0 %v966
    %2450 = vmatprep.subr.mxu0 %v971
    %2451 = vmatpush1.msra.mxu0 %v970
    %2452 = vmatprep.subr.mxu0 %v975
    %2453 = vmatpush1.msra.mxu0 %v974
    %2454 = vmatprep.subr.mxu0 %v979
    %2455 = vmatpush1.msra.mxu0 %v978
    %2456 = vmatprep.subr.mxu0 0.0
    %2457 = vmatpush1.msra.mxu0 0.0
    %2458 = vmatprep.subr.mxu0 0.0
    %2459 = vmatpush1.msra.mxu0 0.0
    %2460 = vmatprep.subr.mxu0 0.0
    %2461 = vmatpush1.msra.mxu0 0.0
    %2462 = vmatprep.subr.mxu0 0.0
    %2463 = vmatpush1.msra.mxu0 0.0
    %2464 = vmatprep.subr.mxu0 0.0
    %2465 = vmatpush1.msra.mxu0 0.0
    %2466 = vmatprep.subr.mxu0 0.0
    %2467 = vmatpush1.msra.mxu0 0.0
    %2468 = vmatprep.subr.mxu0 0.0
    %2469 = vmatpush1.msra.mxu0 0.0
    %2470 = vmatprep.subr.mxu0 0.0
    %2471 = vmatpush1.msra.mxu0 0.0
    %2472 = vmatprep.subr.mxu0 0.0
    %2473 = vmatpush1.msra.mxu0 0.0
    %2474 = vmatprep.subr.mxu0 0.0
    %2475 = vmatpush1.msra.mxu0 0.0
    %2476 = vmatprep.subr.mxu0 0.0
    %2477 = vmatpush1.msra.mxu0 0.0
    %2478 = vmatprep.subr.mxu0 0.0
    %2479 = vmatpush1.msra.mxu0 0.0
    %2480 = vmatprep.subr.mxu0 0.0
    %2481 = vmatpush1.msra.mxu0 0.0
    %2482 = vmatprep.subr.mxu0 0.0
    %2483 = vmatpush1.msra.mxu0 0.0
    %2484 = vmatprep.subr.mxu0 0.0
    %2485 = vmatpush1.msra.mxu0 0.0
    %2486 = vmatprep.subr.mxu0 0.0
    %2487 = vmatpush1.msra.mxu0 0.0
    %2488 = vmatprep.mubr.f32.mxu0 0.0
    %2489 = vmatmul.mubr.f32.gmra.mrb[0].mxu0 %v2422
    %v2490 = vpop.f32.mrb[0].mxu0
    %v2491 = vadd.f32 0.0, %v2490
    %v2492 = vpop.f32.mrb[0].mxu0
    %v2493 = vadd.f32 0.0, %v2492
    %2494 = vdwg.mxu0
    %2495 = vmatprep.subr.mxu0 %v921
    %2496 = vmatpush1.msra.mxu0 %v920
    %2497 = vmatprep.subr.mxu0 %v925
    %2498 = vmatpush1.msra.mxu0 %v924
    %2499 = vmatprep.subr.mxu0 %v929
    %2500 = vmatpush1.msra.mxu0 %v928
    %2501 = vmatprep.subr.mxu0 %v933
    %2502 = vmatpush1.msra.mxu0 %v932
    %2503 = vmatprep.subr.mxu0 %v937
    %2504 = vmatpush1.msra.mxu0 %v936
    %2505 = vmatprep.subr.mxu0 %v941
    %2506 = vmatpush1.msra.mxu0 %v940
    %2507 = vmatprep.subr.mxu0 %v945
    %2508 = vmatpush1.msra.mxu0 %v944
    %2509 = vmatprep.subr.mxu0 %v949
    %2510 = vmatpush1.msra.mxu0 %v948
    %2511 = vmatprep.subr.mxu0 %v953
    %2512 = vmatpush1.msra.mxu0 %v952
    %2513 = vmatprep.subr.mxu0 %v957
    %2514 = vmatpush1.msra.mxu0 %v956
    %2515 = vmatprep.subr.mxu0 %v961
    %2516 = vmatpush1.msra.mxu0 %v960
    %2517 = vmatprep.subr.mxu0 %v965
    %2518 = vmatpush1.msra.mxu0 %v964
    %2519 = vmatprep.subr.mxu0 %v969
    %2520 = vmatpush1.msra.mxu0 %v968
    %2521 = vmatprep.subr.mxu0 %v973
    %2522 = vmatpush1.msra.mxu0 %v972
    %2523 = vmatprep.subr.mxu0 %v977
    %2524 = vmatpush1.msra.mxu0 %v976
    %2525 = vmatprep.subr.mxu0 %v981
    %2526 = vmatpush1.msra.mxu0 %v980
    %2527 = vmatprep.subr.mxu0 0.0
    %2528 = vmatpush1.msra.mxu0 0.0
    %2529 = vmatprep.subr.mxu0 0.0
    %2530 = vmatpush1.msra.mxu0 0.0
    %2531 = vmatprep.subr.mxu0 0.0
    %2532 = vmatpush1.msra.mxu0 0.0
    %2533 = vmatprep.subr.mxu0 0.0
    %2534 = vmatpush1.msra.mxu0 0.0
    %2535 = vmatprep.subr.mxu0 0.0
    %2536 = vmatpush1.msra.mxu0 0.0
    %2537 = vmatprep.subr.mxu0 0.0
    %2538 = vmatpush1.msra.mxu0 0.0
    %2539 = vmatprep.subr.mxu0 0.0
    %2540 = vmatpush1.msra.mxu0 0.0
    %2541 = vmatprep.subr.mxu0 0.0
    %2542 = vmatpush1.msra.mxu0 0.0
    %2543 = vmatprep.subr.mxu0 0.0
    %2544 = vmatpush1.msra.mxu0 0.0
    %2545 = vmatprep.subr.mxu0 0.0
    %2546 = vmatpush1.msra.mxu0 0.0
    %2547 = vmatprep.subr.mxu0 0.0
    %2548 = vmatpush1.msra.mxu0 0.0
    %2549 = vmatprep.subr.mxu0 0.0
    %2550 = vmatpush1.msra.mxu0 0.0
    %2551 = vmatprep.subr.mxu0 0.0
    %2552 = vmatpush1.msra.mxu0 0.0
    %2553 = vmatprep.subr.mxu0 0.0
    %2554 = vmatpush1.msra.mxu0 0.0
    %2555 = vmatprep.subr.mxu0 0.0
    %2556 = vmatpush1.msra.mxu0 0.0
    %2557 = vmatprep.subr.mxu0 0.0
    %2558 = vmatpush1.msra.mxu0 0.0
    %2559 = vmatprep.mubr.f32.mxu0 0.0
    %2560 = vmatmul.mubr.f32.gmra.mrb[0].mxu0 %v2422
    %v2561 = vpop.f32.mrb[0].mxu0
    %v2562 = vadd.f32 0.0, %v2561
    %v2563 = vpop.f32.mrb[0].mxu0
    %v2564 = vadd.f32 0.0, %v2563
    %2565 = vdwg.mxu0
    %v2570 = vcombine.low %v2491, %v2493
    %v2571 = vcombine.low %v2562, %v2564
    %v2573 = vunpack.c.l.s4 1966171168
    %v2574 = vunpack.c.0.s8 %v2573
    %v2575 = vlaneseq
    %v2576 = vshrl.u32 %v2575, 7
    %v2577 = vsub.s32 %v2574, %v2576
    %v2578 = vrot.slane %v2570, %v2577
    %v2580 = vunpack.c.l.s4 1966171168
    %v2581 = vunpack.c.0.s8 %v2580
    %v2582 = vlaneseq
    %v2583 = vshrl.u32 %v2582, 7
    %v2584 = vsub.s32 %v2581, %v2583
    %v2585 = vrot.slane %v2571, %v2584
    %v2586 = vcombine.low %v2578, %v2585
    %v2587 = vcombine.high %v2578, %v2585
    %v2589 = vunpack.c.l.s4 1966171168
    %v2590 = vunpack.c.0.s8 %v2589
    %v2591 = vlaneseq
    %v2592 = vshrl.u32 %v2591, 7
    %v2593 = vsub.s32 %v2590, %v2592
    %v2594 = vrot.slane %v2586, %v2593
    %v2596 = vunpack.c.l.s4 1966171168
    %v2597 = vunpack.c.0.s8 %v2596
    %v2598 = vlaneseq
    %v2599 = vshrl.u32 %v2598, 7
    %v2600 = vsub.s32 %v2597, %v2599
    %v2601 = vrot.slane %v2587, %v2600
    %v2604 = vadd.f32 %v2403, %v2594
    %v2605 = vadd.f32 %v2405, %v2601
    %v2606 = vmul.f32 %v2604, 0.5
    %v2607 = vmul.f32 %v2605, 0.5
    %v2608 = vtanh.pop %v2606
    %v2609 = vtanh.pop %v2607
    %v2610 = vmul.f32 %v2608, 0.5
    %v2611 = vmul.f32 %v2609, 0.5
    %v2612 = vadd.f32 %v2610, 0.5
    %v2613 = vadd.f32 %v2611, 0.5
    %v2616 = vrot.slane %v2604, 3
    %v2617 = vrot.slane %v2605, 3
    %v2620 = vtanh.pop %v2616
    %v2621 = vtanh.pop %v2617
    %v2624 = vrot.slane %v2612, 1
    %v2625 = vrot.slane %v2613, 1
    %v2628 = vmul.f32 %v2624, %v2393
    %v2629 = vmul.f32 %v2625, %v2394
    %v2630 = vmul.f32 %v2612, %v2620
    %v2631 = vmul.f32 %v2613, %v2621
    %v2632 = vadd.f32 %v2628, %v2630
    %v2633 = vadd.f32 %v2629, %v2631
    %v2634 = vtanh.pop %v2632
    %v2635 = vtanh.pop %v2633
    %v2636 = vrot.slane %v2612, 2
    %v2637 = vrot.slane %v2613, 2
    %v2640 = vmul.f32 %v2636, %v2634
    %v2641 = vmul.f32 %v2637, %v2635
    %2642 = vst [vmem:[#allocation4] sm:$0x1] %v2640
    %2643 = vst [vmem:[#allocation4 + $0x8] sm:$0x1] %v2641
    %s2644 = scalar_lea.vmem [#allocation3], 1
    %v2645 = vld [vmem:[%s2644] ss:$8 sm:$0xf]
    %s2646 = scalar_lea.vmem [#allocation3], 33
    %v2647 = vld [vmem:[%s2646] ss:$8 sm:$0xf]
    %v2650 = vcombine.low %v2640, %v2641
    %v2652 = vunpack.c.l.s4 1966171168
    %v2653 = vunpack.c.0.s8 %v2652
    %v2654 = vlaneseq
    %v2655 = vshrl.u32 %v2654, 7
    %v2656 = vsub.s32 %v2653, %v2655
    %v2657 = vrot.slane %v2650, %v2656
    %v2659 = vunpack.c.l.s4 1966171168
    %v2660 = vunpack.c.0.s8 %v2659
    %v2661 = vlaneseq
    %v2662 = vshrl.u32 %v2661, 7
    %v2663 = vsub.s32 %v2660, %v2662
    %v2664 = vrot.slane %v2657, %v2663
    %2666 = vmatprep.subr.mxu0 %v919
    %2667 = vmatpush1.msra.mxu0 %v918
    %2668 = vmatprep.subr.mxu0 %v923
    %2669 = vmatpush1.msra.mxu0 %v922
    %2670 = vmatprep.subr.mxu0 %v927
    %2671 = vmatpush1.msra.mxu0 %v926
    %2672 = vmatprep.subr.mxu0 %v931
    %2673 = vmatpush1.msra.mxu0 %v930
    %2674 = vmatprep.subr.mxu0 %v935
    %2675 = vmatpush1.msra.mxu0 %v934
    %2676 = vmatprep.subr.mxu0 %v939
    %2677 = vmatpush1.msra.mxu0 %v938
    %2678 = vmatprep.subr.mxu0 %v943
    %2679 = vmatpush1.msra.mxu0 %v942
    %2680 = vmatprep.subr.mxu0 %v947
    %2681 = vmatpush1.msra.mxu0 %v946
    %2682 = vmatprep.subr.mxu0 %v951
    %2683 = vmatpush1.msra.mxu0 %v950
    %2684 = vmatprep.subr.mxu0 %v955
    %2685 = vmatpush1.msra.mxu0 %v954
    %2686 = vmatprep.subr.mxu0 %v959
    %2687 = vmatpush1.msra.mxu0 %v958
    %2688 = vmatprep.subr.mxu0 %v963
    %2689 = vmatpush1.msra.mxu0 %v962
    %2690 = vmatprep.subr.mxu0 %v967
    %2691 = vmatpush1.msra.mxu0 %v966
    %2692 = vmatprep.subr.mxu0 %v971
    %2693 = vmatpush1.msra.mxu0 %v970
    %2694 = vmatprep.subr.mxu0 %v975
    %2695 = vmatpush1.msra.mxu0 %v974
    %2696 = vmatprep.subr.mxu0 %v979
    %2697 = vmatpush1.msra.mxu0 %v978
    %2698 = vmatprep.subr.mxu0 0.0
    %2699 = vmatpush1.msra.mxu0 0.0
    %2700 = vmatprep.subr.mxu0 0.0
    %2701 = vmatpush1.msra.mxu0 0.0
    %2702 = vmatprep.subr.mxu0 0.0
    %2703 = vmatpush1.msra.mxu0 0.0
    %2704 = vmatprep.subr.mxu0 0.0
    %2705 = vmatpush1.msra.mxu0 0.0
    %2706 = vmatprep.subr.mxu0 0.0
    %2707 = vmatpush1.msra.mxu0 0.0
    %2708 = vmatprep.subr.mxu0 0.0
    %2709 = vmatpush1.msra.mxu0 0.0
    %2710 = vmatprep.subr.mxu0 0.0
    %2711 = vmatpush1.msra.mxu0 0.0
    %2712 = vmatprep.subr.mxu0 0.0
    %2713 = vmatpush1.msra.mxu0 0.0
    %2714 = vmatprep.subr.mxu0 0.0
    %2715 = vmatpush1.msra.mxu0 0.0
    %2716 = vmatprep.subr.mxu0 0.0
    %2717 = vmatpush1.msra.mxu0 0.0
    %2718 = vmatprep.subr.mxu0 0.0
    %2719 = vmatpush1.msra.mxu0 0.0
    %2720 = vmatprep.subr.mxu0 0.0
    %2721 = vmatpush1.msra.mxu0 0.0
    %2722 = vmatprep.subr.mxu0 0.0
    %2723 = vmatpush1.msra.mxu0 0.0
    %2724 = vmatprep.subr.mxu0 0.0
    %2725 = vmatpush1.msra.mxu0 0.0
    %2726 = vmatprep.subr.mxu0 0.0
    %2727 = vmatpush1.msra.mxu0 0.0
    %2728 = vmatprep.subr.mxu0 0.0
    %2729 = vmatpush1.msra.mxu0 0.0
    %2730 = vmatprep.mubr.f32.mxu0 0.0
    %2731 = vmatmul.mubr.f32.gmra.mrb[0].mxu0 %v2664
    %v2732 = vpop.f32.mrb[0].mxu0
    %v2733 = vadd.f32 0.0, %v2732
    %v2734 = vpop.f32.mrb[0].mxu0
    %v2735 = vadd.f32 0.0, %v2734
    %2736 = vdwg.mxu0
    %2737 = vmatprep.subr.mxu0 %v921
    %2738 = vmatpush1.msra.mxu0 %v920
    %2739 = vmatprep.subr.mxu0 %v925
    %2740 = vmatpush1.msra.mxu0 %v924
    %2741 = vmatprep.subr.mxu0 %v929
    %2742 = vmatpush1.msra.mxu0 %v928
    %2743 = vmatprep.subr.mxu0 %v933
    %2744 = vmatpush1.msra.mxu0 %v932
    %2745 = vmatprep.subr.mxu0 %v937
    %2746 = vmatpush1.msra.mxu0 %v936
    %2747 = vmatprep.subr.mxu0 %v941
    %2748 = vmatpush1.msra.mxu0 %v940
    %2749 = vmatprep.subr.mxu0 %v945
    %2750 = vmatpush1.msra.mxu0 %v944
    %2751 = vmatprep.subr.mxu0 %v949
    %2752 = vmatpush1.msra.mxu0 %v948
    %2753 = vmatprep.subr.mxu0 %v953
    %2754 = vmatpush1.msra.mxu0 %v952
    %2755 = vmatprep.subr.mxu0 %v957
    %2756 = vmatpush1.msra.mxu0 %v956
    %2757 = vmatprep.subr.mxu0 %v961
    %2758 = vmatpush1.msra.mxu0 %v960
    %2759 = vmatprep.subr.mxu0 %v965
    %2760 = vmatpush1.msra.mxu0 %v964
    %2761 = vmatprep.subr.mxu0 %v969
    %2762 = vmatpush1.msra.mxu0 %v968
    %2763 = vmatprep.subr.mxu0 %v973
    %2764 = vmatpush1.msra.mxu0 %v972
    %2765 = vmatprep.subr.mxu0 %v977
    %2766 = vmatpush1.msra.mxu0 %v976
    %2767 = vmatprep.subr.mxu0 %v981
    %2768 = vmatpush1.msra.mxu0 %v980
    %2769 = vmatprep.subr.mxu0 0.0
    %2770 = vmatpush1.msra.mxu0 0.0
    %2771 = vmatprep.subr.mxu0 0.0
    %2772 = vmatpush1.msra.mxu0 0.0
    %2773 = vmatprep.subr.mxu0 0.0
    %2774 = vmatpush1.msra.mxu0 0.0
    %2775 = vmatprep.subr.mxu0 0.0
    %2776 = vmatpush1.msra.mxu0 0.0
    %2777 = vmatprep.subr.mxu0 0.0
    %2778 = vmatpush1.msra.mxu0 0.0
    %2779 = vmatprep.subr.mxu0 0.0
    %2780 = vmatpush1.msra.mxu0 0.0
    %2781 = vmatprep.subr.mxu0 0.0
    %2782 = vmatpush1.msra.mxu0 0.0
    %2783 = vmatprep.subr.mxu0 0.0
    %2784 = vmatpush1.msra.mxu0 0.0
    %2785 = vmatprep.subr.mxu0 0.0
    %2786 = vmatpush1.msra.mxu0 0.0
    %2787 = vmatprep.subr.mxu0 0.0
    %2788 = vmatpush1.msra.mxu0 0.0
    %2789 = vmatprep.subr.mxu0 0.0
    %2790 = vmatpush1.msra.mxu0 0.0
    %2791 = vmatprep.subr.mxu0 0.0
    %2792 = vmatpush1.msra.mxu0 0.0
    %2793 = vmatprep.subr.mxu0 0.0
    %2794 = vmatpush1.msra.mxu0 0.0
    %2795 = vmatprep.subr.mxu0 0.0
    %2796 = vmatpush1.msra.mxu0 0.0
    %2797 = vmatprep.subr.mxu0 0.0
    %2798 = vmatpush1.msra.mxu0 0.0
    %2799 = vmatprep.subr.mxu0 0.0
    %2800 = vmatpush1.msra.mxu0 0.0
    %2801 = vmatprep.mubr.f32.mxu0 0.0
    %2802 = vmatmul.mubr.f32.gmra.mrb[0].mxu0 %v2664
    %v2803 = vpop.f32.mrb[0].mxu0
    %v2804 = vadd.f32 0.0, %v2803
    %v2805 = vpop.f32.mrb[0].mxu0
    %v2806 = vadd.f32 0.0, %v2805
    %2807 = vdwg.mxu0
    %v2812 = vcombine.low %v2733, %v2735
    %v2813 = vcombine.low %v2804, %v2806
    %v2815 = vunpack.c.l.s4 1966171168
    %v2816 = vunpack.c.0.s8 %v2815
    %v2817 = vlaneseq
    %v2818 = vshrl.u32 %v2817, 7
    %v2819 = vsub.s32 %v2816, %v2818
    %v2820 = vrot.slane %v2812, %v2819
    %v2822 = vunpack.c.l.s4 1966171168
    %v2823 = vunpack.c.0.s8 %v2822
    %v2824 = vlaneseq
    %v2825 = vshrl.u32 %v2824, 7
    %v2826 = vsub.s32 %v2823, %v2825
    %v2827 = vrot.slane %v2813, %v2826
    %v2828 = vcombine.low %v2820, %v2827
    %v2829 = vcombine.high %v2820, %v2827
    %v2831 = vunpack.c.l.s4 1966171168
    %v2832 = vunpack.c.0.s8 %v2831
    %v2833 = vlaneseq
    %v2834 = vshrl.u32 %v2833, 7
    %v2835 = vsub.s32 %v2832, %v2834
    %v2836 = vrot.slane %v2828, %v2835
    %v2838 = vunpack.c.l.s4 1966171168
    %v2839 = vunpack.c.0.s8 %v2838
    %v2840 = vlaneseq
    %v2841 = vshrl.u32 %v2840, 7
    %v2842 = vsub.s32 %v2839, %v2841
    %v2843 = vrot.slane %v2829, %v2842
    %v2846 = vadd.f32 %v2645, %v2836
    %v2847 = vadd.f32 %v2647, %v2843
    %v2848 = vmul.f32 %v2846, 0.5
    %v2849 = vmul.f32 %v2847, 0.5
    %v2850 = vtanh.pop %v2848
    %v2851 = vtanh.pop %v2849
    %v2852 = vmul.f32 %v2850, 0.5
    %v2853 = vmul.f32 %v2851, 0.5
    %v2854 = vadd.f32 %v2852, 0.5
    %v2855 = vadd.f32 %v2853, 0.5
    %v2858 = vrot.slane %v2846, 3
    %v2859 = vrot.slane %v2847, 3
    %v2862 = vtanh.pop %v2858
    %v2863 = vtanh.pop %v2859
    %v2866 = vrot.slane %v2854, 1
    %v2867 = vrot.slane %v2855, 1
    %v2870 = vmul.f32 %v2866, %v2632
    %v2871 = vmul.f32 %v2867, %v2633
    %v2872 = vmul.f32 %v2854, %v2862
    %v2873 = vmul.f32 %v2855, %v2863
    %v2874 = vadd.f32 %v2870, %v2872
    %v2875 = vadd.f32 %v2871, %v2873
    %v2876 = vtanh.pop %v2874
    %v2877 = vtanh.pop %v2875
    %v2878 = vrot.slane %v2854, 2
    %v2879 = vrot.slane %v2855, 2
    %v2882 = vmul.f32 %v2878, %v2876
    %v2883 = vmul.f32 %v2879, %v2877
    %2884 = vst [vmem:[#allocation4 + $0x1] sm:$0x1] %v2882
    %2885 = vst [vmem:[#allocation4 + $0x9] sm:$0x1] %v2883
    %s2886 = scalar_lea.vmem [#allocation3], 2
    %v2887 = vld [vmem:[%s2886] ss:$8 sm:$0xf]
    %s2888 = scalar_lea.vmem [#allocation3], 34
    %v2889 = vld [vmem:[%s2888] ss:$8 sm:$0xf]
    %v2892 = vcombine.low %v2882, %v2883
    %v2894 = vunpack.c.l.s4 1966171168
    %v2895 = vunpack.c.0.s8 %v2894
    %v2896 = vlaneseq
    %v2897 = vshrl.u32 %v2896, 7
    %v2898 = vsub.s32 %v2895, %v2897
    %v2899 = vrot.slane %v2892, %v2898
    %v2901 = vunpack.c.l.s4 1966171168
    %v2902 = vunpack.c.0.s8 %v2901
    %v2903 = vlaneseq
    %v2904 = vshrl.u32 %v2903, 7
    %v2905 = vsub.s32 %v2902, %v2904
    %v2906 = vrot.slane %v2899, %v2905
    %2908 = vmatprep.subr.mxu0 %v919
    %2909 = vmatpush1.msra.mxu0 %v918
    %2910 = vmatprep.subr.mxu0 %v923
    %2911 = vmatpush1.msra.mxu0 %v922
    %2912 = vmatprep.subr.mxu0 %v927
    %2913 = vmatpush1.msra.mxu0 %v926
    %2914 = vmatprep.subr.mxu0 %v931
    %2915 = vmatpush1.msra.mxu0 %v930
    %2916 = vmatprep.subr.mxu0 %v935
    %2917 = vmatpush1.msra.mxu0 %v934
    %2918 = vmatprep.subr.mxu0 %v939
    %2919 = vmatpush1.msra.mxu0 %v938
    %2920 = vmatprep.subr.mxu0 %v943
    %2921 = vmatpush1.msra.mxu0 %v942
    %2922 = vmatprep.subr.mxu0 %v947
    %2923 = vmatpush1.msra.mxu0 %v946
    %2924 = vmatprep.subr.mxu0 %v951
    %2925 = vmatpush1.msra.mxu0 %v950
    %2926 = vmatprep.subr.mxu0 %v955
    %2927 = vmatpush1.msra.mxu0 %v954
    %2928 = vmatprep.subr.mxu0 %v959
    %2929 = vmatpush1.msra.mxu0 %v958
    %2930 = vmatprep.subr.mxu0 %v963
    %2931 = vmatpush1.msra.mxu0 %v962
    %2932 = vmatprep.subr.mxu0 %v967
    %2933 = vmatpush1.msra.mxu0 %v966
    %2934 = vmatprep.subr.mxu0 %v971
    %2935 = vmatpush1.msra.mxu0 %v970
    %2936 = vmatprep.subr.mxu0 %v975
    %2937 = vmatpush1.msra.mxu0 %v974
    %2938 = vmatprep.subr.mxu0 %v979
    %2939 = vmatpush1.msra.mxu0 %v978
    %2940 = vmatprep.subr.mxu0 0.0
    %2941 = vmatpush1.msra.mxu0 0.0
    %2942 = vmatprep.subr.mxu0 0.0
    %2943 = vmatpush1.msra.mxu0 0.0
    %2944 = vmatprep.subr.mxu0 0.0
    %2945 = vmatpush1.msra.mxu0 0.0
    %2946 = vmatprep.subr.mxu0 0.0
    %2947 = vmatpush1.msra.mxu0 0.0
    %2948 = vmatprep.subr.mxu0 0.0
    %2949 = vmatpush1.msra.mxu0 0.0
    %2950 = vmatprep.subr.mxu0 0.0
    %2951 = vmatpush1.msra.mxu0 0.0
    %2952 = vmatprep.subr.mxu0 0.0
    %2953 = vmatpush1.msra.mxu0 0.0
    %2954 = vmatprep.subr.mxu0 0.0
    %2955 = vmatpush1.msra.mxu0 0.0
    %2956 = vmatprep.subr.mxu0 0.0
    %2957 = vmatpush1.msra.mxu0 0.0
    %2958 = vmatprep.subr.mxu0 0.0
    %2959 = vmatpush1.msra.mxu0 0.0
    %2960 = vmatprep.subr.mxu0 0.0
    %2961 = vmatpush1.msra.mxu0 0.0
    %2962 = vmatprep.subr.mxu0 0.0
    %2963 = vmatpush1.msra.mxu0 0.0
    %2964 = vmatprep.subr.mxu0 0.0
    %2965 = vmatpush1.msra.mxu0 0.0
    %2966 = vmatprep.subr.mxu0 0.0
    %2967 = vmatpush1.msra.mxu0 0.0
    %2968 = vmatprep.subr.mxu0 0.0
    %2969 = vmatpush1.msra.mxu0 0.0
    %2970 = vmatprep.subr.mxu0 0.0
    %2971 = vmatpush1.msra.mxu0 0.0
    %2972 = vmatprep.mubr.f32.mxu0 0.0
    %2973 = vmatmul.mubr.f32.gmra.mrb[0].mxu0 %v2906
    %v2974 = vpop.f32.mrb[0].mxu0
    %v2975 = vadd.f32 0.0, %v2974
    %v2976 = vpop.f32.mrb[0].mxu0
    %v2977 = vadd.f32 0.0, %v2976
    %2978 = vdwg.mxu0
    %2979 = vmatprep.subr.mxu0 %v921
    %2980 = vmatpush1.msra.mxu0 %v920
    %2981 = vmatprep.subr.mxu0 %v925
    %2982 = vmatpush1.msra.mxu0 %v924
    %2983 = vmatprep.subr.mxu0 %v929
    %2984 = vmatpush1.msra.mxu0 %v928
    %2985 = vmatprep.subr.mxu0 %v933
    %2986 = vmatpush1.msra.mxu0 %v932
    %2987 = vmatprep.subr.mxu0 %v937
    %2988 = vmatpush1.msra.mxu0 %v936
    %2989 = vmatprep.subr.mxu0 %v941
    %2990 = vmatpush1.msra.mxu0 %v940
    %2991 = vmatprep.subr.mxu0 %v945
    %2992 = vmatpush1.msra.mxu0 %v944
    %2993 = vmatprep.subr.mxu0 %v949
    %2994 = vmatpush1.msra.mxu0 %v948
    %2995 = vmatprep.subr.mxu0 %v953
    %2996 = vmatpush1.msra.mxu0 %v952
    %2997 = vmatprep.subr.mxu0 %v957
    %2998 = vmatpush1.msra.mxu0 %v956
    %2999 = vmatprep.subr.mxu0 %v961
    %3000 = vmatpush1.msra.mxu0 %v960
    %3001 = vmatprep.subr.mxu0 %v965
    %3002 = vmatpush1.msra.mxu0 %v964
    %3003 = vmatprep.subr.mxu0 %v969
    %3004 = vmatpush1.msra.mxu0 %v968
    %3005 = vmatprep.subr.mxu0 %v973
    %3006 = vmatpush1.msra.mxu0 %v972
    %3007 = vmatprep.subr.mxu0 %v977
    %3008 = vmatpush1.msra.mxu0 %v976
    %3009 = vmatprep.subr.mxu0 %v981
    %3010 = vmatpush1.msra.mxu0 %v980
    %3011 = vmatprep.subr.mxu0 0.0
    %3012 = vmatpush1.msra.mxu0 0.0
    %3013 = vmatprep.subr.mxu0 0.0
    %3014 = vmatpush1.msra.mxu0 0.0
    %3015 = vmatprep.subr.mxu0 0.0
    %3016 = vmatpush1.msra.mxu0 0.0
    %3017 = vmatprep.subr.mxu0 0.0
    %3018 = vmatpush1.msra.mxu0 0.0
    %3019 = vmatprep.subr.mxu0 0.0
    %3020 = vmatpush1.msra.mxu0 0.0
    %3021 = vmatprep.subr.mxu0 0.0
    %3022 = vmatpush1.msra.mxu0 0.0
    %3023 = vmatprep.subr.mxu0 0.0
    %3024 = vmatpush1.msra.mxu0 0.0
    %3025 = vmatprep.subr.mxu0 0.0
    %3026 = vmatpush1.msra.mxu0 0.0
    %3027 = vmatprep.subr.mxu0 0.0
    %3028 = vmatpush1.msra.mxu0 0.0
    %3029 = vmatprep.subr.mxu0 0.0
    %3030 = vmatpush1.msra.mxu0 0.0
    %3031 = vmatprep.subr.mxu0 0.0
    %3032 = vmatpush1.msra.mxu0 0.0
    %3033 = vmatprep.subr.mxu0 0.0
    %3034 = vmatpush1.msra.mxu0 0.0
    %3035 = vmatprep.subr.mxu0 0.0
    %3036 = vmatpush1.msra.mxu0 0.0
    %3037 = vmatprep.subr.mxu0 0.0
    %3038 = vmatpush1.msra.mxu0 0.0
    %3039 = vmatprep.subr.mxu0 0.0
    %3040 = vmatpush1.msra.mxu0 0.0
    %3041 = vmatprep.subr.mxu0 0.0
    %3042 = vmatpush1.msra.mxu0 0.0
    %3043 = vmatprep.mubr.f32.mxu0 0.0
    %3044 = vmatmul.mubr.f32.gmra.mrb[0].mxu0 %v2906
    %v3045 = vpop.f32.mrb[0].mxu0
    %v3046 = vadd.f32 0.0, %v3045
    %v3047 = vpop.f32.mrb[0].mxu0
    %v3048 = vadd.f32 0.0, %v3047
    %3049 = vdwg.mxu0
    %v3054 = vcombine.low %v2975, %v2977
    %v3055 = vcombine.low %v3046, %v3048
    %v3057 = vunpack.c.l.s4 1966171168
    %v3058 = vunpack.c.0.s8 %v3057
    %v3059 = vlaneseq
    %v3060 = vshrl.u32 %v3059, 7
    %v3061 = vsub.s32 %v3058, %v3060
    %v3062 = vrot.slane %v3054, %v3061
    %v3064 = vunpack.c.l.s4 1966171168
    %v3065 = vunpack.c.0.s8 %v3064
    %v3066 = vlaneseq
    %v3067 = vshrl.u32 %v3066, 7
    %v3068 = vsub.s32 %v3065, %v3067
    %v3069 = vrot.slane %v3055, %v3068
    %v3070 = vcombine.low %v3062, %v3069
    %v3071 = vcombine.high %v3062, %v3069
    %v3073 = vunpack.c.l.s4 1966171168
    %v3074 = vunpack.c.0.s8 %v3073
    %v3075 = vlaneseq
    %v3076 = vshrl.u32 %v3075, 7
    %v3077 = vsub.s32 %v3074, %v3076
    %v3078 = vrot.slane %v3070, %v3077
    %v3080 = vunpack.c.l.s4 1966171168
    %v3081 = vunpack.c.0.s8 %v3080
    %v3082 = vlaneseq
    %v3083 = vshrl.u32 %v3082, 7
    %v3084 = vsub.s32 %v3081, %v3083
    %v3085 = vrot.slane %v3071, %v3084
    %v3088 = vadd.f32 %v2887, %v3078
    %v3089 = vadd.f32 %v2889, %v3085
    %v3090 = vmul.f32 %v3088, 0.5
    %v3091 = vmul.f32 %v3089, 0.5
    %v3092 = vtanh.pop %v3090
    %v3093 = vtanh.pop %v3091
    %v3094 = vmul.f32 %v3092, 0.5
    %v3095 = vmul.f32 %v3093, 0.5
    %v3096 = vadd.f32 %v3094, 0.5
    %v3097 = vadd.f32 %v3095, 0.5
    %v3100 = vrot.slane %v3088, 3
    %v3101 = vrot.slane %v3089, 3
    %v3104 = vtanh.pop %v3100
    %v3105 = vtanh.pop %v3101
    %v3108 = vrot.slane %v3096, 1
    %v3109 = vrot.slane %v3097, 1
    %v3112 = vmul.f32 %v3108, %v2874
    %v3113 = vmul.f32 %v3109, %v2875
    %v3114 = vmul.f32 %v3096, %v3104
    %v3115 = vmul.f32 %v3097, %v3105
    %v3116 = vadd.f32 %v3112, %v3114
    %v3117 = vadd.f32 %v3113, %v3115
    %v3118 = vtanh.pop %v3116
    %v3119 = vtanh.pop %v3117
    %v3120 = vrot.slane %v3096, 2
    %v3121 = vrot.slane %v3097, 2
    %v3124 = vmul.f32 %v3120, %v3118
    %v3125 = vmul.f32 %v3121, %v3119
    %3126 = vst [vmem:[#allocation4 + $0x2] sm:$0x1] %v3124
    %3127 = vst [vmem:[#allocation4 + $0xa] sm:$0x1] %v3125
    %s3128 = scalar_lea.vmem [#allocation3], 3
    %v3129 = vld [vmem:[%s3128] ss:$8 sm:$0xf]
    %s3130 = scalar_lea.vmem [#allocation3], 35
    %v3131 = vld [vmem:[%s3130] ss:$8 sm:$0xf]
    %v3134 = vcombine.low %v3124, %v3125
    %v3136 = vunpack.c.l.s4 1966171168
    %v3137 = vunpack.c.0.s8 %v3136
    %v3138 = vlaneseq
    %v3139 = vshrl.u32 %v3138, 7
    %v3140 = vsub.s32 %v3137, %v3139
    %v3141 = vrot.slane %v3134, %v3140
    %v3143 = vunpack.c.l.s4 1966171168
    %v3144 = vunpack.c.0.s8 %v3143
    %v3145 = vlaneseq
    %v3146 = vshrl.u32 %v3145, 7
    %v3147 = vsub.s32 %v3144, %v3146
    %v3148 = vrot.slane %v3141, %v3147
    %3150 = vmatprep.subr.mxu0 %v919
    %3151 = vmatpush1.msra.mxu0 %v918
    %3152 = vmatprep.subr.mxu0 %v923
    %3153 = vmatpush1.msra.mxu0 %v922
    %3154 = vmatprep.subr.mxu0 %v927
    %3155 = vmatpush1.msra.mxu0 %v926
    %3156 = vmatprep.subr.mxu0 %v931
    %3157 = vmatpush1.msra.mxu0 %v930
    %3158 = vmatprep.subr.mxu0 %v935
    %3159 = vmatpush1.msra.mxu0 %v934
    %3160 = vmatprep.subr.mxu0 %v939
    %3161 = vmatpush1.msra.mxu0 %v938
    %3162 = vmatprep.subr.mxu0 %v943
    %3163 = vmatpush1.msra.mxu0 %v942
    %3164 = vmatprep.subr.mxu0 %v947
    %3165 = vmatpush1.msra.mxu0 %v946
    %3166 = vmatprep.subr.mxu0 %v951
    %3167 = vmatpush1.msra.mxu0 %v950
    %3168 = vmatprep.subr.mxu0 %v955
    %3169 = vmatpush1.msra.mxu0 %v954
    %3170 = vmatprep.subr.mxu0 %v959
    %3171 = vmatpush1.msra.mxu0 %v958
    %3172 = vmatprep.subr.mxu0 %v963
    %3173 = vmatpush1.msra.mxu0 %v962
    %3174 = vmatprep.subr.mxu0 %v967
    %3175 = vmatpush1.msra.mxu0 %v966
    %3176 = vmatprep.subr.mxu0 %v971
    %3177 = vmatpush1.msra.mxu0 %v970
    %3178 = vmatprep.subr.mxu0 %v975
    %3179 = vmatpush1.msra.mxu0 %v974
    %3180 = vmatprep.subr.mxu0 %v979
    %3181 = vmatpush1.msra.mxu0 %v978
    %3182 = vmatprep.subr.mxu0 0.0
    %3183 = vmatpush1.msra.mxu0 0.0
    %3184 = vmatprep.subr.mxu0 0.0
    %3185 = vmatpush1.msra.mxu0 0.0
    %3186 = vmatprep.subr.mxu0 0.0
    %3187 = vmatpush1.msra.mxu0 0.0
    %3188 = vmatprep.subr.mxu0 0.0
    %3189 = vmatpush1.msra.mxu0 0.0
    %3190 = vmatprep.subr.mxu0 0.0
    %3191 = vmatpush1.msra.mxu0 0.0
    %3192 = vmatprep.subr.mxu0 0.0
    %3193 = vmatpush1.msra.mxu0 0.0
    %3194 = vmatprep.subr.mxu0 0.0
    %3195 = vmatpush1.msra.mxu0 0.0
    %3196 = vmatprep.subr.mxu0 0.0
    %3197 = vmatpush1.msra.mxu0 0.0
    %3198 = vmatprep.subr.mxu0 0.0
    %3199 = vmatpush1.msra.mxu0 0.0
    %3200 = vmatprep.subr.mxu0 0.0
    %3201 = vmatpush1.msra.mxu0 0.0
    %3202 = vmatprep.subr.mxu0 0.0
    %3203 = vmatpush1.msra.mxu0 0.0
    %3204 = vmatprep.subr.mxu0 0.0
    %3205 = vmatpush1.msra.mxu0 0.0
    %3206 = vmatprep.subr.mxu0 0.0
    %3207 = vmatpush1.msra.mxu0 0.0
    %3208 = vmatprep.subr.mxu0 0.0
    %3209 = vmatpush1.msra.mxu0 0.0
    %3210 = vmatprep.subr.mxu0 0.0
    %3211 = vmatpush1.msra.mxu0 0.0
    %3212 = vmatprep.subr.mxu0 0.0
    %3213 = vmatpush1.msra.mxu0 0.0
    %3214 = vmatprep.mubr.f32.mxu0 0.0
    %3215 = vmatmul.mubr.f32.gmra.mrb[0].mxu0 %v3148
    %v3216 = vpop.f32.mrb[0].mxu0
    %v3217 = vadd.f32 0.0, %v3216
    %v3218 = vpop.f32.mrb[0].mxu0
    %v3219 = vadd.f32 0.0, %v3218
    %3220 = vdwg.mxu0
    %3221 = vmatprep.subr.mxu0 %v921
    %3222 = vmatpush1.msra.mxu0 %v920
    %3223 = vmatprep.subr.mxu0 %v925
    %3224 = vmatpush1.msra.mxu0 %v924
    %3225 = vmatprep.subr.mxu0 %v929
    %3226 = vmatpush1.msra.mxu0 %v928
    %3227 = vmatprep.subr.mxu0 %v933
    %3228 = vmatpush1.msra.mxu0 %v932
    %3229 = vmatprep.subr.mxu0 %v937
    %3230 = vmatpush1.msra.mxu0 %v936
    %3231 = vmatprep.subr.mxu0 %v941
    %3232 = vmatpush1.msra.mxu0 %v940
    %3233 = vmatprep.subr.mxu0 %v945
    %3234 = vmatpush1.msra.mxu0 %v944
    %3235 = vmatprep.subr.mxu0 %v949
    %3236 = vmatpush1.msra.mxu0 %v948
    %3237 = vmatprep.subr.mxu0 %v953
    %3238 = vmatpush1.msra.mxu0 %v952
    %3239 = vmatprep.subr.mxu0 %v957
    %3240 = vmatpush1.msra.mxu0 %v956
    %3241 = vmatprep.subr.mxu0 %v961
    %3242 = vmatpush1.msra.mxu0 %v960
    %3243 = vmatprep.subr.mxu0 %v965
    %3244 = vmatpush1.msra.mxu0 %v964
    %3245 = vmatprep.subr.mxu0 %v969
    %3246 = vmatpush1.msra.mxu0 %v968
    %3247 = vmatprep.subr.mxu0 %v973
    %3248 = vmatpush1.msra.mxu0 %v972
    %3249 = vmatprep.subr.mxu0 %v977
    %3250 = vmatpush1.msra.mxu0 %v976
    %3251 = vmatprep.subr.mxu0 %v981
    %3252 = vmatpush1.msra.mxu0 %v980
    %3253 = vmatprep.subr.mxu0 0.0
    %3254 = vmatpush1.msra.mxu0 0.0
    %3255 = vmatprep.subr.mxu0 0.0
    %3256 = vmatpush1.msra.mxu0 0.0
    %3257 = vmatprep.subr.mxu0 0.0
    %3258 = vmatpush1.msra.mxu0 0.0
    %3259 = vmatprep.subr.mxu0 0.0
    %3260 = vmatpush1.msra.mxu0 0.0
    %3261 = vmatprep.subr.mxu0 0.0
    %3262 = vmatpush1.msra.mxu0 0.0
    %3263 = vmatprep.subr.mxu0 0.0
    %3264 = vmatpush1.msra.mxu0 0.0
    %3265 = vmatprep.subr.mxu0 0.0
    %3266 = vmatpush1.msra.mxu0 0.0
    %3267 = vmatprep.subr.mxu0 0.0
    %3268 = vmatpush1.msra.mxu0 0.0
    %3269 = vmatprep.subr.mxu0 0.0
    %3270 = vmatpush1.msra.mxu0 0.0
    %3271 = vmatprep.subr.mxu0 0.0
    %3272 = vmatpush1.msra.mxu0 0.0
    %3273 = vmatprep.subr.mxu0 0.0
    %3274 = vmatpush1.msra.mxu0 0.0
    %3275 = vmatprep.subr.mxu0 0.0
    %3276 = vmatpush1.msra.mxu0 0.0
    %3277 = vmatprep.subr.mxu0 0.0
    %3278 = vmatpush1.msra.mxu0 0.0
    %3279 = vmatprep.subr.mxu0 0.0
    %3280 = vmatpush1.msra.mxu0 0.0
    %3281 = vmatprep.subr.mxu0 0.0
    %3282 = vmatpush1.msra.mxu0 0.0
    %3283 = vmatprep.subr.mxu0 0.0
    %3284 = vmatpush1.msra.mxu0 0.0
    %3285 = vmatprep.mubr.f32.mxu0 0.0
    %3286 = vmatmul.mubr.f32.gmra.mrb[0].mxu0 %v3148
    %v3287 = vpop.f32.mrb[0].mxu0
    %v3288 = vadd.f32 0.0, %v3287
    %v3289 = vpop.f32.mrb[0].mxu0
    %v3290 = vadd.f32 0.0, %v3289
    %3291 = vdwg.mxu0
    %v3296 = vcombine.low %v3217, %v3219
    %v3297 = vcombine.low %v3288, %v3290
    %v3299 = vunpack.c.l.s4 1966171168
    %v3300 = vunpack.c.0.s8 %v3299
    %v3301 = vlaneseq
    %v3302 = vshrl.u32 %v3301, 7
    %v3303 = vsub.s32 %v3300, %v3302
    %v3304 = vrot.slane %v3296, %v3303
    %v3306 = vunpack.c.l.s4 1966171168
    %v3307 = vunpack.c.0.s8 %v3306
    %v3308 = vlaneseq
    %v3309 = vshrl.u32 %v3308, 7
    %v3310 = vsub.s32 %v3307, %v3309
    %v3311 = vrot.slane %v3297, %v3310
    %v3312 = vcombine.low %v3304, %v3311
    %v3313 = vcombine.high %v3304, %v3311
    %v3315 = vunpack.c.l.s4 1966171168
    %v3316 = vunpack.c.0.s8 %v3315
    %v3317 = vlaneseq
    %v3318 = vshrl.u32 %v3317, 7
    %v3319 = vsub.s32 %v3316, %v3318
    %v3320 = vrot.slane %v3312, %v3319
    %v3322 = vunpack.c.l.s4 1966171168
    %v3323 = vunpack.c.0.s8 %v3322
    %v3324 = vlaneseq
    %v3325 = vshrl.u32 %v3324, 7
    %v3326 = vsub.s32 %v3323, %v3325
    %v3327 = vrot.slane %v3313, %v3326
    %v3330 = vadd.f32 %v3129, %v3320
    %v3331 = vadd.f32 %v3131, %v3327
    %v3332 = vmul.f32 %v3330, 0.5
    %v3333 = vmul.f32 %v3331, 0.5
    %v3334 = vtanh.pop %v3332
    %v3335 = vtanh.pop %v3333
    %v3336 = vmul.f32 %v3334, 0.5
    %v3337 = vmul.f32 %v3335, 0.5
    %v3338 = vadd.f32 %v3336, 0.5
    %v3339 = vadd.f32 %v3337, 0.5
    %v3342 = vrot.slane %v3330, 3
    %v3343 = vrot.slane %v3331, 3
    %v3346 = vtanh.pop %v3342
    %v3347 = vtanh.pop %v3343
    %v3350 = vrot.slane %v3338, 1
    %v3351 = vrot.slane %v3339, 1
    %v3354 = vmul.f32 %v3350, %v3116
    %v3355 = vmul.f32 %v3351, %v3117
    %v3356 = vmul.f32 %v3338, %v3346
    %v3357 = vmul.f32 %v3339, %v3347
    %v3358 = vadd.f32 %v3354, %v3356
    %v3359 = vadd.f32 %v3355, %v3357
    %v3360 = vtanh.pop %v3358
    %v3361 = vtanh.pop %v3359
    %v3362 = vrot.slane %v3338, 2
    %v3363 = vrot.slane %v3339, 2
    %v3366 = vmul.f32 %v3362, %v3360
    %v3367 = vmul.f32 %v3363, %v3361
    %3368 = vst [vmem:[#allocation4 + $0x3] sm:$0x1] %v3366
    %3369 = vst [vmem:[#allocation4 + $0xb] sm:$0x1] %v3367
    %s3370 = scalar_lea.vmem [#allocation3], 4
    %v3371 = vld [vmem:[%s3370] ss:$8 sm:$0xf]
    %s3372 = scalar_lea.vmem [#allocation3], 36
    %v3373 = vld [vmem:[%s3372] ss:$8 sm:$0xf]
    %v3376 = vcombine.low %v3366, %v3367
    %v3378 = vunpack.c.l.s4 1966171168
    %v3379 = vunpack.c.0.s8 %v3378
    %v3380 = vlaneseq
    %v3381 = vshrl.u32 %v3380, 7
    %v3382 = vsub.s32 %v3379, %v3381
    %v3383 = vrot.slane %v3376, %v3382
    %v3385 = vunpack.c.l.s4 1966171168
    %v3386 = vunpack.c.0.s8 %v3385
    %v3387 = vlaneseq
    %v3388 = vshrl.u32 %v3387, 7
    %v3389 = vsub.s32 %v3386, %v3388
    %v3390 = vrot.slane %v3383, %v3389
    %3392 = vmatprep.subr.mxu0 %v919
    %3393 = vmatpush1.msra.mxu0 %v918
    %3394 = vmatprep.subr.mxu0 %v923
    %3395 = vmatpush1.msra.mxu0 %v922
    %3396 = vmatprep.subr.mxu0 %v927
    %3397 = vmatpush1.msra.mxu0 %v926
    %3398 = vmatprep.subr.mxu0 %v931
    %3399 = vmatpush1.msra.mxu0 %v930
    %3400 = vmatprep.subr.mxu0 %v935
    %3401 = vmatpush1.msra.mxu0 %v934
    %3402 = vmatprep.subr.mxu0 %v939
    %3403 = vmatpush1.msra.mxu0 %v938
    %3404 = vmatprep.subr.mxu0 %v943
    %3405 = vmatpush1.msra.mxu0 %v942
    %3406 = vmatprep.subr.mxu0 %v947
    %3407 = vmatpush1.msra.mxu0 %v946
    %3408 = vmatprep.subr.mxu0 %v951
    %3409 = vmatpush1.msra.mxu0 %v950
    %3410 = vmatprep.subr.mxu0 %v955
    %3411 = vmatpush1.msra.mxu0 %v954
    %3412 = vmatprep.subr.mxu0 %v959
    %3413 = vmatpush1.msra.mxu0 %v958
    %3414 = vmatprep.subr.mxu0 %v963
    %3415 = vmatpush1.msra.mxu0 %v962
    %3416 = vmatprep.subr.mxu0 %v967
    %3417 = vmatpush1.msra.mxu0 %v966
    %3418 = vmatprep.subr.mxu0 %v971
    %3419 = vmatpush1.msra.mxu0 %v970
    %3420 = vmatprep.subr.mxu0 %v975
    %3421 = vmatpush1.msra.mxu0 %v974
    %3422 = vmatprep.subr.mxu0 %v979
    %3423 = vmatpush1.msra.mxu0 %v978
    %3424 = vmatprep.subr.mxu0 0.0
    %3425 = vmatpush1.msra.mxu0 0.0
    %3426 = vmatprep.subr.mxu0 0.0
    %3427 = vmatpush1.msra.mxu0 0.0
    %3428 = vmatprep.subr.mxu0 0.0
    %3429 = vmatpush1.msra.mxu0 0.0
    %3430 = vmatprep.subr.mxu0 0.0
    %3431 = vmatpush1.msra.mxu0 0.0
    %3432 = vmatprep.subr.mxu0 0.0
    %3433 = vmatpush1.msra.mxu0 0.0
    %3434 = vmatprep.subr.mxu0 0.0
    %3435 = vmatpush1.msra.mxu0 0.0
    %3436 = vmatprep.subr.mxu0 0.0
    %3437 = vmatpush1.msra.mxu0 0.0
    %3438 = vmatprep.subr.mxu0 0.0
    %3439 = vmatpush1.msra.mxu0 0.0
    %3440 = vmatprep.subr.mxu0 0.0
    %3441 = vmatpush1.msra.mxu0 0.0
    %3442 = vmatprep.subr.mxu0 0.0
    %3443 = vmatpush1.msra.mxu0 0.0
    %3444 = vmatprep.subr.mxu0 0.0
    %3445 = vmatpush1.msra.mxu0 0.0
    %3446 = vmatprep.subr.mxu0 0.0
    %3447 = vmatpush1.msra.mxu0 0.0
    %3448 = vmatprep.subr.mxu0 0.0
    %3449 = vmatpush1.msra.mxu0 0.0
    %3450 = vmatprep.subr.mxu0 0.0
    %3451 = vmatpush1.msra.mxu0 0.0
    %3452 = vmatprep.subr.mxu0 0.0
    %3453 = vmatpush1.msra.mxu0 0.0
    %3454 = vmatprep.subr.mxu0 0.0
    %3455 = vmatpush1.msra.mxu0 0.0
    %3456 = vmatprep.mubr.f32.mxu0 0.0
    %3457 = vmatmul.mubr.f32.gmra.mrb[0].mxu0 %v3390
    %v3458 = vpop.f32.mrb[0].mxu0
    %v3459 = vadd.f32 0.0, %v3458
    %v3460 = vpop.f32.mrb[0].mxu0
    %v3461 = vadd.f32 0.0, %v3460
    %3462 = vdwg.mxu0
    %3463 = vmatprep.subr.mxu0 %v921
    %3464 = vmatpush1.msra.mxu0 %v920
    %3465 = vmatprep.subr.mxu0 %v925
    %3466 = vmatpush1.msra.mxu0 %v924
    %3467 = vmatprep.subr.mxu0 %v929
    %3468 = vmatpush1.msra.mxu0 %v928
    %3469 = vmatprep.subr.mxu0 %v933
    %3470 = vmatpush1.msra.mxu0 %v932
    %3471 = vmatprep.subr.mxu0 %v937
    %3472 = vmatpush1.msra.mxu0 %v936
    %3473 = vmatprep.subr.mxu0 %v941
    %3474 = vmatpush1.msra.mxu0 %v940
    %3475 = vmatprep.subr.mxu0 %v945
    %3476 = vmatpush1.msra.mxu0 %v944
    %3477 = vmatprep.subr.mxu0 %v949
    %3478 = vmatpush1.msra.mxu0 %v948
    %3479 = vmatprep.subr.mxu0 %v953
    %3480 = vmatpush1.msra.mxu0 %v952
    %3481 = vmatprep.subr.mxu0 %v957
    %3482 = vmatpush1.msra.mxu0 %v956
    %3483 = vmatprep.subr.mxu0 %v961
    %3484 = vmatpush1.msra.mxu0 %v960
    %3485 = vmatprep.subr.mxu0 %v965
    %3486 = vmatpush1.msra.mxu0 %v964
    %3487 = vmatprep.subr.mxu0 %v969
    %3488 = vmatpush1.msra.mxu0 %v968
    %3489 = vmatprep.subr.mxu0 %v973
    %3490 = vmatpush1.msra.mxu0 %v972
    %3491 = vmatprep.subr.mxu0 %v977
    %3492 = vmatpush1.msra.mxu0 %v976
    %3493 = vmatprep.subr.mxu0 %v981
    %3494 = vmatpush1.msra.mxu0 %v980
    %3495 = vmatprep.subr.mxu0 0.0
    %3496 = vmatpush1.msra.mxu0 0.0
    %3497 = vmatprep.subr.mxu0 0.0
    %3498 = vmatpush1.msra.mxu0 0.0
    %3499 = vmatprep.subr.mxu0 0.0
    %3500 = vmatpush1.msra.mxu0 0.0
    %3501 = vmatprep.subr.mxu0 0.0
    %3502 = vmatpush1.msra.mxu0 0.0
    %3503 = vmatprep.subr.mxu0 0.0
    %3504 = vmatpush1.msra.mxu0 0.0
    %3505 = vmatprep.subr.mxu0 0.0
    %3506 = vmatpush1.msra.mxu0 0.0
    %3507 = vmatprep.subr.mxu0 0.0
    %3508 = vmatpush1.msra.mxu0 0.0
    %3509 = vmatprep.subr.mxu0 0.0
    %3510 = vmatpush1.msra.mxu0 0.0
    %3511 = vmatprep.subr.mxu0 0.0
    %3512 = vmatpush1.msra.mxu0 0.0
    %3513 = vmatprep.subr.mxu0 0.0
    %3514 = vmatpush1.msra.mxu0 0.0
    %3515 = vmatprep.subr.mxu0 0.0
    %3516 = vmatpush1.msra.mxu0 0.0
    %3517 = vmatprep.subr.mxu0 0.0
    %3518 = vmatpush1.msra.mxu0 0.0
    %3519 = vmatprep.subr.mxu0 0.0
    %3520 = vmatpush1.msra.mxu0 0.0
    %3521 = vmatprep.subr.mxu0 0.0
    %3522 = vmatpush1.msra.mxu0 0.0
    %3523 = vmatprep.subr.mxu0 0.0
    %3524 = vmatpush1.msra.mxu0 0.0
    %3525 = vmatprep.subr.mxu0 0.0
    %3526 = vmatpush1.msra.mxu0 0.0
    %3527 = vmatprep.mubr.f32.mxu0 0.0
    %3528 = vmatmul.mubr.f32.gmra.mrb[0].mxu0 %v3390
    %v3529 = vpop.f32.mrb[0].mxu0
    %v3530 = vadd.f32 0.0, %v3529
    %v3531 = vpop.f32.mrb[0].mxu0
    %v3532 = vadd.f32 0.0, %v3531
    %3533 = vdwg.mxu0
    %v3538 = vcombine.low %v3459, %v3461
    %v3539 = vcombine.low %v3530, %v3532
    %v3541 = vunpack.c.l.s4 1966171168
    %v3542 = vunpack.c.0.s8 %v3541
    %v3543 = vlaneseq
    %v3544 = vshrl.u32 %v3543, 7
    %v3545 = vsub.s32 %v3542, %v3544
    %v3546 = vrot.slane %v3538, %v3545
    %v3548 = vunpack.c.l.s4 1966171168
    %v3549 = vunpack.c.0.s8 %v3548
    %v3550 = vlaneseq
    %v3551 = vshrl.u32 %v3550, 7
    %v3552 = vsub.s32 %v3549, %v3551
    %v3553 = vrot.slane %v3539, %v3552
    %v3554 = vcombine.low %v3546, %v3553
    %v3555 = vcombine.high %v3546, %v3553
    %v3557 = vunpack.c.l.s4 1966171168
    %v3558 = vunpack.c.0.s8 %v3557
    %v3559 = vlaneseq
    %v3560 = vshrl.u32 %v3559, 7
    %v3561 = vsub.s32 %v3558, %v3560
    %v3562 = vrot.slane %v3554, %v3561
    %v3564 = vunpack.c.l.s4 1966171168
    %v3565 = vunpack.c.0.s8 %v3564
    %v3566 = vlaneseq
    %v3567 = vshrl.u32 %v3566, 7
    %v3568 = vsub.s32 %v3565, %v3567
    %v3569 = vrot.slane %v3555, %v3568
    %v3572 = vadd.f32 %v3371, %v3562
    %v3573 = vadd.f32 %v3373, %v3569
    %v3574 = vmul.f32 %v3572, 0.5
    %v3575 = vmul.f32 %v3573, 0.5
    %v3576 = vtanh.pop %v3574
    %v3577 = vtanh.pop %v3575
    %v3578 = vmul.f32 %v3576, 0.5
    %v3579 = vmul.f32 %v3577, 0.5
    %v3580 = vadd.f32 %v3578, 0.5
    %v3581 = vadd.f32 %v3579, 0.5
    %v3584 = vrot.slane %v3572, 3
    %v3585 = vrot.slane %v3573, 3
    %v3588 = vtanh.pop %v3584
    %v3589 = vtanh.pop %v3585
    %v3592 = vrot.slane %v3580, 1
    %v3593 = vrot.slane %v3581, 1
    %v3596 = vmul.f32 %v3592, %v3358
    %v3597 = vmul.f32 %v3593, %v3359
    %v3598 = vmul.f32 %v3580, %v3588
    %v3599 = vmul.f32 %v3581, %v3589
    %v3600 = vadd.f32 %v3596, %v3598
    %v3601 = vadd.f32 %v3597, %v3599
    %v3602 = vtanh.pop %v3600
    %v3603 = vtanh.pop %v3601
    %v3604 = vrot.slane %v3580, 2
    %v3605 = vrot.slane %v3581, 2
    %v3608 = vmul.f32 %v3604, %v3602
    %v3609 = vmul.f32 %v3605, %v3603
    %3610 = vst [vmem:[#allocation4 + $0x4] sm:$0x1] %v3608
    %3611 = vst [vmem:[#allocation4 + $0xc] sm:$0x1] %v3609
    %s3612 = scalar_lea.vmem [#allocation3], 5
    %v3613 = vld [vmem:[%s3612] ss:$8 sm:$0xf]
    %s3614 = scalar_lea.vmem [#allocation3], 37
    %v3615 = vld [vmem:[%s3614] ss:$8 sm:$0xf]
    %v3618 = vcombine.low %v3608, %v3609
    %v3620 = vunpack.c.l.s4 1966171168
    %v3621 = vunpack.c.0.s8 %v3620
    %v3622 = vlaneseq
    %v3623 = vshrl.u32 %v3622, 7
    %v3624 = vsub.s32 %v3621, %v3623
    %v3625 = vrot.slane %v3618, %v3624
    %v3627 = vunpack.c.l.s4 1966171168
    %v3628 = vunpack.c.0.s8 %v3627
    %v3629 = vlaneseq
    %v3630 = vshrl.u32 %v3629, 7
    %v3631 = vsub.s32 %v3628, %v3630
    %v3632 = vrot.slane %v3625, %v3631
    %3634 = vmatprep.subr.mxu0 %v919
    %3635 = vmatpush1.msra.mxu0 %v918
    %3636 = vmatprep.subr.mxu0 %v923
    %3637 = vmatpush1.msra.mxu0 %v922
    %3638 = vmatprep.subr.mxu0 %v927
    %3639 = vmatpush1.msra.mxu0 %v926
    %3640 = vmatprep.subr.mxu0 %v931
    %3641 = vmatpush1.msra.mxu0 %v930
    %3642 = vmatprep.subr.mxu0 %v935
    %3643 = vmatpush1.msra.mxu0 %v934
    %3644 = vmatprep.subr.mxu0 %v939
    %3645 = vmatpush1.msra.mxu0 %v938
    %3646 = vmatprep.subr.mxu0 %v943
    %3647 = vmatpush1.msra.mxu0 %v942
    %3648 = vmatprep.subr.mxu0 %v947
    %3649 = vmatpush1.msra.mxu0 %v946
    %3650 = vmatprep.subr.mxu0 %v951
    %3651 = vmatpush1.msra.mxu0 %v950
    %3652 = vmatprep.subr.mxu0 %v955
    %3653 = vmatpush1.msra.mxu0 %v954
    %3654 = vmatprep.subr.mxu0 %v959
    %3655 = vmatpush1.msra.mxu0 %v958
    %3656 = vmatprep.subr.mxu0 %v963
    %3657 = vmatpush1.msra.mxu0 %v962
    %3658 = vmatprep.subr.mxu0 %v967
    %3659 = vmatpush1.msra.mxu0 %v966
    %3660 = vmatprep.subr.mxu0 %v971
    %3661 = vmatpush1.msra.mxu0 %v970
    %3662 = vmatprep.subr.mxu0 %v975
    %3663 = vmatpush1.msra.mxu0 %v974
    %3664 = vmatprep.subr.mxu0 %v979
    %3665 = vmatpush1.msra.mxu0 %v978
    %3666 = vmatprep.subr.mxu0 0.0
    %3667 = vmatpush1.msra.mxu0 0.0
    %3668 = vmatprep.subr.mxu0 0.0
    %3669 = vmatpush1.msra.mxu0 0.0
    %3670 = vmatprep.subr.mxu0 0.0
    %3671 = vmatpush1.msra.mxu0 0.0
    %3672 = vmatprep.subr.mxu0 0.0
    %3673 = vmatpush1.msra.mxu0 0.0
    %3674 = vmatprep.subr.mxu0 0.0
    %3675 = vmatpush1.msra.mxu0 0.0
    %3676 = vmatprep.subr.mxu0 0.0
    %3677 = vmatpush1.msra.mxu0 0.0
    %3678 = vmatprep.subr.mxu0 0.0
    %3679 = vmatpush1.msra.mxu0 0.0
    %3680 = vmatprep.subr.mxu0 0.0
    %3681 = vmatpush1.msra.mxu0 0.0
    %3682 = vmatprep.subr.mxu0 0.0
    %3683 = vmatpush1.msra.mxu0 0.0
    %3684 = vmatprep.subr.mxu0 0.0
    %3685 = vmatpush1.msra.mxu0 0.0
    %3686 = vmatprep.subr.mxu0 0.0
    %3687 = vmatpush1.msra.mxu0 0.0
    %3688 = vmatprep.subr.mxu0 0.0
    %3689 = vmatpush1.msra.mxu0 0.0
    %3690 = vmatprep.subr.mxu0 0.0
    %3691 = vmatpush1.msra.mxu0 0.0
    %3692 = vmatprep.subr.mxu0 0.0
    %3693 = vmatpush1.msra.mxu0 0.0
    %3694 = vmatprep.subr.mxu0 0.0
    %3695 = vmatpush1.msra.mxu0 0.0
    %3696 = vmatprep.subr.mxu0 0.0
    %3697 = vmatpush1.msra.mxu0 0.0
    %3698 = vmatprep.mubr.f32.mxu0 0.0
    %3699 = vmatmul.mubr.f32.gmra.mrb[0].mxu0 %v3632
    %v3700 = vpop.f32.mrb[0].mxu0
    %v3701 = vadd.f32 0.0, %v3700
    %v3702 = vpop.f32.mrb[0].mxu0
    %v3703 = vadd.f32 0.0, %v3702
    %3704 = vdwg.mxu0
    %3705 = vmatprep.subr.mxu0 %v921
    %3706 = vmatpush1.msra.mxu0 %v920
    %3707 = vmatprep.subr.mxu0 %v925
    %3708 = vmatpush1.msra.mxu0 %v924
    %3709 = vmatprep.subr.mxu0 %v929
    %3710 = vmatpush1.msra.mxu0 %v928
    %3711 = vmatprep.subr.mxu0 %v933
    %3712 = vmatpush1.msra.mxu0 %v932
    %3713 = vmatprep.subr.mxu0 %v937
    %3714 = vmatpush1.msra.mxu0 %v936
    %3715 = vmatprep.subr.mxu0 %v941
    %3716 = vmatpush1.msra.mxu0 %v940
    %3717 = vmatprep.subr.mxu0 %v945
    %3718 = vmatpush1.msra.mxu0 %v944
    %3719 = vmatprep.subr.mxu0 %v949
    %3720 = vmatpush1.msra.mxu0 %v948
    %3721 = vmatprep.subr.mxu0 %v953
    %3722 = vmatpush1.msra.mxu0 %v952
    %3723 = vmatprep.subr.mxu0 %v957
    %3724 = vmatpush1.msra.mxu0 %v956
    %3725 = vmatprep.subr.mxu0 %v961
    %3726 = vmatpush1.msra.mxu0 %v960
    %3727 = vmatprep.subr.mxu0 %v965
    %3728 = vmatpush1.msra.mxu0 %v964
    %3729 = vmatprep.subr.mxu0 %v969
    %3730 = vmatpush1.msra.mxu0 %v968
    %3731 = vmatprep.subr.mxu0 %v973
    %3732 = vmatpush1.msra.mxu0 %v972
    %3733 = vmatprep.subr.mxu0 %v977
    %3734 = vmatpush1.msra.mxu0 %v976
    %3735 = vmatprep.subr.mxu0 %v981
    %3736 = vmatpush1.msra.mxu0 %v980
    %3737 = vmatprep.subr.mxu0 0.0
    %3738 = vmatpush1.msra.mxu0 0.0
    %3739 = vmatprep.subr.mxu0 0.0
    %3740 = vmatpush1.msra.mxu0 0.0
    %3741 = vmatprep.subr.mxu0 0.0
    %3742 = vmatpush1.msra.mxu0 0.0
    %3743 = vmatprep.subr.mxu0 0.0
    %3744 = vmatpush1.msra.mxu0 0.0
    %3745 = vmatprep.subr.mxu0 0.0
    %3746 = vmatpush1.msra.mxu0 0.0
    %3747 = vmatprep.subr.mxu0 0.0
    %3748 = vmatpush1.msra.mxu0 0.0
    %3749 = vmatprep.subr.mxu0 0.0
    %3750 = vmatpush1.msra.mxu0 0.0
    %3751 = vmatprep.subr.mxu0 0.0
    %3752 = vmatpush1.msra.mxu0 0.0
    %3753 = vmatprep.subr.mxu0 0.0
    %3754 = vmatpush1.msra.mxu0 0.0
    %3755 = vmatprep.subr.mxu0 0.0
    %3756 = vmatpush1.msra.mxu0 0.0
    %3757 = vmatprep.subr.mxu0 0.0
    %3758 = vmatpush1.msra.mxu0 0.0
    %3759 = vmatprep.subr.mxu0 0.0
    %3760 = vmatpush1.msra.mxu0 0.0
    %3761 = vmatprep.subr.mxu0 0.0
    %3762 = vmatpush1.msra.mxu0 0.0
    %3763 = vmatprep.subr.mxu0 0.0
    %3764 = vmatpush1.msra.mxu0 0.0
    %3765 = vmatprep.subr.mxu0 0.0
    %3766 = vmatpush1.msra.mxu0 0.0
    %3767 = vmatprep.subr.mxu0 0.0
    %3768 = vmatpush1.msra.mxu0 0.0
    %3769 = vmatprep.mubr.f32.mxu0 0.0
    %3770 = vmatmul.mubr.f32.gmra.mrb[0].mxu0 %v3632
    %v3771 = vpop.f32.mrb[0].mxu0
    %v3772 = vadd.f32 0.0, %v3771
    %v3773 = vpop.f32.mrb[0].mxu0
    %v3774 = vadd.f32 0.0, %v3773
    %3775 = vdwg.mxu0
    %v3780 = vcombine.low %v3701, %v3703
    %v3781 = vcombine.low %v3772, %v3774
    %v3783 = vunpack.c.l.s4 1966171168
    %v3784 = vunpack.c.0.s8 %v3783
    %v3785 = vlaneseq
    %v3786 = vshrl.u32 %v3785, 7
    %v3787 = vsub.s32 %v3784, %v3786
    %v3788 = vrot.slane %v3780, %v3787
    %v3790 = vunpack.c.l.s4 1966171168
    %v3791 = vunpack.c.0.s8 %v3790
    %v3792 = vlaneseq
    %v3793 = vshrl.u32 %v3792, 7
    %v3794 = vsub.s32 %v3791, %v3793
    %v3795 = vrot.slane %v3781, %v3794
    %v3796 = vcombine.low %v3788, %v3795
    %v3797 = vcombine.high %v3788, %v3795
    %v3799 = vunpack.c.l.s4 1966171168
    %v3800 = vunpack.c.0.s8 %v3799
    %v3801 = vlaneseq
    %v3802 = vshrl.u32 %v3801, 7
    %v3803 = vsub.s32 %v3800, %v3802
    %v3804 = vrot.slane %v3796, %v3803
    %v3806 = vunpack.c.l.s4 1966171168
    %v3807 = vunpack.c.0.s8 %v3806
    %v3808 = vlaneseq
    %v3809 = vshrl.u32 %v3808, 7
    %v3810 = vsub.s32 %v3807, %v3809
    %v3811 = vrot.slane %v3797, %v3810
    %v3814 = vadd.f32 %v3613, %v3804
    %v3815 = vadd.f32 %v3615, %v3811
    %v3816 = vmul.f32 %v3814, 0.5
    %v3817 = vmul.f32 %v3815, 0.5
    %v3818 = vtanh.pop %v3816
    %v3819 = vtanh.pop %v3817
    %v3820 = vmul.f32 %v3818, 0.5
    %v3821 = vmul.f32 %v3819, 0.5
    %v3822 = vadd.f32 %v3820, 0.5
    %v3823 = vadd.f32 %v3821, 0.5
    %v3826 = vrot.slane %v3814, 3
    %v3827 = vrot.slane %v3815, 3
    %v3830 = vtanh.pop %v3826
    %v3831 = vtanh.pop %v3827
    %v3834 = vrot.slane %v3822, 1
    %v3835 = vrot.slane %v3823, 1
    %v3838 = vmul.f32 %v3834, %v3600
    %v3839 = vmul.f32 %v3835, %v3601
    %v3840 = vmul.f32 %v3822, %v3830
    %v3841 = vmul.f32 %v3823, %v3831
    %v3842 = vadd.f32 %v3838, %v3840
    %v3843 = vadd.f32 %v3839, %v3841
    %v3844 = vtanh.pop %v3842
    %v3845 = vtanh.pop %v3843
    %v3846 = vrot.slane %v3822, 2
    %v3847 = vrot.slane %v3823, 2
    %v3850 = vmul.f32 %v3846, %v3844
    %v3851 = vmul.f32 %v3847, %v3845
    %3852 = vst [vmem:[#allocation4 + $0x5] sm:$0x1] %v3850
    %3853 = vst [vmem:[#allocation4 + $0xd] sm:$0x1] %v3851
    %s3854 = scalar_lea.vmem [#allocation3], 6
    %v3855 = vld [vmem:[%s3854] ss:$8 sm:$0xf]
    %s3856 = scalar_lea.vmem [#allocation3], 38
    %v3857 = vld [vmem:[%s3856] ss:$8 sm:$0xf]
    %v3860 = vcombine.low %v3850, %v3851
    %v3862 = vunpack.c.l.s4 1966171168
    %v3863 = vunpack.c.0.s8 %v3862
    %v3864 = vlaneseq
    %v3865 = vshrl.u32 %v3864, 7
    %v3866 = vsub.s32 %v3863, %v3865
    %v3867 = vrot.slane %v3860, %v3866
    %v3869 = vunpack.c.l.s4 1966171168
    %v3870 = vunpack.c.0.s8 %v3869
    %v3871 = vlaneseq
    %v3872 = vshrl.u32 %v3871, 7
    %v3873 = vsub.s32 %v3870, %v3872
    %v3874 = vrot.slane %v3867, %v3873
    %3876 = vmatprep.subr.mxu0 %v919
    %3877 = vmatpush1.msra.mxu0 %v918
    %3878 = vmatprep.subr.mxu0 %v923
    %3879 = vmatpush1.msra.mxu0 %v922
    %3880 = vmatprep.subr.mxu0 %v927
    %3881 = vmatpush1.msra.mxu0 %v926
    %3882 = vmatprep.subr.mxu0 %v931
    %3883 = vmatpush1.msra.mxu0 %v930
    %3884 = vmatprep.subr.mxu0 %v935
    %3885 = vmatpush1.msra.mxu0 %v934
    %3886 = vmatprep.subr.mxu0 %v939
    %3887 = vmatpush1.msra.mxu0 %v938
    %3888 = vmatprep.subr.mxu0 %v943
    %3889 = vmatpush1.msra.mxu0 %v942
    %3890 = vmatprep.subr.mxu0 %v947
    %3891 = vmatpush1.msra.mxu0 %v946
    %3892 = vmatprep.subr.mxu0 %v951
    %3893 = vmatpush1.msra.mxu0 %v950
    %3894 = vmatprep.subr.mxu0 %v955
    %3895 = vmatpush1.msra.mxu0 %v954
    %3896 = vmatprep.subr.mxu0 %v959
    %3897 = vmatpush1.msra.mxu0 %v958
    %3898 = vmatprep.subr.mxu0 %v963
    %3899 = vmatpush1.msra.mxu0 %v962
    %3900 = vmatprep.subr.mxu0 %v967
    %3901 = vmatpush1.msra.mxu0 %v966
    %3902 = vmatprep.subr.mxu0 %v971
    %3903 = vmatpush1.msra.mxu0 %v970
    %3904 = vmatprep.subr.mxu0 %v975
    %3905 = vmatpush1.msra.mxu0 %v974
    %3906 = vmatprep.subr.mxu0 %v979
    %3907 = vmatpush1.msra.mxu0 %v978
    %3908 = vmatprep.subr.mxu0 0.0
    %3909 = vmatpush1.msra.mxu0 0.0
    %3910 = vmatprep.subr.mxu0 0.0
    %3911 = vmatpush1.msra.mxu0 0.0
    %3912 = vmatprep.subr.mxu0 0.0
    %3913 = vmatpush1.msra.mxu0 0.0
    %3914 = vmatprep.subr.mxu0 0.0
    %3915 = vmatpush1.msra.mxu0 0.0
    %3916 = vmatprep.subr.mxu0 0.0
    %3917 = vmatpush1.msra.mxu0 0.0
    %3918 = vmatprep.subr.mxu0 0.0
    %3919 = vmatpush1.msra.mxu0 0.0
    %3920 = vmatprep.subr.mxu0 0.0
    %3921 = vmatpush1.msra.mxu0 0.0
    %3922 = vmatprep.subr.mxu0 0.0
    %3923 = vmatpush1.msra.mxu0 0.0
    %3924 = vmatprep.subr.mxu0 0.0
    %3925 = vmatpush1.msra.mxu0 0.0
    %3926 = vmatprep.subr.mxu0 0.0
    %3927 = vmatpush1.msra.mxu0 0.0
    %3928 = vmatprep.subr.mxu0 0.0
    %3929 = vmatpush1.msra.mxu0 0.0
    %3930 = vmatprep.subr.mxu0 0.0
    %3931 = vmatpush1.msra.mxu0 0.0
    %3932 = vmatprep.subr.mxu0 0.0
    %3933 = vmatpush1.msra.mxu0 0.0
    %3934 = vmatprep.subr.mxu0 0.0
    %3935 = vmatpush1.msra.mxu0 0.0
    %3936 = vmatprep.subr.mxu0 0.0
    %3937 = vmatpush1.msra.mxu0 0.0
    %3938 = vmatprep.subr.mxu0 0.0
    %3939 = vmatpush1.msra.mxu0 0.0
    %3940 = vmatprep.mubr.f32.mxu0 0.0
    %3941 = vmatmul.mubr.f32.gmra.mrb[0].mxu0 %v3874
    %v3942 = vpop.f32.mrb[0].mxu0
    %v3943 = vadd.f32 0.0, %v3942
    %v3944 = vpop.f32.mrb[0].mxu0
    %v3945 = vadd.f32 0.0, %v3944
    %3946 = vdwg.mxu0
    %3947 = vmatprep.subr.mxu0 %v921
    %3948 = vmatpush1.msra.mxu0 %v920
    %3949 = vmatprep.subr.mxu0 %v925
    %3950 = vmatpush1.msra.mxu0 %v924
    %3951 = vmatprep.subr.mxu0 %v929
    %3952 = vmatpush1.msra.mxu0 %v928
    %3953 = vmatprep.subr.mxu0 %v933
    %3954 = vmatpush1.msra.mxu0 %v932
    %3955 = vmatprep.subr.mxu0 %v937
    %3956 = vmatpush1.msra.mxu0 %v936
    %3957 = vmatprep.subr.mxu0 %v941
    %3958 = vmatpush1.msra.mxu0 %v940
    %3959 = vmatprep.subr.mxu0 %v945
    %3960 = vmatpush1.msra.mxu0 %v944
    %3961 = vmatprep.subr.mxu0 %v949
    %3962 = vmatpush1.msra.mxu0 %v948
    %3963 = vmatprep.subr.mxu0 %v953
    %3964 = vmatpush1.msra.mxu0 %v952
    %3965 = vmatprep.subr.mxu0 %v957
    %3966 = vmatpush1.msra.mxu0 %v956
    %3967 = vmatprep.subr.mxu0 %v961
    %3968 = vmatpush1.msra.mxu0 %v960
    %3969 = vmatprep.subr.mxu0 %v965
    %3970 = vmatpush1.msra.mxu0 %v964
    %3971 = vmatprep.subr.mxu0 %v969
    %3972 = vmatpush1.msra.mxu0 %v968
    %3973 = vmatprep.subr.mxu0 %v973
    %3974 = vmatpush1.msra.mxu0 %v972
    %3975 = vmatprep.subr.mxu0 %v977
    %3976 = vmatpush1.msra.mxu0 %v976
    %3977 = vmatprep.subr.mxu0 %v981
    %3978 = vmatpush1.msra.mxu0 %v980
    %3979 = vmatprep.subr.mxu0 0.0
    %3980 = vmatpush1.msra.mxu0 0.0
    %3981 = vmatprep.subr.mxu0 0.0
    %3982 = vmatpush1.msra.mxu0 0.0
    %3983 = vmatprep.subr.mxu0 0.0
    %3984 = vmatpush1.msra.mxu0 0.0
    %3985 = vmatprep.subr.mxu0 0.0
    %3986 = vmatpush1.msra.mxu0 0.0
    %3987 = vmatprep.subr.mxu0 0.0
    %3988 = vmatpush1.msra.mxu0 0.0
    %3989 = vmatprep.subr.mxu0 0.0
    %3990 = vmatpush1.msra.mxu0 0.0
    %3991 = vmatprep.subr.mxu0 0.0
    %3992 = vmatpush1.msra.mxu0 0.0
    %3993 = vmatprep.subr.mxu0 0.0
    %3994 = vmatpush1.msra.mxu0 0.0
    %3995 = vmatprep.subr.mxu0 0.0
    %3996 = vmatpush1.msra.mxu0 0.0
    %3997 = vmatprep.subr.mxu0 0.0
    %3998 = vmatpush1.msra.mxu0 0.0
    %3999 = vmatprep.subr.mxu0 0.0
    %4000 = vmatpush1.msra.mxu0 0.0
    %4001 = vmatprep.subr.mxu0 0.0
    %4002 = vmatpush1.msra.mxu0 0.0
    %4003 = vmatprep.subr.mxu0 0.0
    %4004 = vmatpush1.msra.mxu0 0.0
    %4005 = vmatprep.subr.mxu0 0.0
    %4006 = vmatpush1.msra.mxu0 0.0
    %4007 = vmatprep.subr.mxu0 0.0
    %4008 = vmatpush1.msra.mxu0 0.0
    %4009 = vmatprep.subr.mxu0 0.0
    %4010 = vmatpush1.msra.mxu0 0.0
    %4011 = vmatprep.mubr.f32.mxu0 0.0
    %4012 = vmatmul.mubr.f32.gmra.mrb[0].mxu0 %v3874
    %v4013 = vpop.f32.mrb[0].mxu0
    %v4014 = vadd.f32 0.0, %v4013
    %v4015 = vpop.f32.mrb[0].mxu0
    %v4016 = vadd.f32 0.0, %v4015
    %4017 = vdwg.mxu0
    %v4022 = vcombine.low %v3943, %v3945
    %v4023 = vcombine.low %v4014, %v4016
    %v4025 = vunpack.c.l.s4 1966171168
    %v4026 = vunpack.c.0.s8 %v4025
    %v4027 = vlaneseq
    %v4028 = vshrl.u32 %v4027, 7
    %v4029 = vsub.s32 %v4026, %v4028
    %v4030 = vrot.slane %v4022, %v4029
    %v4032 = vunpack.c.l.s4 1966171168
    %v4033 = vunpack.c.0.s8 %v4032
    %v4034 = vlaneseq
    %v4035 = vshrl.u32 %v4034, 7
    %v4036 = vsub.s32 %v4033, %v4035
    %v4037 = vrot.slane %v4023, %v4036
    %v4038 = vcombine.low %v4030, %v4037
    %v4039 = vcombine.high %v4030, %v4037
    %v4041 = vunpack.c.l.s4 1966171168
    %v4042 = vunpack.c.0.s8 %v4041
    %v4043 = vlaneseq
    %v4044 = vshrl.u32 %v4043, 7
    %v4045 = vsub.s32 %v4042, %v4044
    %v4046 = vrot.slane %v4038, %v4045
    %v4048 = vunpack.c.l.s4 1966171168
    %v4049 = vunpack.c.0.s8 %v4048
    %v4050 = vlaneseq
    %v4051 = vshrl.u32 %v4050, 7
    %v4052 = vsub.s32 %v4049, %v4051
    %v4053 = vrot.slane %v4039, %v4052
    %v4056 = vadd.f32 %v3855, %v4046
    %v4057 = vadd.f32 %v3857, %v4053
    %v4058 = vmul.f32 %v4056, 0.5
    %v4059 = vmul.f32 %v4057, 0.5
    %v4060 = vtanh.pop %v4058
    %v4061 = vtanh.pop %v4059
    %v4062 = vmul.f32 %v4060, 0.5
    %v4063 = vmul.f32 %v4061, 0.5
    %v4064 = vadd.f32 %v4062, 0.5
    %v4065 = vadd.f32 %v4063, 0.5
    %v4068 = vrot.slane %v4056, 3
    %v4069 = vrot.slane %v4057, 3
    %v4072 = vtanh.pop %v4068
    %v4073 = vtanh.pop %v4069
    %v4076 = vrot.slane %v4064, 1
    %v4077 = vrot.slane %v4065, 1
    %v4080 = vmul.f32 %v4076, %v3842
    %v4081 = vmul.f32 %v4077, %v3843
    %v4082 = vmul.f32 %v4064, %v4072
    %v4083 = vmul.f32 %v4065, %v4073
    %v4084 = vadd.f32 %v4080, %v4082
    %v4085 = vadd.f32 %v4081, %v4083
    %v4086 = vtanh.pop %v4084
    %v4087 = vtanh.pop %v4085
    %v4088 = vrot.slane %v4064, 2
    %v4089 = vrot.slane %v4065, 2
    %v4092 = vmul.f32 %v4088, %v4086
    %v4093 = vmul.f32 %v4089, %v4087
    %4094 = vst [vmem:[#allocation4 + $0x6] sm:$0x1] %v4092
    %4095 = vst [vmem:[#allocation4 + $0xe] sm:$0x1] %v4093
    %v4096 = vld [vmem:[%s9] sm:$0xff]
    %v4097 = vld [vmem:[%s9 + $0x8] sm:$0xff]
    %v4098 = vld [vmem:[%s9 + $0x10] sm:$0xff]
    %v4099 = vld [vmem:[%s9 + $0x18] sm:$0xff]
    %v4100 = vld [vmem:[%s9 + $0x20] sm:$0xff]
    %v4101 = vld [vmem:[%s9 + $0x28] sm:$0xff]
    %v4102 = vld [vmem:[%s9 + $0x30] sm:$0xff]
    %v4103 = vld [vmem:[%s9 + $0x38] sm:$0xff]
    %v4104 = vld [vmem:[%s9 + $0x40] sm:$0xff]
    %v4105 = vld [vmem:[%s9 + $0x48] sm:$0xff]
    %v4106 = vld [vmem:[%s9 + $0x50] sm:$0xff]
    %v4107 = vld [vmem:[%s9 + $0x58] sm:$0xff]
    %v4108 = vld [vmem:[%s9 + $0x60] sm:$0xff]
    %v4109 = vld [vmem:[%s9 + $0x68] sm:$0xff]
    %v4110 = vld [vmem:[%s9 + $0x70] sm:$0xff]
    %v4111 = vld [vmem:[%s9 + $0x78] sm:$0xff]
    %v4112 = vld [vmem:[%s10] sm:$0x1]
    %v4113 = vld [vmem:[#allocation4] sm:$0x7f]
    %v4115 = vlaneseq
    %v4116 = vshrl.u32 %v4115, 7
    %v4117 = vsub.s32 0, %v4116
    %v4118 = vrot.slane %v4112, %v4117
    %4120 = vmatprep.subr.mxu0 0.0
    %4121 = vmatpush1.msra.mxu0 %v4096
    %4122 = vmatprep.subr.mxu0 0.0
    %4123 = vmatpush1.msra.mxu0 %v4097
    %4124 = vmatprep.subr.mxu0 0.0
    %4125 = vmatpush1.msra.mxu0 %v4098
    %4126 = vmatprep.subr.mxu0 0.0
    %4127 = vmatpush1.msra.mxu0 %v4099
    %4128 = vmatprep.subr.mxu0 0.0
    %4129 = vmatpush1.msra.mxu0 %v4100
    %4130 = vmatprep.subr.mxu0 0.0
    %4131 = vmatpush1.msra.mxu0 %v4101
    %4132 = vmatprep.subr.mxu0 0.0
    %4133 = vmatpush1.msra.mxu0 %v4102
    %4134 = vmatprep.subr.mxu0 0.0
    %4135 = vmatpush1.msra.mxu0 %v4103
    %4136 = vmatprep.subr.mxu0 0.0
    %4137 = vmatpush1.msra.mxu0 %v4104
    %4138 = vmatprep.subr.mxu0 0.0
    %4139 = vmatpush1.msra.mxu0 %v4105
    %4140 = vmatprep.subr.mxu0 0.0
    %4141 = vmatpush1.msra.mxu0 %v4106
    %4142 = vmatprep.subr.mxu0 0.0
    %4143 = vmatpush1.msra.mxu0 %v4107
    %4144 = vmatprep.subr.mxu0 0.0
    %4145 = vmatpush1.msra.mxu0 %v4108
    %4146 = vmatprep.subr.mxu0 0.0
    %4147 = vmatpush1.msra.mxu0 %v4109
    %4148 = vmatprep.subr.mxu0 0.0
    %4149 = vmatpush1.msra.mxu0 %v4110
    %4150 = vmatprep.subr.mxu0 0.0
    %4151 = vmatpush1.msra.mxu0 %v4111
    %4152 = vmatprep.subr.mxu0 0.0
    %4153 = vmatpush1.msra.mxu0 0.0
    %4154 = vmatprep.subr.mxu0 0.0
    %4155 = vmatpush1.msra.mxu0 0.0
    %4156 = vmatprep.subr.mxu0 0.0
    %4157 = vmatpush1.msra.mxu0 0.0
    %4158 = vmatprep.subr.mxu0 0.0
    %4159 = vmatpush1.msra.mxu0 0.0
    %4160 = vmatprep.subr.mxu0 0.0
    %4161 = vmatpush1.msra.mxu0 0.0
    %4162 = vmatprep.subr.mxu0 0.0
    %4163 = vmatpush1.msra.mxu0 0.0
    %4164 = vmatprep.subr.mxu0 0.0
    %4165 = vmatpush1.msra.mxu0 0.0
    %4166 = vmatprep.subr.mxu0 0.0
    %4167 = vmatpush1.msra.mxu0 0.0
    %4168 = vmatprep.subr.mxu0 0.0
    %4169 = vmatpush1.msra.mxu0 0.0
    %4170 = vmatprep.subr.mxu0 0.0
    %4171 = vmatpush1.msra.mxu0 0.0
    %4172 = vmatprep.subr.mxu0 0.0
    %4173 = vmatpush1.msra.mxu0 0.0
    %4174 = vmatprep.subr.mxu0 0.0
    %4175 = vmatpush1.msra.mxu0 0.0
    %4176 = vmatprep.subr.mxu0 0.0
    %4177 = vmatpush1.msra.mxu0 0.0
    %4178 = vmatprep.subr.mxu0 0.0
    %4179 = vmatpush1.msra.mxu0 0.0
    %4180 = vmatprep.subr.mxu0 0.0
    %4181 = vmatpush1.msra.mxu0 0.0
    %4182 = vmatprep.subr.mxu0 0.0
    %4183 = vmatpush1.msra.mxu0 0.0
    %4184 = vmatprep.mubr.f32.mxu0 0.0
    %4185 = vmatmul.mubr.f32.gmra.mrb[0].mxu0 %v4113
    %v4186 = vpop.f32.mrb[0].mxu0
    %v4187 = vadd.f32 %v4118, %v4186
    %v4188 = vpop.f32.mrb[0].mxu0
    %4189 = vdwg.mxu0
    %vm4190 = vcmask 55296
    %v4191 = vsel %vm4190, %v4187, -inf
    %4192 = vmax.xlane.f32.xlu0 %v4191
    %v4193 = vpop.xlane.xlu0 %4192
    %v4194 = vsub.f32 %v4187, %v4193
    %v4195 = vmul.f32 %v4194, 1.442695
    %v4196 = vpow.pop %v4195
    %v4197 = vsel %vm4190, %v4196, 0.0
    %4198 = vadd.xlane.f32.xlu0 %v4197
    %v4199 = vpop.xlane.xlu0 %4198
    %v4200 = vlog2.pop %v4199
    %v4201 = vmul.f32 %v4200, 0.6931472
    %v4202 = vsub.f32 %v4194, %v4201
    %4203 = vst.msk [vmem:[%s11] sm:$0x7f] %vm4190, %v4202
    %s4204 = scalar_lea.vmem [#allocation4], 8
    %v4205 = vld [vmem:[%s4204] sm:$0x7f]
    %4206 = vmatprep.subr.mxu0 0.0
    %4207 = vmatpush1.msra.mxu0 %v4096
    %4208 = vmatprep.subr.mxu0 0.0
    %4209 = vmatpush1.msra.mxu0 %v4097
    %4210 = vmatprep.subr.mxu0 0.0
    %4211 = vmatpush1.msra.mxu0 %v4098
    %4212 = vmatprep.subr.mxu0 0.0
    %4213 = vmatpush1.msra.mxu0 %v4099
    %4214 = vmatprep.subr.mxu0 0.0
    %4215 = vmatpush1.msra.mxu0 %v4100
    %4216 = vmatprep.subr.mxu0 0.0
    %4217 = vmatpush1.msra.mxu0 %v4101
    %4218 = vmatprep.subr.mxu0 0.0
    %4219 = vmatpush1.msra.mxu0 %v4102
    %4220 = vmatprep.subr.mxu0 0.0
    %4221 = vmatpush1.msra.mxu0 %v4103
    %4222 = vmatprep.subr.mxu0 0.0
    %4223 = vmatpush1.msra.mxu0 %v4104
    %4224 = vmatprep.subr.mxu0 0.0
    %4225 = vmatpush1.msra.mxu0 %v4105
    %4226 = vmatprep.subr.mxu0 0.0
    %4227 = vmatpush1.msra.mxu0 %v4106
    %4228 = vmatprep.subr.mxu0 0.0
    %4229 = vmatpush1.msra.mxu0 %v4107
    %4230 = vmatprep.subr.mxu0 0.0
    %4231 = vmatpush1.msra.mxu0 %v4108
    %4232 = vmatprep.subr.mxu0 0.0
    %4233 = vmatpush1.msra.mxu0 %v4109
    %4234 = vmatprep.subr.mxu0 0.0
    %4235 = vmatpush1.msra.mxu0 %v4110
    %4236 = vmatprep.subr.mxu0 0.0
    %4237 = vmatpush1.msra.mxu0 %v4111
    %4238 = vmatprep.subr.mxu0 0.0
    %4239 = vmatpush1.msra.mxu0 0.0
    %4240 = vmatprep.subr.mxu0 0.0
    %4241 = vmatpush1.msra.mxu0 0.0
    %4242 = vmatprep.subr.mxu0 0.0
    %4243 = vmatpush1.msra.mxu0 0.0
    %4244 = vmatprep.subr.mxu0 0.0
    %4245 = vmatpush1.msra.mxu0 0.0
    %4246 = vmatprep.subr.mxu0 0.0
    %4247 = vmatpush1.msra.mxu0 0.0
    %4248 = vmatprep.subr.mxu0 0.0
    %4249 = vmatpush1.msra.mxu0 0.0
    %4250 = vmatprep.subr.mxu0 0.0
    %4251 = vmatpush1.msra.mxu0 0.0
    %4252 = vmatprep.subr.mxu0 0.0
    %4253 = vmatpush1.msra.mxu0 0.0
    %4254 = vmatprep.subr.mxu0 0.0
    %4255 = vmatpush1.msra.mxu0 0.0
    %4256 = vmatprep.subr.mxu0 0.0
    %4257 = vmatpush1.msra.mxu0 0.0
    %4258 = vmatprep.subr.mxu0 0.0
    %4259 = vmatpush1.msra.mxu0 0.0
    %4260 = vmatprep.subr.mxu0 0.0
    %4261 = vmatpush1.msra.mxu0 0.0
    %4262 = vmatprep.subr.mxu0 0.0
    %4263 = vmatpush1.msra.mxu0 0.0
    %4264 = vmatprep.subr.mxu0 0.0
    %4265 = vmatpush1.msra.mxu0 0.0
    %4266 = vmatprep.subr.mxu0 0.0
    %4267 = vmatpush1.msra.mxu0 0.0
    %4268 = vmatprep.subr.mxu0 0.0
    %4269 = vmatpush1.msra.mxu0 0.0
    %4270 = vmatprep.mubr.f32.mxu0 0.0
    %4271 = vmatmul.mubr.f32.gmra.mrb[0].mxu0 %v4205
    %v4272 = vpop.f32.mrb[0].mxu0
    %v4273 = vadd.f32 %v4118, %v4272
    %v4274 = vpop.f32.mrb[0].mxu0
    %4275 = vdwg.mxu0
    %v4276 = vsel %vm4190, %v4273, -inf
    %4277 = vmax.xlane.f32.xlu0 %v4276
    %v4278 = vpop.xlane.xlu0 %4277
    %v4279 = vsub.f32 %v4273, %v4278
    %v4280 = vmul.f32 %v4279, 1.442695
    %v4281 = vpow.pop %v4280
    %v4282 = vsel %vm4190, %v4281, 0.0
    %4283 = vadd.xlane.f32.xlu0 %v4282
    %v4284 = vpop.xlane.xlu0 %4283
    %v4285 = vlog2.pop %v4284
    %v4286 = vmul.f32 %v4285, 0.6931472
    %v4287 = vsub.f32 %v4279, %v4286
    %s4288 = scalar_lea.vmem %s11, 8
    %4289 = vst.msk [vmem:[%s4288] sm:$0x7f] %vm4190, %v4287
    // Predicated region
    $region62: #{seq2seq_lstm_forward.1} parent=1 // pred_check
      _
    $region63: #{seq2seq_lstm_forward.1} parent=1 // pred_check_branch
      %4291 = sbr.rel (0) target = $region65
    $region64: #{seq2seq_lstm_forward.1} parent=1 // pred_region
      _
    $region65: #{seq2seq_lstm_forward.1} parent=1 // pred_fallthru
      _
    // Predicated region
    $region66: #{seq2seq_lstm_forward.1} parent=1 // pred_check
      _
    $region67: #{seq2seq_lstm_forward.1} parent=1 // pred_check_branch
      %4293 = sbr.rel (0) target = $region69
    $region68: #{seq2seq_lstm_forward.1} parent=1 // pred_region
      _
    $region69: #{seq2seq_lstm_forward.1} parent=1 // pred_fallthru
      _
    %4294 = vsyncpa [#allocation6], 1
    %4295 = vsyncpa [#allocation8], 1
    %4296 = vsyncpa [#allocation11], 1

</llo_original>
